<compile_context>
chip_gen: v5e
topology: v5e:2x2
jax: 0.10.0
libtpu: 0.0.40
codegen_flags: <defaults>
</compile_context>

<pallas_src>
import functools

import jax
import jax.numpy as jnp
from jax import lax
from jax.experimental import pallas as pl
from jax.experimental.pallas import tpu as pltpu

EPS = 1e-5


@functools.lru_cache(maxsize=None)
def _vmem_config():
    """(vmem_limit_bytes, per-tile double-buffer budget), generation aware."""
    phys = 64 * 1024 * 1024                      # conservative default (v7x)
    try:
        info = pltpu.get_tpu_info()
        cap = getattr(info, "vmem_capacity_bytes", None)
        if cap:
            phys = int(cap)
    except Exception:
        pass
    limit = min((phys * 3) // 4, 96 * 1024 * 1024)
    budget = max(8 * 1024 * 1024, limit // 4)
    return limit, budget


def _choose_tile_rows(nrows, bytes_per_row, *, cap=4096):
    """Largest row tile within a conservative double-buffered VMEM budget."""
    _, budget = _vmem_config()
    if nrows <= cap and nrows * bytes_per_row * 2 <= budget:
        return nrows                       # whole array: full-dim block is legal
    tm = min(cap, nrows)
    while tm > 16 and tm * bytes_per_row * 2 > budget:
        tm //= 2
    return max(16, (tm // 16) * 16)        # sublane alignment (bf16-safe)


# ----------------------------------------------------------------------------
# Kernel 1: per-channel sum / sum-of-squares of x (for BN1 batch statistics)
# ----------------------------------------------------------------------------
def _channel_stats_kernel(x_ref, sum_ref, sumsq_ref, *, nrows, tile_rows):
    i = pl.program_id(0)

    @pl.when(i == 0)
    def _():
        sum_ref[...] = jnp.zeros_like(sum_ref)
        sumsq_ref[...] = jnp.zeros_like(sumsq_ref)

    x = x_ref[...]
    if nrows % tile_rows != 0:            # mask out-of-range rows of last tile
        row = lax.broadcasted_iota(jnp.int32, x.shape, 0) + i * tile_rows
        x = jnp.where(row < nrows, x, 0.0)
    # NOTE: E[x^2]-E[x]^2 variance (f32 accumulation); fine for BN-scale
    # activations, consider shifted moments for production-scale inputs.
    sum_ref[...] += jnp.sum(x, axis=0, keepdims=True)
    sumsq_ref[...] += jnp.sum(x * x, axis=0, keepdims=True)


def channel_stats(x2d):
    """x2d: (R, C) f32 -> (sum, sumsq), each (1, C) f32."""
    R, C = x2d.shape
    tm = _choose_tile_rows(R, C * 4)
    vmem_limit, _ = _vmem_config()
    kernel = functools.partial(_channel_stats_kernel, nrows=R, tile_rows=tm)
    return pl.pallas_call(
        kernel,
        out_shape=(jax.ShapeDtypeStruct((1, C), jnp.float32),
                   jax.ShapeDtypeStruct((1, C), jnp.float32)),
        grid_spec=pltpu.PrefetchScalarGridSpec(
            num_scalar_prefetch=0,
            grid=(pl.cdiv(R, tm),),
            in_specs=[pl.BlockSpec((tm, C), lambda i: (i, 0))],
            out_specs=(pl.BlockSpec((1, C), lambda i: (0, 0)),
                       pl.BlockSpec((1, C), lambda i: (0, 0))),
        ),
        compiler_params=pltpu.CompilerParams(
            dimension_semantics=("arbitrary",),
            vmem_limit_bytes=vmem_limit),
    )(x2d)


# ----------------------------------------------------------------------------
# Kernel 2: fused BN1(affine) + ReLU + 1x1 conv (bf16 MXU), with BN2 statistics
#           of the result accumulated in the same pass.  out1 is stored bf16.
# ----------------------------------------------------------------------------
def _bn_relu_conv1x1_stats_kernel(x_ref, scale_ref, shift_ref, w_ref,
                                  o_ref, sum_ref, sumsq_ref, *, nrows, tile_rows):
    i = pl.program_id(0)

    @pl.when(i == 0)
    def _():
        sum_ref[...] = jnp.zeros_like(sum_ref)
        sumsq_ref[...] = jnp.zeros_like(sumsq_ref)

    y = jnp.maximum(x_ref[...] * scale_ref[...] + shift_ref[...], 0.0)
    out = jnp.dot(y.astype(jnp.bfloat16), w_ref[...],
                  preferred_element_type=jnp.float32)
    o_ref[...] = out.astype(o_ref.dtype)

    if nrows % tile_rows != 0:            # mask out-of-range rows of last tile
        row = lax.broadcasted_iota(jnp.int32, out.shape, 0) + i * tile_rows
        out = jnp.where(row < nrows, out, 0.0)
    sum_ref[...] += jnp.sum(out, axis=0, keepdims=True)
    sumsq_ref[...] += jnp.sum(out * out, axis=0, keepdims=True)


def bn_relu_conv1x1_stats(x2d, scale, shift, w_bf16):
    """x2d:(R,Cin) f32, scale/shift:(1,Cin) f32, w:(Cin,C4) bf16
       -> (out1 (R,C4) bf16, sum (1,C4) f32, sumsq (1,C4) f32)."""
    R, Cin = x2d.shape
    C4 = w_bf16.shape[1]
    tm = _choose_tile_rows(R, Cin * 4 + C4 * 2)
    vmem_limit, _ = _vmem_config()
    kernel = functools.partial(_bn_relu_conv1x1_stats_kernel,
                               nrows=R, tile_rows=tm)
    # TODO(synk): add a leading size-num_cores "parallel" axis with per-core
    # partial sum/sumsq outputs so both v7x TensorCores are used here.
    return pl.pallas_call(
        kernel,
        out_shape=(jax.ShapeDtypeStruct((R, C4), jnp.bfloat16),
                   jax.ShapeDtypeStruct((1, C4), jnp.float32),
                   jax.ShapeDtypeStruct((1, C4), jnp.float32)),
        grid_spec=pltpu.PrefetchScalarGridSpec(
            num_scalar_prefetch=0,
            grid=(pl.cdiv(R, tm),),
            in_specs=[
                pl.BlockSpec((tm, Cin), lambda i: (i, 0)),
                pl.BlockSpec((1, Cin), lambda i: (0, 0)),
                pl.BlockSpec((1, Cin), lambda i: (0, 0)),
                pl.BlockSpec((Cin, C4), lambda i: (0, 0)),
            ],
            out_specs=(pl.BlockSpec((tm, C4), lambda i: (i, 0)),
                       pl.BlockSpec((1, C4), lambda i: (0, 0)),
                       pl.BlockSpec((1, C4), lambda i: (0, 0))),
        ),
        compiler_params=pltpu.CompilerParams(
            dimension_semantics=("arbitrary",),   # carries the stat accumulators
            vmem_limit_bytes=vmem_limit),
    )(x2d, scale, shift, w_bf16)


# ----------------------------------------------------------------------------
# Kernel 3: fused BN2(affine) + ReLU + 3x3 conv (pad=1) + channel concat.
#           One (HW, C4) x (C4, 9G) bf16 matmul per image; each tap is a
#           pltpu.roll (circular row shift) masked by in-kernel iota boundary
#           masks; x is written into the first Cin output channels.
# ----------------------------------------------------------------------------
def _bn_relu_conv3x3_concat_kernel(x_ref, y_ref, scale_ref, shift_ref, w_ref,
                                   o_ref, *, H, W, Cin, G):
    HW = H * W

    # x pass-through store first so it can overlap the tap loop.
    o_ref[0, :, pl.ds(0, Cin)] = x_ref[0]

    a = jnp.maximum(y_ref[0].astype(jnp.float32) * scale_ref[...]
                    + shift_ref[...], 0.0)                       # (HW, C4) f32
    t = jnp.dot(a.astype(jnp.bfloat16), w_ref[...],
                preferred_element_type=jnp.float32)              # (HW, 9G) f32

    # Per-output-pixel boundary masks from iota (no HBM mask input, no
    # lane broadcast).  Integer //,% avoided: float floor is exact here
    # (margin 0.5/W against ~ulp-level division error; valid for HW < ~1M).
    p = lax.broadcasted_iota(jnp.int32, (HW, G), 0)
    p_f = p.astype(jnp.float32)
    row_f = jnp.floor((p_f + 0.5) / jnp.float32(W))              # == p // W
    col_f = p_f - row_f * jnp.float32(W)                         # == p %  W
    top_ok = p >= W                         # i - 1 >= 0
    bot_ok = p < (HW - W)                   # i + 1 <  H
    left_ok = col_f > 0.5                   # j - 1 >= 0
    right_ok = col_f < jnp.float32(W) - 1.5  # j + 1 < W

    acc = t[:, 4 * G:5 * G]                 # center tap: no shift, no mask
    for kh in range(3):
        for kw in range(3):
            dh, dw = kh - 1, kw - 1
            if dh == 0 and dw == 0:
                continue
            tap = kh * 3 + kw
            d = dh * W + dw                  # flattened input offset
            v = t[:, tap * G:(tap + 1) * G]  # (HW, G) contribution of tap
            # Circular shift: out[p] needs t[p + d]; every wrapped row is
            # zeroed by the boundary mask below.
            v = pltpu.roll(v, (-d) % HW, axis=0)
            ok = None
            if dh == -1:
                ok = top_ok
            elif dh == 1:
                ok = bot_ok
            if dw == -1:
                ok = left_ok if ok is None else (ok & left_ok)
            elif dw == 1:
                ok = right_ok if ok is None else (ok & right_ok)
            acc = acc + jnp.where(ok, v, 0.0)

    # fused torch.cat([x, conv_out], dim=channel): second half of the output.
    o_ref[0, :, pl.ds(Cin, G)] = acc.astype(o_ref.dtype)


def bn_relu_conv3x3_concat(x3, y3, scale, shift, w_mat, *, H, W):
    """x3:(N,HW,Cin) f32, y3:(N,HW,C4) bf16, w_mat:(C4,9G) bf16
       -> (N,HW,Cin+G) f32."""
    N, HW, Cin = x3.shape
    C4 = y3.shape[2]
    G = w_mat.shape[1] // 9
    vmem_limit, _ = _vmem_config()
    kernel = functools.partial(_bn_relu_conv3x3_concat_kernel,
                               H=H, W=W, Cin=Cin, G=G)
    # TODO(synk): for very large H*W, tile HW into W-multiple row bands with a
    # one-image-row halo on y so the per-image block also fits v7x's 64 MiB.
    return pl.pallas_call(
        kernel,
        out_shape=jax.ShapeDtypeStruct((N, HW, Cin + G), jnp.float32),
        grid_spec=pltpu.PrefetchScalarGridSpec(
            num_scalar_prefetch=0,
            grid=(N,),
            in_specs=[
                pl.BlockSpec((1, HW, Cin), lambda n: (n, 0, 0)),
                pl.BlockSpec((1, HW, C4), lambda n: (n, 0, 0)),
                pl.BlockSpec((1, C4), lambda n: (0, 0)),
                pl.BlockSpec((1, C4), lambda n: (0, 0)),
                pl.BlockSpec((C4, 9 * G), lambda n: (0, 0)),
            ],
            out_specs=pl.BlockSpec((1, HW, Cin + G), lambda n: (n, 0, 0)),
        ),
        compiler_params=pltpu.CompilerParams(
            dimension_semantics=("parallel",),
            vmem_limit_bytes=vmem_limit),
    )(x3, y3, scale, shift, w_mat)


# ----------------------------------------------------------------------------
# DenseBlock forward (glue around the kernels)
# ----------------------------------------------------------------------------
def dense_block_forward_nhwc(x_nhwc, params):
    """NHWC core: use this directly when chaining DenseBlocks (no transposes)."""
    N, H, W, Cin = x_nhwc.shape
    C4 = params["w1"].shape[1]
    G = params["w2"].shape[3]
    R = N * H * W
    HW = H * W

    x2d = x_nhwc.reshape(R, Cin)

    # BN1 (training mode: biased batch stats) folded into affine scale/shift.
    s1, ss1 = channel_stats(x2d)
    mean1 = s1 / R
    var1 = ss1 / R - mean1 * mean1
    scale1 = params["gamma1"] * lax.rsqrt(var1 + EPS)
    shift1 = params["beta1"] - mean1 * scale1

    # relu(bn1(x)) -> conv1 (1x1, bf16 MXU), BN2 stats accumulated in the pass.
    w1_bf16 = params["w1"].astype(jnp.bfloat16)
    out1, s2, ss2 = bn_relu_conv1x1_stats(x2d, scale1, shift1, w1_bf16)
    mean2 = s2 / R
    var2 = ss2 / R - mean2 * mean2
    scale2 = params["gamma2"] * lax.rsqrt(var2 + EPS)
    shift2 = params["beta2"] - mean2 * scale2

    # relu(bn2(.)) -> conv2 (3x3, pad 1) with the channel concat fused in.
    w2_mat = (params["w2"].reshape(9, C4, G).transpose(1, 0, 2)
              .reshape(C4, 9 * G).astype(jnp.bfloat16))
    out_cat = bn_relu_conv3x3_concat(x_nhwc.reshape(N, HW, Cin),
                                     out1.reshape(N, HW, C4),
                                     scale2, shift2, w2_mat, H=H, W=W)
    return out_cat.reshape(N, H, W, Cin + G)


@jax.jit
def dense_block_forward(x_nchw, params):
    # NCHW wrapper matching the torch module's I/O layout.  When stacking
    # DenseBlocks, call dense_block_forward_nhwc directly to avoid these two
    # full HBM-round-trip transposes.
    x_nhwc = jnp.transpose(x_nchw, (0, 2, 3, 1))
    out = dense_block_forward_nhwc(x_nhwc, params)
    return jnp.transpose(out, (0, 3, 1, 2))


# ----------------------------------------------------------------------------
# Pure-JAX reference (for correctness check)
# ----------------------------------------------------------------------------
def ref_forward(x_nchw, params):
    Cin = x_nchw.shape[1]
    C4 = params["w1"].shape[1]

    def bn(x, gamma, beta):
        mean = x.mean(axis=(0, 2, 3))
        var = x.var(axis=(0, 2, 3))
        return ((x - mean.reshape(1, -1, 1, 1)) /
                jnp.sqrt(var.reshape(1, -1, 1, 1) + EPS) *
                gamma.reshape(1, -1, 1, 1) + beta.reshape(1, -1, 1, 1))

    w1_oihw = jnp.transpose(params["w1"], (1, 0)).reshape(C4, Cin, 1, 1)
    w2_oihw = jnp.transpose(params["w2"], (3, 2, 0, 1))   # (G, C4, 3, 3)

    h = jnp.maximum(bn(x_nchw, params["gamma1"], params["beta1"]), 0.0)
    h = lax.conv_general_dilated(h, w1_oihw, (1, 1), "VALID",
                                 dimension_numbers=("NCHW", "OIHW", "NCHW"))
    h = jnp.maximum(bn(h, params["gamma2"], params["beta2"]), 0.0)
    h = lax.conv_general_dilated(h, w2_oihw, (1, 1), ((1, 1), (1, 1)),
                                 dimension_numbers=("NCHW", "OIHW", "NCHW"))
    return jnp.concatenate([x_nchw, h], axis=1)


# ----------------------------------------------------------------------------
def init_params(key, in_channels, growth_rate):
    C4 = 4 * growth_rate
    k1, k2, k3, k4, k5, k6 = jax.random.split(key, 6)
    # conv1 weight (torch (C4, Cin, 1, 1)) stored as (Cin, C4)
    w1 = 0.1 * jax.random.normal(k1, (in_channels, C4), jnp.float32)
    # conv2 weight (torch (G, C4, 3, 3)) stored HWIO: (3, 3, C4, G)
    w2 = 0.1 * jax.random.normal(k2, (3, 3, C4, growth_rate), jnp.float32)
    return {
        "w1": w1,
        "w2": w2,
        "gamma1": 1.0 + 0.1 * jax.random.normal(k3, (1, in_channels), jnp.float32),
        "beta1": 0.1 * jax.random.normal(k4, (1, in_channels), jnp.float32),
        "gamma2": 1.0 + 0.1 * jax.random.normal(k5, (1, C4), jnp.float32),
        "beta2": 0.1 * jax.random.normal(k6, (1, C4), jnp.float32),
    }


if __name__ == "__main__":
    key = jax.random.PRNGKey(0)
    kx, kp = jax.random.split(key)

    N, Cin, H, W = 2, 4, 16, 16
    growth_rate = 8

    x = jax.random.normal(kx, (N, Cin, H, W), jnp.float32)
    params = init_params(kp, Cin, growth_rate)

    out = jax.block_until_ready(dense_block_forward(x, params))
    assert out.shape == (N, Cin + growth_rate, H, W), out.shape

    ref = jax.block_until_ready(ref_forward(x, params))
    err = float(jnp.max(jnp.abs(out - ref)))
    # bf16 MXU path: ~0.5-1% relative error vs the f32 reference.
    assert jnp.allclose(out, ref, atol=5e-2, rtol=5e-2), err

    print("KERNEL_OK")
</pallas_src>

<mosaic_0001>
module attributes {stable_mosaic.version = 11 : i64} {
  func.func @_channel_stats_kernel(%arg0: i32, %arg1: memref<512x4xf32, #tpu.memory_space<vmem>>, %arg2: memref<1x4xf32, #tpu.memory_space<vmem>>, %arg3: memref<1x4xf32, #tpu.memory_space<vmem>>) attributes {dimension_semantics = [#tpu.dimension_semantics<arbitrary>], iteration_bounds = array<i64: 1>, scalar_prefetch = 0 : i64, scratch_operands = 0 : i64, tpu.core_type = #tpu.core_type<tc>, window_params = [{transform_indices = @transform_0, window_bounds = array<i64: 512, 4>}, {pipeline_mode = #tpu.pipeline_mode<synchronous>, transform_indices = @transform_1, window_bounds = array<i64: 1, 4>}, {pipeline_mode = #tpu.pipeline_mode<synchronous>, transform_indices = @transform_2, window_bounds = array<i64: 1, 4>}]} {
    %c0_i32 = arith.constant 0 : i32
    %0 = arith.cmpi eq, %arg0, %c0_i32 : i32
    %1 = arith.extui %0 : i1 to i32
    %c0_i32_0 = arith.constant 0 : i32
    %2 = arith.cmpi ne, %1, %c0_i32_0 : i32
    scf.if %2 {
      %cst_11 = arith.constant 0.000000e+00 : f32
      %15 = vector.broadcast %cst_11 : f32 to vector<1x4xf32>
      %c0_12 = arith.constant 0 : index
      %c0_13 = arith.constant 0 : index
      %16 = vector.load %arg2[%c0_12, %c0_13] : memref<1x4xf32, #tpu.memory_space<vmem>>, vector<1x4xf32>
      tpu.vector_store %arg2[%c0_12, %c0_13], %15 {strides = array<i32>} : memref<1x4xf32, #tpu.memory_space<vmem>>, vector<1x4xf32>,
      %cst_14 = arith.constant 0.000000e+00 : f32
      %17 = vector.broadcast %cst_14 : f32 to vector<1x4xf32>
      %c0_15 = arith.constant 0 : index
      %c0_16 = arith.constant 0 : index
      %18 = vector.load %arg3[%c0_15, %c0_16] : memref<1x4xf32, #tpu.memory_space<vmem>>, vector<1x4xf32>
      tpu.vector_store %arg3[%c0_15, %c0_16], %17 {strides = array<i32>} : memref<1x4xf32, #tpu.memory_space<vmem>>, vector<1x4xf32>,
    } else {
    }
    %c0 = arith.constant 0 : index
    %c0_1 = arith.constant 0 : index
    %3 = vector.load %arg1[%c0, %c0_1] : memref<512x4xf32, #tpu.memory_space<vmem>>, vector<512x4xf32>
    %c0_2 = arith.constant 0 : index
    %c0_3 = arith.constant 0 : index
    %4 = vector.load %arg2[%c0_2, %c0_3] : memref<1x4xf32, #tpu.memory_space<vmem>>, vector<1x4xf32>
    %cst = arith.constant dense<0.000000e+00> : vector<4xf32>
    %5 = vector.multi_reduction <add>, %3, %cst [0] : vector<512x4xf32> to vector<4xf32>
    %6 = vector.shape_cast %5 : vector<4xf32> to vector<1x4xf32>
    %7 = arith.addf %4, %6 : vector<1x4xf32>
    %c0_4 = arith.constant 0 : index
    %c0_5 = arith.constant 0 : index
    %8 = vector.load %arg2[%c0_4, %c0_5] : memref<1x4xf32, #tpu.memory_space<vmem>>, vector<1x4xf32>
    tpu.vector_store %arg2[%c0_4, %c0_5], %7 {strides = array<i32>} : memref<1x4xf32, #tpu.memory_space<vmem>>, vector<1x4xf32>,
    %c0_6 = arith.constant 0 : index
    %c0_7 = arith.constant 0 : index
    %9 = vector.load %arg3[%c0_6, %c0_7] : memref<1x4xf32, #tpu.memory_space<vmem>>, vector<1x4xf32>
    %10 = arith.mulf %3, %3 : vector<512x4xf32>
    %cst_8 = arith.constant dense<0.000000e+00> : vector<4xf32>
    %11 = vector.multi_reduction <add>, %10, %cst_8 [0] : vector<512x4xf32> to vector<4xf32>
    %12 = vector.shape_cast %11 : vector<4xf32> to vector<1x4xf32>
    %13 = arith.addf %9, %12 : vector<1x4xf32>
    %c0_9 = arith.constant 0 : index
    %c0_10 = arith.constant 0 : index
    %14 = vector.load %arg3[%c0_9, %c0_10] : memref<1x4xf32, #tpu.memory_space<vmem>>, vector<1x4xf32>
    tpu.vector_store %arg3[%c0_9, %c0_10], %13 {strides = array<i32>} : memref<1x4xf32, #tpu.memory_space<vmem>>, vector<1x4xf32>,
    return
  }
  func.func @transform_0(%arg0: i32) -> (i32, i32) {
    %c0_i32 = arith.constant 0 : i32
    %c0_i32_0 = arith.constant 0 : i32
    return %arg0, %c0_i32 : i32, i32
  }
  func.func @transform_1(%arg0: i32) -> (i32, i32) {
    %c0_i32 = arith.constant 0 : i32
    %c0_i32_0 = arith.constant 0 : i32
    %c0_i32_1 = arith.constant 0 : i32
    return %c0_i32, %c0_i32_0 : i32, i32
  }
  func.func @transform_2(%arg0: i32) -> (i32, i32) {
    %c0_i32 = arith.constant 0 : i32
    %c0_i32_0 = arith.constant 0 : i32
    %c0_i32_1 = arith.constant 0 : i32
    return %c0_i32, %c0_i32_0 : i32, i32
  }
}

module attributes {stable_mosaic.version = 11 : i64} {
  func.func @_bn_relu_conv1x1_stats_kernel(%arg0: i32, %arg1: memref<512x4xf32, #tpu.memory_space<vmem>>, %arg2: memref<1x4xf32, #tpu.memory_space<vmem>>, %arg3: memref<1x4xf32, #tpu.memory_space<vmem>>, %arg4: memref<4x32xbf16, #tpu.memory_space<vmem>>, %arg5: memref<512x32xbf16, #tpu.memory_space<vmem>>, %arg6: memref<1x32xf32, #tpu.memory_space<vmem>>, %arg7: memref<1x32xf32, #tpu.memory_space<vmem>>) attributes {dimension_semantics = [#tpu.dimension_semantics<arbitrary>], iteration_bounds = array<i64: 1>, scalar_prefetch = 0 : i64, scratch_operands = 0 : i64, tpu.core_type = #tpu.core_type<tc>, window_params = [{transform_indices = @transform_0, window_bounds = array<i64: 512, 4>}, {pipeline_mode = #tpu.pipeline_mode<synchronous>, transform_indices = @transform_1, window_bounds = array<i64: 1, 4>}, {pipeline_mode = #tpu.pipeline_mode<synchronous>, transform_indices = @transform_2, window_bounds = array<i64: 1, 4>}, {pipeline_mode = #tpu.pipeline_mode<synchronous>, transform_indices = @transform_3, window_bounds = array<i64: 4, 32>}, {transform_indices = @transform_4, window_bounds = array<i64: 512, 32>}, {pipeline_mode = #tpu.pipeline_mode<synchronous>, transform_indices = @transform_5, window_bounds = array<i64: 1, 32>}, {pipeline_mode = #tpu.pipeline_mode<synchronous>, transform_indices = @transform_6, window_bounds = array<i64: 1, 32>}]} {
    %c0_i32 = arith.constant 0 : i32
    %0 = arith.cmpi eq, %arg0, %c0_i32 : i32
    %1 = arith.extui %0 : i1 to i32
    %c0_i32_0 = arith.constant 0 : i32
    %2 = arith.cmpi ne, %1, %c0_i32_0 : i32
    scf.if %2 {
      %cst_21 = arith.constant 0.000000e+00 : f32
      %28 = vector.broadcast %cst_21 : f32 to vector<1x32xf32>
      %c0_22 = arith.constant 0 : index
      %c0_23 = arith.constant 0 : index
      %29 = vector.load %arg6[%c0_22, %c0_23] : memref<1x32xf32, #tpu.memory_space<vmem>>, vector<1x32xf32>
      tpu.vector_store %arg6[%c0_22, %c0_23], %28 {strides = array<i32>} : memref<1x32xf32, #tpu.memory_space<vmem>>, vector<1x32xf32>,
      %cst_24 = arith.constant 0.000000e+00 : f32
      %30 = vector.broadcast %cst_24 : f32 to vector<1x32xf32>
      %c0_25 = arith.constant 0 : index
      %c0_26 = arith.constant 0 : index
      %31 = vector.load %arg7[%c0_25, %c0_26] : memref<1x32xf32, #tpu.memory_space<vmem>>, vector<1x32xf32>
      tpu.vector_store %arg7[%c0_25, %c0_26], %30 {strides = array<i32>} : memref<1x32xf32, #tpu.memory_space<vmem>>, vector<1x32xf32>,
    } else {
    }
    %c0 = arith.constant 0 : index
    %c0_1 = arith.constant 0 : index
    %3 = vector.load %arg1[%c0, %c0_1] : memref<512x4xf32, #tpu.memory_space<vmem>>, vector<512x4xf32>
    %c0_2 = arith.constant 0 : index
    %c0_3 = arith.constant 0 : index
    %4 = vector.load %arg2[%c0_2, %c0_3] : memref<1x4xf32, #tpu.memory_space<vmem>>, vector<1x4xf32>
    %5 = vector.broadcast %4 : vector<1x4xf32> to vector<512x4xf32>
    %6 = arith.mulf %3, %5 : vector<512x4xf32>
    %c0_4 = arith.constant 0 : index
    %c0_5 = arith.constant 0 : index
    %7 = vector.load %arg3[%c0_4, %c0_5] : memref<1x4xf32, #tpu.memory_space<vmem>>, vector<1x4xf32>
    %8 = vector.broadcast %7 : vector<1x4xf32> to vector<512x4xf32>
    %9 = arith.addf %6, %8 : vector<512x4xf32>
    %cst = arith.constant 0.000000e+00 : f32
    %10 = vector.broadcast %cst : f32 to vector<512x4xf32>
    %11 = arith.maximumf %9, %10 : vector<512x4xf32>
    %12 = arith.truncf %11 : vector<512x4xf32> to vector<512x4xbf16>
    %c0_6 = arith.constant 0 : index
    %c0_7 = arith.constant 0 : index
    %13 = vector.load %arg4[%c0_6, %c0_7] : memref<4x32xbf16, #tpu.memory_space<vmem>>, vector<4x32xbf16>
    %cst_8 = arith.constant dense<0.000000e+00> : vector<512x32xf32>
    %14 = tpu.matmul %12, %13, %cst_8 {dimension_numbers = #tpu.dot_dimension_numbers<[1], [0], [0], [1], [0, 0, 1, 1], [], []>} : vector<512x4xbf16>, vector<4x32xbf16>, vector<512x32xf32> -> vector<512x32xf32>
    %15 = arith.truncf %14 : vector<512x32xf32> to vector<512x32xbf16>
    %c0_9 = arith.constant 0 : index
    %c0_10 = arith.constant 0 : index
    %16 = vector.load %arg5[%c0_9, %c0_10] : memref<512x32xbf16, #tpu.memory_space<vmem>>, vector<512x32xbf16>
    tpu.vector_store %arg5[%c0_9, %c0_10], %15 {strides = array<i32>} : memref<512x32xbf16, #tpu.memory_space<vmem>>, vector<512x32xbf16>,
    %c0_11 = arith.constant 0 : index
    %c0_12 = arith.constant 0 : index
    %17 = vector.load %arg6[%c0_11, %c0_12] : memref<1x32xf32, #tpu.memory_space<vmem>>, vector<1x32xf32>
    %cst_13 = arith.constant dense<0.000000e+00> : vector<32xf32>
    %18 = vector.multi_reduction <add>, %14, %cst_13 [0] : vector<512x32xf32> to vector<32xf32>
    %19 = vector.shape_cast %18 : vector<32xf32> to vector<1x32xf32>
    %20 = arith.addf %17, %19 : vector<1x32xf32>
    %c0_14 = arith.constant 0 : index
    %c0_15 = arith.constant 0 : index
    %21 = vector.load %arg6[%c0_14, %c0_15] : memref<1x32xf32, #tpu.memory_space<vmem>>, vector<1x32xf32>
    tpu.vector_store %arg6[%c0_14, %c0_15], %20 {strides = array<i32>} : memref<1x32xf32, #tpu.memory_space<vmem>>, vector<1x32xf32>,
    %c0_16 = arith.constant 0 : index
    %c0_17 = arith.constant 0 : index
    %22 = vector.load %arg7[%c0_16, %c0_17] : memref<1x32xf32, #tpu.memory_space<vmem>>, vector<1x32xf32>
    %23 = arith.mulf %14, %14 : vector<512x32xf32>
    %cst_18 = arith.constant dense<0.000000e+00> : vector<32xf32>
    %24 = vector.multi_reduction <add>, %23, %cst_18 [0] : vector<512x32xf32> to vector<32xf32>
    %25 = vector.shape_cast %24 : vector<32xf32> to vector<1x32xf32>
    %26 = arith.addf %22, %25 : vector<1x32xf32>
    %c0_19 = arith.constant 0 : index
    %c0_20 = arith.constant 0 : index
    %27 = vector.load %arg7[%c0_19, %c0_20] : memref<1x32xf32, #tpu.memory_space<vmem>>, vector<1x32xf32>
    tpu.vector_store %arg7[%c0_19, %c0_20], %26 {strides = array<i32>} : memref<1x32xf32, #tpu.memory_space<vmem>>, vector<1x32xf32>,
    return
  }
  func.func @transform_0(%arg0: i32) -> (i32, i32) {
    %c0_i32 = arith.constant 0 : i32
    %c0_i32_0 = arith.constant 0 : i32
    return %arg0, %c0_i32 : i32, i32
  }
  func.func @transform_1(%arg0: i32) -> (i32, i32) {
    %c0_i32 = arith.constant 0 : i32
    %c0_i32_0 = arith.constant 0 : i32
    %c0_i32_1 = arith.constant 0 : i32
    return %c0_i32, %c0_i32_0 : i32, i32
  }
  func.func @transform_2(%arg0: i32) -> (i32, i32) {
    %c0_i32 = arith.constant 0 : i32
    %c0_i32_0 = arith.constant 0 : i32
    %c0_i32_1 = arith.constant 0 : i32
    return %c0_i32, %c0_i32_0 : i32, i32
  }
  func.func @transform_3(%arg0: i32) -> (i32, i32) {
    %c0_i32 = arith.constant 0 : i32
    %c0_i32_0 = arith.constant 0 : i32
    %c0_i32_1 = arith.constant 0 : i32
    return %c0_i32, %c0_i32_0 : i32, i32
  }
  func.func @transform_4(%arg0: i32) -> (i32, i32) {
    %c0_i32 = arith.constant 0 : i32
    %c0_i32_0 = arith.constant 0 : i32
    return %arg0, %c0_i32 : i32, i32
  }
  func.func @transform_5(%arg0: i32) -> (i32, i32) {
    %c0_i32 = arith.constant 0 : i32
    %c0_i32_0 = arith.constant 0 : i32
    %c0_i32_1 = arith.constant 0 : i32
    return %c0_i32, %c0_i32_0 : i32, i32
  }
  func.func @transform_6(%arg0: i32) -> (i32, i32) {
    %c0_i32 = arith.constant 0 : i32
    %c0_i32_0 = arith.constant 0 : i32
    %c0_i32_1 = arith.constant 0 : i32
    return %c0_i32, %c0_i32_0 : i32, i32
  }
}

module attributes {stable_mosaic.version = 11 : i64} {
  func.func @_bn_relu_conv3x3_concat_kernel(%arg0: i32, %arg1: memref<1x256x4xf32, #tpu.memory_space<vmem>>, %arg2: memref<1x256x32xbf16, #tpu.memory_space<vmem>>, %arg3: memref<1x32xf32, #tpu.memory_space<vmem>>, %arg4: memref<1x32xf32, #tpu.memory_space<vmem>>, %arg5: memref<32x72xbf16, #tpu.memory_space<vmem>>, %arg6: memref<1x256x12xf32, #tpu.memory_space<vmem>>) attributes {dimension_semantics = [#tpu.dimension_semantics<parallel>], iteration_bounds = array<i64: 2>, scalar_prefetch = 0 : i64, scratch_operands = 0 : i64, tpu.core_type = #tpu.core_type<tc>, window_params = [{transform_indices = @transform_0, window_bounds = array<i64: 1, 256, 4>}, {transform_indices = @transform_1, window_bounds = array<i64: 1, 256, 32>}, {pipeline_mode = #tpu.pipeline_mode<synchronous>, transform_indices = @transform_2, window_bounds = array<i64: 1, 32>}, {pipeline_mode = #tpu.pipeline_mode<synchronous>, transform_indices = @transform_3, window_bounds = array<i64: 1, 32>}, {pipeline_mode = #tpu.pipeline_mode<synchronous>, transform_indices = @transform_4, window_bounds = array<i64: 32, 72>}, {transform_indices = @transform_5, window_bounds = array<i64: 1, 256, 12>}]} {
    %c0 = arith.constant 0 : index
    %c0_0 = arith.constant 0 : index
    %c0_1 = arith.constant 0 : index
    %0 = vector.load %arg1[%c0, %c0_0, %c0_1] : memref<1x256x4xf32, #tpu.memory_space<vmem>>, vector<1x256x4xf32>
    %1 = vector.shape_cast %0 : vector<1x256x4xf32> to vector<256x4xf32>
    %c0_2 = arith.constant 0 : index
    %c0_3 = arith.constant 0 : index
    %c0_4 = arith.constant 0 : index
    %2 = vector.load %arg6[%c0_2, %c0_3, %c0_4] : memref<1x256x12xf32, #tpu.memory_space<vmem>>, vector<1x256x4xf32>
    %3 = vector.shape_cast %2 : vector<1x256x4xf32> to vector<256x4xf32>
    %4 = vector.shape_cast %1 : vector<256x4xf32> to vector<1x256x4xf32>
    tpu.vector_store %arg6[%c0_2, %c0_3, %c0_4], %4 {strides = array<i32>} : memref<1x256x12xf32, #tpu.memory_space<vmem>>, vector<1x256x4xf32>,
    %c0_5 = arith.constant 0 : index
    %c0_6 = arith.constant 0 : index
    %c0_7 = arith.constant 0 : index
    %5 = vector.load %arg2[%c0_5, %c0_6, %c0_7] : memref<1x256x32xbf16, #tpu.memory_space<vmem>>, vector<1x256x32xbf16>
    %6 = vector.shape_cast %5 : vector<1x256x32xbf16> to vector<256x32xbf16>
    %7 = arith.extf %6 : vector<256x32xbf16> to vector<256x32xf32>
    %c0_8 = arith.constant 0 : index
    %c0_9 = arith.constant 0 : index
    %8 = vector.load %arg3[%c0_8, %c0_9] : memref<1x32xf32, #tpu.memory_space<vmem>>, vector<1x32xf32>
    %9 = vector.broadcast %8 : vector<1x32xf32> to vector<256x32xf32>
    %10 = arith.mulf %7, %9 : vector<256x32xf32>
    %c0_10 = arith.constant 0 : index
    %c0_11 = arith.constant 0 : index
    %11 = vector.load %arg4[%c0_10, %c0_11] : memref<1x32xf32, #tpu.memory_space<vmem>>, vector<1x32xf32>
    %12 = vector.broadcast %11 : vector<1x32xf32> to vector<256x32xf32>
    %13 = arith.addf %10, %12 : vector<256x32xf32>
    %cst = arith.constant 0.000000e+00 : f32
    %14 = vector.broadcast %cst : f32 to vector<256x32xf32>
    %15 = arith.maximumf %13, %14 : vector<256x32xf32>
    %16 = arith.truncf %15 : vector<256x32xf32> to vector<256x32xbf16>
    %c0_12 = arith.constant 0 : index
    %c0_13 = arith.constant 0 : index
    %17 = vector.load %arg5[%c0_12, %c0_13] : memref<32x72xbf16, #tpu.memory_space<vmem>>, vector<32x72xbf16>
    %cst_14 = arith.constant dense<0.000000e+00> : vector<256x72xf32>
    %18 = tpu.matmul %16, %17, %cst_14 {dimension_numbers = #tpu.dot_dimension_numbers<[1], [0], [0], [1], [0, 0, 1, 1], [], []>} : vector<256x32xbf16>, vector<32x72xbf16>, vector<256x72xf32> -> vector<256x72xf32>
    %19 = tpu.iota {dimensions = array<i32: 0>} : vector<256x8xi32>
    %20 = arith.sitofp %19 : vector<256x8xi32> to vector<256x8xf32>
    %cst_15 = arith.constant 5.000000e-01 : f32
    %21 = vector.broadcast %cst_15 : f32 to vector<256x8xf32>
    %22 = arith.addf %20, %21 : vector<256x8xf32>
    %cst_16 = arith.constant 1.600000e+01 : f32
    %23 = vector.broadcast %cst_16 : f32 to vector<256x8xf32>
    %24 = arith.divf %22, %23 : vector<256x8xf32>
    %25 = math.floor %24 : vector<256x8xf32>
    %cst_17 = arith.constant 1.600000e+01 : f32
    %26 = vector.broadcast %cst_17 : f32 to vector<256x8xf32>
    %27 = arith.mulf %25, %26 : vector<256x8xf32>
    %28 = arith.subf %20, %27 : vector<256x8xf32>
    %c16_i32 = arith.constant 16 : i32
    %29 = vector.broadcast %c16_i32 : i32 to vector<256x8xi32>
    %30 = arith.cmpi sge, %19, %29 : vector<256x8xi32>
    %c240_i32 = arith.constant 240 : i32
    %31 = vector.broadcast %c240_i32 : i32 to vector<256x8xi32>
    %32 = arith.cmpi slt, %19, %31 : vector<256x8xi32>
    %cst_18 = arith.constant 5.000000e-01 : f32
    %33 = vector.broadcast %cst_18 : f32 to vector<256x8xf32>
    %34 = arith.cmpf ogt, %28, %33 : vector<256x8xf32>
    %cst_19 = arith.constant 1.600000e+01 : f32
    %cst_20 = arith.constant 1.500000e+00 : f32
    %35 = arith.subf %cst_19, %cst_20 : f32
    %36 = vector.broadcast %35 : f32 to vector<256x8xf32>
    %37 = arith.cmpf olt, %28, %36 : vector<256x8xf32>
    %38 = vector.extract_strided_slice %18 {offsets = [0, 32], sizes = [256, 8], strides = [1, 1]} : vector<256x72xf32> to vector<256x8xf32>
    %39 = vector.extract_strided_slice %18 {offsets = [0, 0], sizes = [256, 8], strides = [1, 1]} : vector<256x72xf32> to vector<256x8xf32>
    %c17_i32 = arith.constant 17 : i32
    %40 = tpu.dynamic_rotate %39 by %c17_i32 dim 0 : vector<256x8xf32>, i32 -> vector<256x8xf32>
    %41 = arith.andi %30, %34 : vector<256x8xi1>
    %cst_21 = arith.constant 0.000000e+00 : f32
    %42 = vector.broadcast %cst_21 : f32 to vector<256x8xf32>
    %43 = arith.select %41, %40, %42 : vector<256x8xi1>, vector<256x8xf32>
    %44 = arith.addf %38, %43 : vector<256x8xf32>
    %45 = vector.extract_strided_slice %18 {offsets = [0, 8], sizes = [256, 8], strides = [1, 1]} : vector<256x72xf32> to vector<256x8xf32>
    %c16_i32_22 = arith.constant 16 : i32
    %46 = tpu.dynamic_rotate %45 by %c16_i32_22 dim 0 : vector<256x8xf32>, i32 -> vector<256x8xf32>
    %cst_23 = arith.constant 0.000000e+00 : f32
    %47 = vector.broadcast %cst_23 : f32 to vector<256x8xf32>
    %48 = arith.select %30, %46, %47 : vector<256x8xi1>, vector<256x8xf32>
    %49 = arith.addf %44, %48 : vector<256x8xf32>
    %50 = vector.extract_strided_slice %18 {offsets = [0, 16], sizes = [256, 8], strides = [1, 1]} : vector<256x72xf32> to vector<256x8xf32>
    %c15_i32 = arith.constant 15 : i32
    %51 = tpu.dynamic_rotate %50 by %c15_i32 dim 0 : vector<256x8xf32>, i32 -> vector<256x8xf32>
    %52 = arith.andi %30, %37 : vector<256x8xi1>
    %cst_24 = arith.constant 0.000000e+00 : f32
    %53 = vector.broadcast %cst_24 : f32 to vector<256x8xf32>
    %54 = arith.select %52, %51, %53 : vector<256x8xi1>, vector<256x8xf32>
    %55 = arith.addf %49, %54 : vector<256x8xf32>
    %56 = vector.extract_strided_slice %18 {offsets = [0, 24], sizes = [256, 8], strides = [1, 1]} : vector<256x72xf32> to vector<256x8xf32>
    %c1_i32 = arith.constant 1 : i32
    %57 = tpu.dynamic_rotate %56 by %c1_i32 dim 0 : vector<256x8xf32>, i32 -> vector<256x8xf32>
    %cst_25 = arith.constant 0.000000e+00 : f32
    %58 = vector.broadcast %cst_25 : f32 to vector<256x8xf32>
    %59 = arith.select %34, %57, %58 : vector<256x8xi1>, vector<256x8xf32>
    %60 = arith.addf %55, %59 : vector<256x8xf32>
    %61 = vector.extract_strided_slice %18 {offsets = [0, 40], sizes = [256, 8], strides = [1, 1]} : vector<256x72xf32> to vector<256x8xf32>
    %c255_i32 = arith.constant 255 : i32
    %62 = tpu.dynamic_rotate %61 by %c255_i32 dim 0 : vector<256x8xf32>, i32 -> vector<256x8xf32>
    %cst_26 = arith.constant 0.000000e+00 : f32
    %63 = vector.broadcast %cst_26 : f32 to vector<256x8xf32>
    %64 = arith.select %37, %62, %63 : vector<256x8xi1>, vector<256x8xf32>
    %65 = arith.addf %60, %64 : vector<256x8xf32>
    %66 = vector.extract_strided_slice %18 {offsets = [0, 48], sizes = [256, 8], strides = [1, 1]} : vector<256x72xf32> to vector<256x8xf32>
    %c241_i32 = arith.constant 241 : i32
    %67 = tpu.dynamic_rotate %66 by %c241_i32 dim 0 : vector<256x8xf32>, i32 -> vector<256x8xf32>
    %68 = arith.andi %32, %34 : vector<256x8xi1>
    %cst_27 = arith.constant 0.000000e+00 : f32
    %69 = vector.broadcast %cst_27 : f32 to vector<256x8xf32>
    %70 = arith.select %68, %67, %69 : vector<256x8xi1>, vector<256x8xf32>
    %71 = arith.addf %65, %70 : vector<256x8xf32>
    %72 = vector.extract_strided_slice %18 {offsets = [0, 56], sizes = [256, 8], strides = [1, 1]} : vector<256x72xf32> to vector<256x8xf32>
    %c240_i32_28 = arith.constant 240 : i32
    %73 = tpu.dynamic_rotate %72 by %c240_i32_28 dim 0 : vector<256x8xf32>, i32 -> vector<256x8xf32>
    %cst_29 = arith.constant 0.000000e+00 : f32
    %74 = vector.broadcast %cst_29 : f32 to vector<256x8xf32>
    %75 = arith.select %32, %73, %74 : vector<256x8xi1>, vector<256x8xf32>
    %76 = arith.addf %71, %75 : vector<256x8xf32>
    %77 = vector.extract_strided_slice %18 {offsets = [0, 64], sizes = [256, 8], strides = [1, 1]} : vector<256x72xf32> to vector<256x8xf32>
    %c239_i32 = arith.constant 239 : i32
    %78 = tpu.dynamic_rotate %77 by %c239_i32 dim 0 : vector<256x8xf32>, i32 -> vector<256x8xf32>
    %79 = arith.andi %32, %37 : vector<256x8xi1>
    %cst_30 = arith.constant 0.000000e+00 : f32
    %80 = vector.broadcast %cst_30 : f32 to vector<256x8xf32>
    %81 = arith.select %79, %78, %80 : vector<256x8xi1>, vector<256x8xf32>
    %82 = arith.addf %76, %81 : vector<256x8xf32>
    %c0_31 = arith.constant 0 : index
    %c0_32 = arith.constant 0 : index
    %c4 = arith.constant 4 : index
    %83 = vector.load %arg6[%c0_31, %c0_32, %c4] : memref<1x256x12xf32, #tpu.memory_space<vmem>>, vector<1x256x8xf32>
    %84 = vector.shape_cast %83 : vector<1x256x8xf32> to vector<256x8xf32>
    %85 = vector.shape_cast %82 : vector<256x8xf32> to vector<1x256x8xf32>
    tpu.vector_store %arg6[%c0_31, %c0_32, %c4], %85 {strides = array<i32>} : memref<1x256x12xf32, #tpu.memory_space<vmem>>, vector<1x256x8xf32>,
    return
  }
  func.func @transform_0(%arg0: i32) -> (i32, i32, i32) {
    %c0_i32 = arith.constant 0 : i32
    %c0_i32_0 = arith.constant 0 : i32
    %c0_i32_1 = arith.constant 0 : i32
    return %arg0, %c0_i32, %c0_i32_0 : i32, i32, i32
  }
  func.func @transform_1(%arg0: i32) -> (i32, i32, i32) {
    %c0_i32 = arith.constant 0 : i32
    %c0_i32_0 = arith.constant 0 : i32
    %c0_i32_1 = arith.constant 0 : i32
    return %arg0, %c0_i32, %c0_i32_0 : i32, i32, i32
  }
  func.func @transform_2(%arg0: i32) -> (i32, i32) {
    %c0_i32 = arith.constant 0 : i32
    %c0_i32_0 = arith.constant 0 : i32
    %c0_i32_1 = arith.constant 0 : i32
    return %c0_i32, %c0_i32_0 : i32, i32
  }
  func.func @transform_3(%arg0: i32) -> (i32, i32) {
    %c0_i32 = arith.constant 0 : i32
    %c0_i32_0 = arith.constant 0 : i32
    %c0_i32_1 = arith.constant 0 : i32
    return %c0_i32, %c0_i32_0 : i32, i32
  }
  func.func @transform_4(%arg0: i32) -> (i32, i32) {
    %c0_i32 = arith.constant 0 : i32
    %c0_i32_0 = arith.constant 0 : i32
    %c0_i32_1 = arith.constant 0 : i32
    return %c0_i32, %c0_i32_0 : i32, i32
  }
  func.func @transform_5(%arg0: i32) -> (i32, i32, i32) {
    %c0_i32 = arith.constant 0 : i32
    %c0_i32_0 = arith.constant 0 : i32
    %c0_i32_1 = arith.constant 0 : i32
    return %arg0, %c0_i32, %c0_i32_0 : i32, i32, i32
  }
}

</mosaic_0001>

<llo_original>
// kernel: dense_block_forward.3
$region0: #{dense_block_forward.3}
  #allocation0 [shape = 'u32[]', space=smem, size = 0x4, offset = 0x4, fixed_abs, tag = 'smem constant byte address 0x4 - core index']
  #allocation1 [shape = 'u32[72,128]{1,0:T(1,128)}', space=vmem, size = 0x9000, scoped, tag = 'internal scratch']
  %s0 = inlined_call_operand.vmem [shape: f32[512,4], index: 0, kind: input, shape index: {}]
  %s1 = inlined_call_operand.vmem [shape: f32[1,4], index: 1, kind: output, shape index: {0}]
  %s2 = inlined_call_operand.vmem [shape: f32[1,4], index: 2, kind: output, shape index: {1}]
  %3 = xla_tuple %s1, %s2
  %s4 = sld [smem:[#allocation0]]
  $region26: #{dense_block_forward.3} parent=0
    _
  %s6 = ssub.s32 1, %s4
  %s7 = scalar_select 0, %s6, %s4
  // Predicated region
  $region2: #{dense_block_forward.3} parent=0 // pred_check
    _
  $region3: #{dense_block_forward.3} parent=0 // pred_check_branch
    %9 = sbr.rel (0) target = $region5
  $region4: #{dense_block_forward.3} parent=0 // pred_region
    _
  $region5: #{dense_block_forward.3} parent=0 // pred_fallthru
    _
  %p10 = scmp.eq.s32.totalorder 0, 0
  // Predicated region
  $region6: #{dense_block_forward.3} parent=0 // pred_check
    %p11 = pneg %p10
  $region7: #{dense_block_forward.3} parent=0 // pred_check_branch
    %13 = sbr.rel (%p11) target = $region9
  $region8: #{dense_block_forward.3} parent=0 // pred_region
    %vm14 = vcmask 24576
    %15 = vst.msk [vmem:[%s1] sm:$0x1] %vm14, 0.0
    %16 = vst.msk [vmem:[%s2] sm:$0x1] %vm14, 0.0
  $region9: #{dense_block_forward.3} parent=0 // pred_fallthru
    _
  %v17 = vld [vmem:[%s0] sm:$0xff]
  %v18 = vld [vmem:[%s0 + $0x8] sm:$0xff]
  %v19 = vld [vmem:[%s0 + $0x10] sm:$0xff]
  %v20 = vld [vmem:[%s0 + $0x18] sm:$0xff]
  %v21 = vld [vmem:[%s0 + $0x20] sm:$0xff]
  %v22 = vld [vmem:[%s0 + $0x28] sm:$0xff]
  %v23 = vld [vmem:[%s0 + $0x30] sm:$0xff]
  %v24 = vld [vmem:[%s0 + $0x38] sm:$0xff]
  %v25 = vld [vmem:[%s0 + $0x40] sm:$0xff]
  %v26 = vld [vmem:[%s0 + $0x48] sm:$0xff]
  %v27 = vld [vmem:[%s0 + $0x50] sm:$0xff]
  %v28 = vld [vmem:[%s0 + $0x58] sm:$0xff]
  %v29 = vld [vmem:[%s0 + $0x60] sm:$0xff]
  %v30 = vld [vmem:[%s0 + $0x68] sm:$0xff]
  %v31 = vld [vmem:[%s0 + $0x70] sm:$0xff]
  %v32 = vld [vmem:[%s0 + $0x78] sm:$0xff]
  %v33 = vld [vmem:[%s0 + $0x80] sm:$0xff]
  %v34 = vld [vmem:[%s0 + $0x88] sm:$0xff]
  %v35 = vld [vmem:[%s0 + $0x90] sm:$0xff]
  %v36 = vld [vmem:[%s0 + $0x98] sm:$0xff]
  %v37 = vld [vmem:[%s0 + $0xa0] sm:$0xff]
  %v38 = vld [vmem:[%s0 + $0xa8] sm:$0xff]
  %v39 = vld [vmem:[%s0 + $0xb0] sm:$0xff]
  %v40 = vld [vmem:[%s0 + $0xb8] sm:$0xff]
  %v41 = vld [vmem:[%s0 + $0xc0] sm:$0xff]
  %v42 = vld [vmem:[%s0 + $0xc8] sm:$0xff]
  %v43 = vld [vmem:[%s0 + $0xd0] sm:$0xff]
  %v44 = vld [vmem:[%s0 + $0xd8] sm:$0xff]
  %v45 = vld [vmem:[%s0 + $0xe0] sm:$0xff]
  %v46 = vld [vmem:[%s0 + $0xe8] sm:$0xff]
  %v47 = vld [vmem:[%s0 + $0xf0] sm:$0xff]
  %v48 = vld [vmem:[%s0 + $0xf8] sm:$0xff]
  %v49 = vld [vmem:[%s0 + $0x100] sm:$0xff]
  %v50 = vld [vmem:[%s0 + $0x108] sm:$0xff]
  %v51 = vld [vmem:[%s0 + $0x110] sm:$0xff]
  %v52 = vld [vmem:[%s0 + $0x118] sm:$0xff]
  %v53 = vld [vmem:[%s0 + $0x120] sm:$0xff]
  %v54 = vld [vmem:[%s0 + $0x128] sm:$0xff]
  %v55 = vld [vmem:[%s0 + $0x130] sm:$0xff]
  %v56 = vld [vmem:[%s0 + $0x138] sm:$0xff]
  %v57 = vld [vmem:[%s0 + $0x140] sm:$0xff]
  %v58 = vld [vmem:[%s0 + $0x148] sm:$0xff]
  %v59 = vld [vmem:[%s0 + $0x150] sm:$0xff]
  %v60 = vld [vmem:[%s0 + $0x158] sm:$0xff]
  %v61 = vld [vmem:[%s0 + $0x160] sm:$0xff]
  %v62 = vld [vmem:[%s0 + $0x168] sm:$0xff]
  %v63 = vld [vmem:[%s0 + $0x170] sm:$0xff]
  %v64 = vld [vmem:[%s0 + $0x178] sm:$0xff]
  %v65 = vld [vmem:[%s0 + $0x180] sm:$0xff]
  %v66 = vld [vmem:[%s0 + $0x188] sm:$0xff]
  %v67 = vld [vmem:[%s0 + $0x190] sm:$0xff]
  %v68 = vld [vmem:[%s0 + $0x198] sm:$0xff]
  %v69 = vld [vmem:[%s0 + $0x1a0] sm:$0xff]
  %v70 = vld [vmem:[%s0 + $0x1a8] sm:$0xff]
  %v71 = vld [vmem:[%s0 + $0x1b0] sm:$0xff]
  %v72 = vld [vmem:[%s0 + $0x1b8] sm:$0xff]
  %v73 = vld [vmem:[%s0 + $0x1c0] sm:$0xff]
  %v74 = vld [vmem:[%s0 + $0x1c8] sm:$0xff]
  %v75 = vld [vmem:[%s0 + $0x1d0] sm:$0xff]
  %v76 = vld [vmem:[%s0 + $0x1d8] sm:$0xff]
  %v77 = vld [vmem:[%s0 + $0x1e0] sm:$0xff]
  %v78 = vld [vmem:[%s0 + $0x1e8] sm:$0xff]
  %v79 = vld [vmem:[%s0 + $0x1f0] sm:$0xff]
  %v80 = vld [vmem:[%s0 + $0x1f8] sm:$0xff]
  %v81 = vld [vmem:[%s1] sm:$0x1]
  %vm82 = vcmask 31744
  %v83 = vsel %vm82, %v17, 0.0
  %v84 = vsel %vm82, %v18, 0.0
  %v85 = vadd.f32 %v83, %v84
  %v86 = vsel %vm82, %v19, 0.0
  %v87 = vadd.f32 %v85, %v86
  %v88 = vsel %vm82, %v20, 0.0
  %v89 = vadd.f32 %v87, %v88
  %v90 = vsel %vm82, %v21, 0.0
  %v91 = vadd.f32 %v89, %v90
  %v92 = vsel %vm82, %v22, 0.0
  %v93 = vadd.f32 %v91, %v92
  %v94 = vsel %vm82, %v23, 0.0
  %v95 = vadd.f32 %v93, %v94
  %v96 = vsel %vm82, %v24, 0.0
  %v97 = vadd.f32 %v95, %v96
  %v98 = vsel %vm82, %v25, 0.0
  %v99 = vadd.f32 %v97, %v98
  %v100 = vsel %vm82, %v26, 0.0
  %v101 = vadd.f32 %v99, %v100
  %v102 = vsel %vm82, %v27, 0.0
  %v103 = vadd.f32 %v101, %v102
  %v104 = vsel %vm82, %v28, 0.0
  %v105 = vadd.f32 %v103, %v104
  %v106 = vsel %vm82, %v29, 0.0
  %v107 = vadd.f32 %v105, %v106
  %v108 = vsel %vm82, %v30, 0.0
  %v109 = vadd.f32 %v107, %v108
  %v110 = vsel %vm82, %v31, 0.0
  %v111 = vadd.f32 %v109, %v110
  %v112 = vsel %vm82, %v32, 0.0
  %v113 = vadd.f32 %v111, %v112
  %v114 = vsel %vm82, %v33, 0.0
  %v115 = vadd.f32 %v113, %v114
  %v116 = vsel %vm82, %v34, 0.0
  %v117 = vadd.f32 %v115, %v116
  %v118 = vsel %vm82, %v35, 0.0
  %v119 = vadd.f32 %v117, %v118
  %v120 = vsel %vm82, %v36, 0.0
  %v121 = vadd.f32 %v119, %v120
  %v122 = vsel %vm82, %v37, 0.0
  %v123 = vadd.f32 %v121, %v122
  %v124 = vsel %vm82, %v38, 0.0
  %v125 = vadd.f32 %v123, %v124
  %v126 = vsel %vm82, %v39, 0.0
  %v127 = vadd.f32 %v125, %v126
  %v128 = vsel %vm82, %v40, 0.0
  %v129 = vadd.f32 %v127, %v128
  %v130 = vsel %vm82, %v41, 0.0
  %v131 = vadd.f32 %v129, %v130
  %v132 = vsel %vm82, %v42, 0.0
  %v133 = vadd.f32 %v131, %v132
  %v134 = vsel %vm82, %v43, 0.0
  %v135 = vadd.f32 %v133, %v134
  %v136 = vsel %vm82, %v44, 0.0
  %v137 = vadd.f32 %v135, %v136
  %v138 = vsel %vm82, %v45, 0.0
  %v139 = vadd.f32 %v137, %v138
  %v140 = vsel %vm82, %v46, 0.0
  %v141 = vadd.f32 %v139, %v140
  %v142 = vsel %vm82, %v47, 0.0
  %v143 = vadd.f32 %v141, %v142
  %v144 = vsel %vm82, %v48, 0.0
  %v145 = vadd.f32 %v143, %v144
  %v146 = vsel %vm82, %v49, 0.0
  %v147 = vadd.f32 %v145, %v146
  %v148 = vsel %vm82, %v50, 0.0
  %v149 = vadd.f32 %v147, %v148
  %v150 = vsel %vm82, %v51, 0.0
  %v151 = vadd.f32 %v149, %v150
  %v152 = vsel %vm82, %v52, 0.0
  %v153 = vadd.f32 %v151, %v152
  %v154 = vsel %vm82, %v53, 0.0
  %v155 = vadd.f32 %v153, %v154
  %v156 = vsel %vm82, %v54, 0.0
  %v157 = vadd.f32 %v155, %v156
  %v158 = vsel %vm82, %v55, 0.0
  %v159 = vadd.f32 %v157, %v158
  %v160 = vsel %vm82, %v56, 0.0
  %v161 = vadd.f32 %v159, %v160
  %v162 = vsel %vm82, %v57, 0.0
  %v163 = vadd.f32 %v161, %v162
  %v164 = vsel %vm82, %v58, 0.0
  %v165 = vadd.f32 %v163, %v164
  %v166 = vsel %vm82, %v59, 0.0
  %v167 = vadd.f32 %v165, %v166
  %v168 = vsel %vm82, %v60, 0.0
  %v169 = vadd.f32 %v167, %v168
  %v170 = vsel %vm82, %v61, 0.0
  %v171 = vadd.f32 %v169, %v170
  %v172 = vsel %vm82, %v62, 0.0
  %v173 = vadd.f32 %v171, %v172
  %v174 = vsel %vm82, %v63, 0.0
  %v175 = vadd.f32 %v173, %v174
  %v176 = vsel %vm82, %v64, 0.0
  %v177 = vadd.f32 %v175, %v176
  %v178 = vsel %vm82, %v65, 0.0
  %v179 = vadd.f32 %v177, %v178
  %v180 = vsel %vm82, %v66, 0.0
  %v181 = vadd.f32 %v179, %v180
  %v182 = vsel %vm82, %v67, 0.0
  %v183 = vadd.f32 %v181, %v182
  %v184 = vsel %vm82, %v68, 0.0
  %v185 = vadd.f32 %v183, %v184
  %v186 = vsel %vm82, %v69, 0.0
  %v187 = vadd.f32 %v185, %v186
  %v188 = vsel %vm82, %v70, 0.0
  %v189 = vadd.f32 %v187, %v188
  %v190 = vsel %vm82, %v71, 0.0
  %v191 = vadd.f32 %v189, %v190
  %v192 = vsel %vm82, %v72, 0.0
  %v193 = vadd.f32 %v191, %v192
  %v194 = vsel %vm82, %v73, 0.0
  %v195 = vadd.f32 %v193, %v194
  %v196 = vsel %vm82, %v74, 0.0
  %v197 = vadd.f32 %v195, %v196
  %v198 = vsel %vm82, %v75, 0.0
  %v199 = vadd.f32 %v197, %v198
  %v200 = vsel %vm82, %v76, 0.0
  %v201 = vadd.f32 %v199, %v200
  %v202 = vsel %vm82, %v77, 0.0
  %v203 = vadd.f32 %v201, %v202
  %v204 = vsel %vm82, %v78, 0.0
  %v205 = vadd.f32 %v203, %v204
  %v206 = vsel %vm82, %v79, 0.0
  %v207 = vadd.f32 %v205, %v206
  %v208 = vsel %vm82, %v80, 0.0
  %v209 = vadd.f32 %v207, %v208
  %v210 = vrot.slane %v209, 4
  %v211 = vadd.f32 %v209, %v210
  %v212 = vrot.slane %v211, 2
  %v213 = vadd.f32 %v211, %v212
  %v214 = vrot.slane %v213, 1
  %v215 = vadd.f32 %v213, %v214
  %v216 = vadd.f32 %v81, %v215
  %vm217 = vcmask 24576
  %218 = vst.msk [vmem:[%s1] sm:$0x1] %vm217, %v216
  %v219 = vld [vmem:[%s2] sm:$0x1]
  %v220 = vmul.f32 %v17, %v17
  %v221 = vmul.f32 %v18, %v18
  %v222 = vmul.f32 %v19, %v19
  %v223 = vmul.f32 %v20, %v20
  %v224 = vmul.f32 %v21, %v21
  %v225 = vmul.f32 %v22, %v22
  %v226 = vmul.f32 %v23, %v23
  %v227 = vmul.f32 %v24, %v24
  %v228 = vmul.f32 %v25, %v25
  %v229 = vmul.f32 %v26, %v26
  %v230 = vmul.f32 %v27, %v27
  %v231 = vmul.f32 %v28, %v28
  %v232 = vmul.f32 %v29, %v29
  %v233 = vmul.f32 %v30, %v30
  %v234 = vmul.f32 %v31, %v31
  %v235 = vmul.f32 %v32, %v32
  %v236 = vmul.f32 %v33, %v33
  %v237 = vmul.f32 %v34, %v34
  %v238 = vmul.f32 %v35, %v35
  %v239 = vmul.f32 %v36, %v36
  %v240 = vmul.f32 %v37, %v37
  %v241 = vmul.f32 %v38, %v38
  %v242 = vmul.f32 %v39, %v39
  %v243 = vmul.f32 %v40, %v40
  %v244 = vmul.f32 %v41, %v41
  %v245 = vmul.f32 %v42, %v42
  %v246 = vmul.f32 %v43, %v43
  %v247 = vmul.f32 %v44, %v44
  %v248 = vmul.f32 %v45, %v45
  %v249 = vmul.f32 %v46, %v46
  %v250 = vmul.f32 %v47, %v47
  %v251 = vmul.f32 %v48, %v48
  %v252 = vmul.f32 %v49, %v49
  %v253 = vmul.f32 %v50, %v50
  %v254 = vmul.f32 %v51, %v51
  %v255 = vmul.f32 %v52, %v52
  %v256 = vmul.f32 %v53, %v53
  %v257 = vmul.f32 %v54, %v54
  %v258 = vmul.f32 %v55, %v55
  %v259 = vmul.f32 %v56, %v56
  %v260 = vmul.f32 %v57, %v57
  %v261 = vmul.f32 %v58, %v58
  %v262 = vmul.f32 %v59, %v59
  %v263 = vmul.f32 %v60, %v60
  %v264 = vmul.f32 %v61, %v61
  %v265 = vmul.f32 %v62, %v62
  %v266 = vmul.f32 %v63, %v63
  %v267 = vmul.f32 %v64, %v64
  %v268 = vmul.f32 %v65, %v65
  %v269 = vmul.f32 %v66, %v66
  %v270 = vmul.f32 %v67, %v67
  %v271 = vmul.f32 %v68, %v68
  %v272 = vmul.f32 %v69, %v69
  %v273 = vmul.f32 %v70, %v70
  %v274 = vmul.f32 %v71, %v71
  %v275 = vmul.f32 %v72, %v72
  %v276 = vmul.f32 %v73, %v73
  %v277 = vmul.f32 %v74, %v74
  %v278 = vmul.f32 %v75, %v75
  %v279 = vmul.f32 %v76, %v76
  %v280 = vmul.f32 %v77, %v77
  %v281 = vmul.f32 %v78, %v78
  %v282 = vmul.f32 %v79, %v79
  %v283 = vmul.f32 %v80, %v80
  %v284 = vsel %vm82, %v220, 0.0
  %v285 = vsel %vm82, %v221, 0.0
  %v286 = vadd.f32 %v284, %v285
  %v287 = vsel %vm82, %v222, 0.0
  %v288 = vadd.f32 %v286, %v287
  %v289 = vsel %vm82, %v223, 0.0
  %v290 = vadd.f32 %v288, %v289
  %v291 = vsel %vm82, %v224, 0.0
  %v292 = vadd.f32 %v290, %v291
  %v293 = vsel %vm82, %v225, 0.0
  %v294 = vadd.f32 %v292, %v293
  %v295 = vsel %vm82, %v226, 0.0
  %v296 = vadd.f32 %v294, %v295
  %v297 = vsel %vm82, %v227, 0.0
  %v298 = vadd.f32 %v296, %v297
  %v299 = vsel %vm82, %v228, 0.0
  %v300 = vadd.f32 %v298, %v299
  %v301 = vsel %vm82, %v229, 0.0
  %v302 = vadd.f32 %v300, %v301
  %v303 = vsel %vm82, %v230, 0.0
  %v304 = vadd.f32 %v302, %v303
  %v305 = vsel %vm82, %v231, 0.0
  %v306 = vadd.f32 %v304, %v305
  %v307 = vsel %vm82, %v232, 0.0
  %v308 = vadd.f32 %v306, %v307
  %v309 = vsel %vm82, %v233, 0.0
  %v310 = vadd.f32 %v308, %v309
  %v311 = vsel %vm82, %v234, 0.0
  %v312 = vadd.f32 %v310, %v311
  %v313 = vsel %vm82, %v235, 0.0
  %v314 = vadd.f32 %v312, %v313
  %v315 = vsel %vm82, %v236, 0.0
  %v316 = vadd.f32 %v314, %v315
  %v317 = vsel %vm82, %v237, 0.0
  %v318 = vadd.f32 %v316, %v317
  %v319 = vsel %vm82, %v238, 0.0
  %v320 = vadd.f32 %v318, %v319
  %v321 = vsel %vm82, %v239, 0.0
  %v322 = vadd.f32 %v320, %v321
  %v323 = vsel %vm82, %v240, 0.0
  %v324 = vadd.f32 %v322, %v323
  %v325 = vsel %vm82, %v241, 0.0
  %v326 = vadd.f32 %v324, %v325
  %v327 = vsel %vm82, %v242, 0.0
  %v328 = vadd.f32 %v326, %v327
  %v329 = vsel %vm82, %v243, 0.0
  %v330 = vadd.f32 %v328, %v329
  %v331 = vsel %vm82, %v244, 0.0
  %v332 = vadd.f32 %v330, %v331
  %v333 = vsel %vm82, %v245, 0.0
  %v334 = vadd.f32 %v332, %v333
  %v335 = vsel %vm82, %v246, 0.0
  %v336 = vadd.f32 %v334, %v335
  %v337 = vsel %vm82, %v247, 0.0
  %v338 = vadd.f32 %v336, %v337
  %v339 = vsel %vm82, %v248, 0.0
  %v340 = vadd.f32 %v338, %v339
  %v341 = vsel %vm82, %v249, 0.0
  %v342 = vadd.f32 %v340, %v341
  %v343 = vsel %vm82, %v250, 0.0
  %v344 = vadd.f32 %v342, %v343
  %v345 = vsel %vm82, %v251, 0.0
  %v346 = vadd.f32 %v344, %v345
  %v347 = vsel %vm82, %v252, 0.0
  %v348 = vadd.f32 %v346, %v347
  %v349 = vsel %vm82, %v253, 0.0
  %v350 = vadd.f32 %v348, %v349
  %v351 = vsel %vm82, %v254, 0.0
  %v352 = vadd.f32 %v350, %v351
  %v353 = vsel %vm82, %v255, 0.0
  %v354 = vadd.f32 %v352, %v353
  %v355 = vsel %vm82, %v256, 0.0
  %v356 = vadd.f32 %v354, %v355
  %v357 = vsel %vm82, %v257, 0.0
  %v358 = vadd.f32 %v356, %v357
  %v359 = vsel %vm82, %v258, 0.0
  %v360 = vadd.f32 %v358, %v359
  %v361 = vsel %vm82, %v259, 0.0
  %v362 = vadd.f32 %v360, %v361
  %v363 = vsel %vm82, %v260, 0.0
  %v364 = vadd.f32 %v362, %v363
  %v365 = vsel %vm82, %v261, 0.0
  %v366 = vadd.f32 %v364, %v365
  %v367 = vsel %vm82, %v262, 0.0
  %v368 = vadd.f32 %v366, %v367
  %v369 = vsel %vm82, %v263, 0.0
  %v370 = vadd.f32 %v368, %v369
  %v371 = vsel %vm82, %v264, 0.0
  %v372 = vadd.f32 %v370, %v371
  %v373 = vsel %vm82, %v265, 0.0
  %v374 = vadd.f32 %v372, %v373
  %v375 = vsel %vm82, %v266, 0.0
  %v376 = vadd.f32 %v374, %v375
  %v377 = vsel %vm82, %v267, 0.0
  %v378 = vadd.f32 %v376, %v377
  %v379 = vsel %vm82, %v268, 0.0
  %v380 = vadd.f32 %v378, %v379
  %v381 = vsel %vm82, %v269, 0.0
  %v382 = vadd.f32 %v380, %v381
  %v383 = vsel %vm82, %v270, 0.0
  %v384 = vadd.f32 %v382, %v383
  %v385 = vsel %vm82, %v271, 0.0
  %v386 = vadd.f32 %v384, %v385
  %v387 = vsel %vm82, %v272, 0.0
  %v388 = vadd.f32 %v386, %v387
  %v389 = vsel %vm82, %v273, 0.0
  %v390 = vadd.f32 %v388, %v389
  %v391 = vsel %vm82, %v274, 0.0
  %v392 = vadd.f32 %v390, %v391
  %v393 = vsel %vm82, %v275, 0.0
  %v394 = vadd.f32 %v392, %v393
  %v395 = vsel %vm82, %v276, 0.0
  %v396 = vadd.f32 %v394, %v395
  %v397 = vsel %vm82, %v277, 0.0
  %v398 = vadd.f32 %v396, %v397
  %v399 = vsel %vm82, %v278, 0.0
  %v400 = vadd.f32 %v398, %v399
  %v401 = vsel %vm82, %v279, 0.0
  %v402 = vadd.f32 %v400, %v401
  %v403 = vsel %vm82, %v280, 0.0
  %v404 = vadd.f32 %v402, %v403
  %v405 = vsel %vm82, %v281, 0.0
  %v406 = vadd.f32 %v404, %v405
  %v407 = vsel %vm82, %v282, 0.0
  %v408 = vadd.f32 %v406, %v407
  %v409 = vsel %vm82, %v283, 0.0
  %v410 = vadd.f32 %v408, %v409
  %v411 = vrot.slane %v410, 4
  %v412 = vadd.f32 %v410, %v411
  %v413 = vrot.slane %v412, 2
  %v414 = vadd.f32 %v412, %v413
  %v415 = vrot.slane %v414, 1
  %v416 = vadd.f32 %v414, %v415
  %v417 = vadd.f32 %v219, %v416
  %418 = vst.msk [vmem:[%s2] sm:$0x1] %vm217, %v417
  // Predicated region
  $region10: #{dense_block_forward.3} parent=0 // pred_check
    _
  $region11: #{dense_block_forward.3} parent=0 // pred_check_branch
    %420 = sbr.rel (0) target = $region13
  $region12: #{dense_block_forward.3} parent=0 // pred_region
    _
  $region13: #{dense_block_forward.3} parent=0 // pred_fallthru
    _
  // Predicated region
  $region14: #{dense_block_forward.3} parent=0 // pred_check
    _
  $region15: #{dense_block_forward.3} parent=0 // pred_check_branch
    %422 = sbr.rel (0) target = $region17
  $region16: #{dense_block_forward.3} parent=0 // pred_region
    _
  $region17: #{dense_block_forward.3} parent=0 // pred_fallthru
    _
  // Predicated region
  $region18: #{dense_block_forward.3} parent=0 // pred_check
    _
  $region19: #{dense_block_forward.3} parent=0 // pred_check_branch
    %424 = sbr.rel (0) target = $region21
  $region20: #{dense_block_forward.3} parent=0 // pred_region
    _
  $region21: #{dense_block_forward.3} parent=0 // pred_fallthru
    _
  // Predicated region
  $region22: #{dense_block_forward.3} parent=0 // pred_check
    _
  $region23: #{dense_block_forward.3} parent=0 // pred_check_branch
    %426 = sbr.rel (0) target = $region25
  $region24: #{dense_block_forward.3} parent=0 // pred_region
    _
  $region25: #{dense_block_forward.3} parent=0 // pred_fallthru
    _

// kernel: dense_block_forward.4
$region0: #{dense_block_forward.4}
  #allocation0 [shape = 'u32[]', space=smem, size = 0x4, offset = 0x4, fixed_abs, tag = 'smem constant byte address 0x4 - core index']
  #allocation1 [shape = 'u32[72,128]{1,0:T(1,128)}', space=vmem, size = 0x9000, scoped, tag = 'internal scratch']
  %s0 = inlined_call_operand.vmem [shape: f32[512,4], index: 0, kind: input, shape index: {}]
  %s1 = inlined_call_operand.vmem [shape: f32[1,4], index: 1, kind: input, shape index: {}]
  %s2 = inlined_call_operand.vmem [shape: f32[1,4], index: 2, kind: input, shape index: {}]
  %s3 = inlined_call_operand.vmem [shape: bf16[4,32], index: 3, kind: input, shape index: {}]
  %s4 = inlined_call_operand.vmem [shape: bf16[512,32], index: 4, kind: output, shape index: {0}]
  %s5 = inlined_call_operand.vmem [shape: f32[1,32], index: 5, kind: output, shape index: {1}]
  %s6 = inlined_call_operand.vmem [shape: f32[1,32], index: 6, kind: output, shape index: {2}]
  %7 = xla_tuple %s4, %s5, %s6
  %s8 = sld [smem:[#allocation0]]
  $region46: #{dense_block_forward.4} parent=0
    _
  %s10 = ssub.s32 1, %s8
  %s11 = scalar_select 0, %s10, %s8
  // Predicated region
  $region2: #{dense_block_forward.4} parent=0 // pred_check
    _
  $region3: #{dense_block_forward.4} parent=0 // pred_check_branch
    %13 = sbr.rel (0) target = $region5
  $region4: #{dense_block_forward.4} parent=0 // pred_region
    _
  $region5: #{dense_block_forward.4} parent=0 // pred_fallthru
    _
  // Predicated region
  $region6: #{dense_block_forward.4} parent=0 // pred_check
    _
  $region7: #{dense_block_forward.4} parent=0 // pred_check_branch
    %15 = sbr.rel (0) target = $region9
  $region8: #{dense_block_forward.4} parent=0 // pred_region
    _
  $region9: #{dense_block_forward.4} parent=0 // pred_fallthru
    _
  // Predicated region
  $region10: #{dense_block_forward.4} parent=0 // pred_check
    _
  $region11: #{dense_block_forward.4} parent=0 // pred_check_branch
    %17 = sbr.rel (0) target = $region13
  $region12: #{dense_block_forward.4} parent=0 // pred_region
    _
  $region13: #{dense_block_forward.4} parent=0 // pred_fallthru
    _
  // Predicated region
  $region14: #{dense_block_forward.4} parent=0 // pred_check
    _
  $region15: #{dense_block_forward.4} parent=0 // pred_check_branch
    %19 = sbr.rel (0) target = $region17
  $region16: #{dense_block_forward.4} parent=0 // pred_region
    _
  $region17: #{dense_block_forward.4} parent=0 // pred_fallthru
    _
  %p21 = scmp.eq.s32.totalorder 0, 0
  // Predicated region
  $region18: #{dense_block_forward.4} parent=0 // pred_check
    %p22 = pneg %p21
  $region19: #{dense_block_forward.4} parent=0 // pred_check_branch
    %24 = sbr.rel (%p22) target = $region21
  $region20: #{dense_block_forward.4} parent=0 // pred_region
    %vm25 = vcmask 253952
    %26 = vst.msk [vmem:[%s5] sm:$0x1] %vm25, 0.0
    %27 = vst.msk [vmem:[%s6] sm:$0x1] %vm25, 0.0
  $region21: #{dense_block_forward.4} parent=0 // pred_fallthru
    _
  %v28 = vld [vmem:[%s0] sm:$0xff]
  %v29 = vld [vmem:[%s0 + $0x8] sm:$0xff]
  %v30 = vld [vmem:[%s0 + $0x10] sm:$0xff]
  %v31 = vld [vmem:[%s0 + $0x18] sm:$0xff]
  %v32 = vld [vmem:[%s0 + $0x20] sm:$0xff]
  %v33 = vld [vmem:[%s0 + $0x28] sm:$0xff]
  %v34 = vld [vmem:[%s0 + $0x30] sm:$0xff]
  %v35 = vld [vmem:[%s0 + $0x38] sm:$0xff]
  %v36 = vld [vmem:[%s0 + $0x40] sm:$0xff]
  %v37 = vld [vmem:[%s0 + $0x48] sm:$0xff]
  %v38 = vld [vmem:[%s0 + $0x50] sm:$0xff]
  %v39 = vld [vmem:[%s0 + $0x58] sm:$0xff]
  %v40 = vld [vmem:[%s0 + $0x60] sm:$0xff]
  %v41 = vld [vmem:[%s0 + $0x68] sm:$0xff]
  %v42 = vld [vmem:[%s0 + $0x70] sm:$0xff]
  %v43 = vld [vmem:[%s0 + $0x78] sm:$0xff]
  %v44 = vld [vmem:[%s0 + $0x80] sm:$0xff]
  %v45 = vld [vmem:[%s0 + $0x88] sm:$0xff]
  %v46 = vld [vmem:[%s0 + $0x90] sm:$0xff]
  %v47 = vld [vmem:[%s0 + $0x98] sm:$0xff]
  %v48 = vld [vmem:[%s0 + $0xa0] sm:$0xff]
  %v49 = vld [vmem:[%s0 + $0xa8] sm:$0xff]
  %v50 = vld [vmem:[%s0 + $0xb0] sm:$0xff]
  %v51 = vld [vmem:[%s0 + $0xb8] sm:$0xff]
  %v52 = vld [vmem:[%s0 + $0xc0] sm:$0xff]
  %v53 = vld [vmem:[%s0 + $0xc8] sm:$0xff]
  %v54 = vld [vmem:[%s0 + $0xd0] sm:$0xff]
  %v55 = vld [vmem:[%s0 + $0xd8] sm:$0xff]
  %v56 = vld [vmem:[%s0 + $0xe0] sm:$0xff]
  %v57 = vld [vmem:[%s0 + $0xe8] sm:$0xff]
  %v58 = vld [vmem:[%s0 + $0xf0] sm:$0xff]
  %v59 = vld [vmem:[%s0 + $0xf8] sm:$0xff]
  %v60 = vld [vmem:[%s0 + $0x100] sm:$0xff]
  %v61 = vld [vmem:[%s0 + $0x108] sm:$0xff]
  %v62 = vld [vmem:[%s0 + $0x110] sm:$0xff]
  %v63 = vld [vmem:[%s0 + $0x118] sm:$0xff]
  %v64 = vld [vmem:[%s0 + $0x120] sm:$0xff]
  %v65 = vld [vmem:[%s0 + $0x128] sm:$0xff]
  %v66 = vld [vmem:[%s0 + $0x130] sm:$0xff]
  %v67 = vld [vmem:[%s0 + $0x138] sm:$0xff]
  %v68 = vld [vmem:[%s0 + $0x140] sm:$0xff]
  %v69 = vld [vmem:[%s0 + $0x148] sm:$0xff]
  %v70 = vld [vmem:[%s0 + $0x150] sm:$0xff]
  %v71 = vld [vmem:[%s0 + $0x158] sm:$0xff]
  %v72 = vld [vmem:[%s0 + $0x160] sm:$0xff]
  %v73 = vld [vmem:[%s0 + $0x168] sm:$0xff]
  %v74 = vld [vmem:[%s0 + $0x170] sm:$0xff]
  %v75 = vld [vmem:[%s0 + $0x178] sm:$0xff]
  %v76 = vld [vmem:[%s0 + $0x180] sm:$0xff]
  %v77 = vld [vmem:[%s0 + $0x188] sm:$0xff]
  %v78 = vld [vmem:[%s0 + $0x190] sm:$0xff]
  %v79 = vld [vmem:[%s0 + $0x198] sm:$0xff]
  %v80 = vld [vmem:[%s0 + $0x1a0] sm:$0xff]
  %v81 = vld [vmem:[%s0 + $0x1a8] sm:$0xff]
  %v82 = vld [vmem:[%s0 + $0x1b0] sm:$0xff]
  %v83 = vld [vmem:[%s0 + $0x1b8] sm:$0xff]
  %v84 = vld [vmem:[%s0 + $0x1c0] sm:$0xff]
  %v85 = vld [vmem:[%s0 + $0x1c8] sm:$0xff]
  %v86 = vld [vmem:[%s0 + $0x1d0] sm:$0xff]
  %v87 = vld [vmem:[%s0 + $0x1d8] sm:$0xff]
  %v88 = vld [vmem:[%s0 + $0x1e0] sm:$0xff]
  %v89 = vld [vmem:[%s0 + $0x1e8] sm:$0xff]
  %v90 = vld [vmem:[%s0 + $0x1f0] sm:$0xff]
  %v91 = vld [vmem:[%s0 + $0x1f8] sm:$0xff]
  %v92 = vld [vmem:[%s1] sm:$0x1]
  %v94 = vperm.slane %v92, 0
  %v96 = vmul.f32 %v28, %v94
  %v97 = vmul.f32 %v29, %v94
  %v98 = vmul.f32 %v30, %v94
  %v99 = vmul.f32 %v31, %v94
  %v100 = vmul.f32 %v32, %v94
  %v101 = vmul.f32 %v33, %v94
  %v102 = vmul.f32 %v34, %v94
  %v103 = vmul.f32 %v35, %v94
  %v104 = vmul.f32 %v36, %v94
  %v105 = vmul.f32 %v37, %v94
  %v106 = vmul.f32 %v38, %v94
  %v107 = vmul.f32 %v39, %v94
  %v108 = vmul.f32 %v40, %v94
  %v109 = vmul.f32 %v41, %v94
  %v110 = vmul.f32 %v42, %v94
  %v111 = vmul.f32 %v43, %v94
  %v112 = vmul.f32 %v44, %v94
  %v113 = vmul.f32 %v45, %v94
  %v114 = vmul.f32 %v46, %v94
  %v115 = vmul.f32 %v47, %v94
  %v116 = vmul.f32 %v48, %v94
  %v117 = vmul.f32 %v49, %v94
  %v118 = vmul.f32 %v50, %v94
  %v119 = vmul.f32 %v51, %v94
  %v120 = vmul.f32 %v52, %v94
  %v121 = vmul.f32 %v53, %v94
  %v122 = vmul.f32 %v54, %v94
  %v123 = vmul.f32 %v55, %v94
  %v124 = vmul.f32 %v56, %v94
  %v125 = vmul.f32 %v57, %v94
  %v126 = vmul.f32 %v58, %v94
  %v127 = vmul.f32 %v59, %v94
  %v128 = vmul.f32 %v60, %v94
  %v129 = vmul.f32 %v61, %v94
  %v130 = vmul.f32 %v62, %v94
  %v131 = vmul.f32 %v63, %v94
  %v132 = vmul.f32 %v64, %v94
  %v133 = vmul.f32 %v65, %v94
  %v134 = vmul.f32 %v66, %v94
  %v135 = vmul.f32 %v67, %v94
  %v136 = vmul.f32 %v68, %v94
  %v137 = vmul.f32 %v69, %v94
  %v138 = vmul.f32 %v70, %v94
  %v139 = vmul.f32 %v71, %v94
  %v140 = vmul.f32 %v72, %v94
  %v141 = vmul.f32 %v73, %v94
  %v142 = vmul.f32 %v74, %v94
  %v143 = vmul.f32 %v75, %v94
  %v144 = vmul.f32 %v76, %v94
  %v145 = vmul.f32 %v77, %v94
  %v146 = vmul.f32 %v78, %v94
  %v147 = vmul.f32 %v79, %v94
  %v148 = vmul.f32 %v80, %v94
  %v149 = vmul.f32 %v81, %v94
  %v150 = vmul.f32 %v82, %v94
  %v151 = vmul.f32 %v83, %v94
  %v152 = vmul.f32 %v84, %v94
  %v153 = vmul.f32 %v85, %v94
  %v154 = vmul.f32 %v86, %v94
  %v155 = vmul.f32 %v87, %v94
  %v156 = vmul.f32 %v88, %v94
  %v157 = vmul.f32 %v89, %v94
  %v158 = vmul.f32 %v90, %v94
  %v159 = vmul.f32 %v91, %v94
  %v160 = vld [vmem:[%s2] sm:$0x1]
  %v162 = vperm.slane %v160, 0
  %v164 = vadd.f32 %v96, %v162
  %v165 = vadd.f32 %v97, %v162
  %v166 = vadd.f32 %v98, %v162
  %v167 = vadd.f32 %v99, %v162
  %v168 = vadd.f32 %v100, %v162
  %v169 = vadd.f32 %v101, %v162
  %v170 = vadd.f32 %v102, %v162
  %v171 = vadd.f32 %v103, %v162
  %v172 = vadd.f32 %v104, %v162
  %v173 = vadd.f32 %v105, %v162
  %v174 = vadd.f32 %v106, %v162
  %v175 = vadd.f32 %v107, %v162
  %v176 = vadd.f32 %v108, %v162
  %v177 = vadd.f32 %v109, %v162
  %v178 = vadd.f32 %v110, %v162
  %v179 = vadd.f32 %v111, %v162
  %v180 = vadd.f32 %v112, %v162
  %v181 = vadd.f32 %v113, %v162
  %v182 = vadd.f32 %v114, %v162
  %v183 = vadd.f32 %v115, %v162
  %v184 = vadd.f32 %v116, %v162
  %v185 = vadd.f32 %v117, %v162
  %v186 = vadd.f32 %v118, %v162
  %v187 = vadd.f32 %v119, %v162
  %v188 = vadd.f32 %v120, %v162
  %v189 = vadd.f32 %v121, %v162
  %v190 = vadd.f32 %v122, %v162
  %v191 = vadd.f32 %v123, %v162
  %v192 = vadd.f32 %v124, %v162
  %v193 = vadd.f32 %v125, %v162
  %v194 = vadd.f32 %v126, %v162
  %v195 = vadd.f32 %v127, %v162
  %v196 = vadd.f32 %v128, %v162
  %v197 = vadd.f32 %v129, %v162
  %v198 = vadd.f32 %v130, %v162
  %v199 = vadd.f32 %v131, %v162
  %v200 = vadd.f32 %v132, %v162
  %v201 = vadd.f32 %v133, %v162
  %v202 = vadd.f32 %v134, %v162
  %v203 = vadd.f32 %v135, %v162
  %v204 = vadd.f32 %v136, %v162
  %v205 = vadd.f32 %v137, %v162
  %v206 = vadd.f32 %v138, %v162
  %v207 = vadd.f32 %v139, %v162
  %v208 = vadd.f32 %v140, %v162
  %v209 = vadd.f32 %v141, %v162
  %v210 = vadd.f32 %v142, %v162
  %v211 = vadd.f32 %v143, %v162
  %v212 = vadd.f32 %v144, %v162
  %v213 = vadd.f32 %v145, %v162
  %v214 = vadd.f32 %v146, %v162
  %v215 = vadd.f32 %v147, %v162
  %v216 = vadd.f32 %v148, %v162
  %v217 = vadd.f32 %v149, %v162
  %v218 = vadd.f32 %v150, %v162
  %v219 = vadd.f32 %v151, %v162
  %v220 = vadd.f32 %v152, %v162
  %v221 = vadd.f32 %v153, %v162
  %v222 = vadd.f32 %v154, %v162
  %v223 = vadd.f32 %v155, %v162
  %v224 = vadd.f32 %v156, %v162
  %v225 = vadd.f32 %v157, %v162
  %v226 = vadd.f32 %v158, %v162
  %v227 = vadd.f32 %v159, %v162
  %v228 = vmax.f32 %v164, 0.0
  %v229 = vmax.f32 %v165, 0.0
  %v230 = vmax.f32 %v166, 0.0
  %v231 = vmax.f32 %v167, 0.0
  %v232 = vmax.f32 %v168, 0.0
  %v233 = vmax.f32 %v169, 0.0
  %v234 = vmax.f32 %v170, 0.0
  %v235 = vmax.f32 %v171, 0.0
  %v236 = vmax.f32 %v172, 0.0
  %v237 = vmax.f32 %v173, 0.0
  %v238 = vmax.f32 %v174, 0.0
  %v239 = vmax.f32 %v175, 0.0
  %v240 = vmax.f32 %v176, 0.0
  %v241 = vmax.f32 %v177, 0.0
  %v242 = vmax.f32 %v178, 0.0
  %v243 = vmax.f32 %v179, 0.0
  %v244 = vmax.f32 %v180, 0.0
  %v245 = vmax.f32 %v181, 0.0
  %v246 = vmax.f32 %v182, 0.0
  %v247 = vmax.f32 %v183, 0.0
  %v248 = vmax.f32 %v184, 0.0
  %v249 = vmax.f32 %v185, 0.0
  %v250 = vmax.f32 %v186, 0.0
  %v251 = vmax.f32 %v187, 0.0
  %v252 = vmax.f32 %v188, 0.0
  %v253 = vmax.f32 %v189, 0.0
  %v254 = vmax.f32 %v190, 0.0
  %v255 = vmax.f32 %v191, 0.0
  %v256 = vmax.f32 %v192, 0.0
  %v257 = vmax.f32 %v193, 0.0
  %v258 = vmax.f32 %v194, 0.0
  %v259 = vmax.f32 %v195, 0.0
  %v260 = vmax.f32 %v196, 0.0
  %v261 = vmax.f32 %v197, 0.0
  %v262 = vmax.f32 %v198, 0.0
  %v263 = vmax.f32 %v199, 0.0
  %v264 = vmax.f32 %v200, 0.0
  %v265 = vmax.f32 %v201, 0.0
  %v266 = vmax.f32 %v202, 0.0
  %v267 = vmax.f32 %v203, 0.0
  %v268 = vmax.f32 %v204, 0.0
  %v269 = vmax.f32 %v205, 0.0
  %v270 = vmax.f32 %v206, 0.0
  %v271 = vmax.f32 %v207, 0.0
  %v272 = vmax.f32 %v208, 0.0
  %v273 = vmax.f32 %v209, 0.0
  %v274 = vmax.f32 %v210, 0.0
  %v275 = vmax.f32 %v211, 0.0
  %v276 = vmax.f32 %v212, 0.0
  %v277 = vmax.f32 %v213, 0.0
  %v278 = vmax.f32 %v214, 0.0
  %v279 = vmax.f32 %v215, 0.0
  %v280 = vmax.f32 %v216, 0.0
  %v281 = vmax.f32 %v217, 0.0
  %v282 = vmax.f32 %v218, 0.0
  %v283 = vmax.f32 %v219, 0.0
  %v284 = vmax.f32 %v220, 0.0
  %v285 = vmax.f32 %v221, 0.0
  %v286 = vmax.f32 %v222, 0.0
  %v287 = vmax.f32 %v223, 0.0
  %v288 = vmax.f32 %v224, 0.0
  %v289 = vmax.f32 %v225, 0.0
  %v290 = vmax.f32 %v226, 0.0
  %v291 = vmax.f32 %v227, 0.0
  %v292 = vpack.c.bf16 %v229, %v228
  %v293 = vpack.c.bf16 %v231, %v230
  %v294 = vpack.c.bf16 %v233, %v232
  %v295 = vpack.c.bf16 %v235, %v234
  %v296 = vpack.c.bf16 %v237, %v236
  %v297 = vpack.c.bf16 %v239, %v238
  %v298 = vpack.c.bf16 %v241, %v240
  %v299 = vpack.c.bf16 %v243, %v242
  %v300 = vpack.c.bf16 %v245, %v244
  %v301 = vpack.c.bf16 %v247, %v246
  %v302 = vpack.c.bf16 %v249, %v248
  %v303 = vpack.c.bf16 %v251, %v250
  %v304 = vpack.c.bf16 %v253, %v252
  %v305 = vpack.c.bf16 %v255, %v254
  %v306 = vpack.c.bf16 %v257, %v256
  %v307 = vpack.c.bf16 %v259, %v258
  %v308 = vpack.c.bf16 %v261, %v260
  %v309 = vpack.c.bf16 %v263, %v262
  %v310 = vpack.c.bf16 %v265, %v264
  %v311 = vpack.c.bf16 %v267, %v266
  %v312 = vpack.c.bf16 %v269, %v268
  %v313 = vpack.c.bf16 %v271, %v270
  %v314 = vpack.c.bf16 %v273, %v272
  %v315 = vpack.c.bf16 %v275, %v274
  %v316 = vpack.c.bf16 %v277, %v276
  %v317 = vpack.c.bf16 %v279, %v278
  %v318 = vpack.c.bf16 %v281, %v280
  %v319 = vpack.c.bf16 %v283, %v282
  %v320 = vpack.c.bf16 %v285, %v284
  %v321 = vpack.c.bf16 %v287, %v286
  %v322 = vpack.c.bf16 %v289, %v288
  %v323 = vpack.c.bf16 %v291, %v290
  %v324 = vld [vmem:[%s3] sm:$0x3]
  %vm325 = vcmask 31744
  %v327 = vsel %vm325, %v292, 0
  %v330 = vsel %vm325, %v293, 0
  %v333 = vsel %vm325, %v294, 0
  %v336 = vsel %vm325, %v295, 0
  %v339 = vsel %vm325, %v296, 0
  %v342 = vsel %vm325, %v297, 0
  %v345 = vsel %vm325, %v298, 0
  %v348 = vsel %vm325, %v299, 0
  %v351 = vsel %vm325, %v300, 0
  %v354 = vsel %vm325, %v301, 0
  %v357 = vsel %vm325, %v302, 0
  %v360 = vsel %vm325, %v303, 0
  %v363 = vsel %vm325, %v304, 0
  %v366 = vsel %vm325, %v305, 0
  %v369 = vsel %vm325, %v306, 0
  %v372 = vsel %vm325, %v307, 0
  %v375 = vsel %vm325, %v308, 0
  %v378 = vsel %vm325, %v309, 0
  %v381 = vsel %vm325, %v310, 0
  %v384 = vsel %vm325, %v311, 0
  %v387 = vsel %vm325, %v312, 0
  %v390 = vsel %vm325, %v313, 0
  %v393 = vsel %vm325, %v314, 0
  %v396 = vsel %vm325, %v315, 0
  %v399 = vsel %vm325, %v316, 0
  %v402 = vsel %vm325, %v317, 0
  %v405 = vsel %vm325, %v318, 0
  %v408 = vsel %vm325, %v319, 0
  %v411 = vsel %vm325, %v320, 0
  %v414 = vsel %vm325, %v321, 0
  %v417 = vsel %vm325, %v322, 0
  %v420 = vsel %vm325, %v323, 0
  %vm422 = vcmask 1041408
  %v424 = vsel %vm422, %v324, 0
  %426 = vmatpush.bf16.msra.mxu0 0
  %427 = vmatpush.bf16.msra.mxu0 0
  %428 = vmatpush.bf16.msra.mxu0 0
  %429 = vmatpush.bf16.msra.mxu0 0
  %430 = vmatpush.bf16.msra.mxu0 0
  %431 = vmatpush.bf16.msra.mxu0 0
  %432 = vmatpush.bf16.msra.mxu0 0
  %433 = vmatpush.bf16.msra.mxu0 %v424
  %434 = vmatmul.bf16.gmra.mxu0 %v327
  %v435 = vpop.f32.mrf.mxu0
  %v436 = vadd.f32 0.0, %v435
  %v437 = vpop.f32.mrf.mxu0
  %v438 = vadd.f32 0.0, %v437
  %439 = vmatmul.bf16.gmra.mxu0 %v330
  %v440 = vpop.f32.mrf.mxu0
  %v441 = vadd.f32 0.0, %v440
  %v442 = vpop.f32.mrf.mxu0
  %v443 = vadd.f32 0.0, %v442
  %444 = vmatmul.bf16.gmra.mxu0 %v333
  %v445 = vpop.f32.mrf.mxu0
  %v446 = vadd.f32 0.0, %v445
  %v447 = vpop.f32.mrf.mxu0
  %v448 = vadd.f32 0.0, %v447
  %449 = vmatmul.bf16.gmra.mxu0 %v336
  %v450 = vpop.f32.mrf.mxu0
  %v451 = vadd.f32 0.0, %v450
  %v452 = vpop.f32.mrf.mxu0
  %v453 = vadd.f32 0.0, %v452
  %454 = vmatmul.bf16.gmra.mxu0 %v339
  %v455 = vpop.f32.mrf.mxu0
  %v456 = vadd.f32 0.0, %v455
  %v457 = vpop.f32.mrf.mxu0
  %v458 = vadd.f32 0.0, %v457
  %459 = vmatmul.bf16.gmra.mxu0 %v342
  %v460 = vpop.f32.mrf.mxu0
  %v461 = vadd.f32 0.0, %v460
  %v462 = vpop.f32.mrf.mxu0
  %v463 = vadd.f32 0.0, %v462
  %464 = vmatmul.bf16.gmra.mxu0 %v345
  %v465 = vpop.f32.mrf.mxu0
  %v466 = vadd.f32 0.0, %v465
  %v467 = vpop.f32.mrf.mxu0
  %v468 = vadd.f32 0.0, %v467
  %469 = vmatmul.bf16.gmra.mxu0 %v348
  %v470 = vpop.f32.mrf.mxu0
  %v471 = vadd.f32 0.0, %v470
  %v472 = vpop.f32.mrf.mxu0
  %v473 = vadd.f32 0.0, %v472
  %474 = vmatmul.bf16.gmra.mxu0 %v351
  %v475 = vpop.f32.mrf.mxu0
  %v476 = vadd.f32 0.0, %v475
  %v477 = vpop.f32.mrf.mxu0
  %v478 = vadd.f32 0.0, %v477
  %479 = vmatmul.bf16.gmra.mxu0 %v354
  %v480 = vpop.f32.mrf.mxu0
  %v481 = vadd.f32 0.0, %v480
  %v482 = vpop.f32.mrf.mxu0
  %v483 = vadd.f32 0.0, %v482
  %484 = vmatmul.bf16.gmra.mxu0 %v357
  %v485 = vpop.f32.mrf.mxu0
  %v486 = vadd.f32 0.0, %v485
  %v487 = vpop.f32.mrf.mxu0
  %v488 = vadd.f32 0.0, %v487
  %489 = vmatmul.bf16.gmra.mxu0 %v360
  %v490 = vpop.f32.mrf.mxu0
  %v491 = vadd.f32 0.0, %v490
  %v492 = vpop.f32.mrf.mxu0
  %v493 = vadd.f32 0.0, %v492
  %494 = vmatmul.bf16.gmra.mxu0 %v363
  %v495 = vpop.f32.mrf.mxu0
  %v496 = vadd.f32 0.0, %v495
  %v497 = vpop.f32.mrf.mxu0
  %v498 = vadd.f32 0.0, %v497
  %499 = vmatmul.bf16.gmra.mxu0 %v366
  %v500 = vpop.f32.mrf.mxu0
  %v501 = vadd.f32 0.0, %v500
  %v502 = vpop.f32.mrf.mxu0
  %v503 = vadd.f32 0.0, %v502
  %504 = vmatmul.bf16.gmra.mxu0 %v369
  %v505 = vpop.f32.mrf.mxu0
  %v506 = vadd.f32 0.0, %v505
  %v507 = vpop.f32.mrf.mxu0
  %v508 = vadd.f32 0.0, %v507
  %509 = vmatmul.bf16.gmra.mxu0 %v372
  %v510 = vpop.f32.mrf.mxu0
  %v511 = vadd.f32 0.0, %v510
  %v512 = vpop.f32.mrf.mxu0
  %v513 = vadd.f32 0.0, %v512
  %514 = vmatmul.bf16.gmra.mxu0 %v375
  %v515 = vpop.f32.mrf.mxu0
  %v516 = vadd.f32 0.0, %v515
  %v517 = vpop.f32.mrf.mxu0
  %v518 = vadd.f32 0.0, %v517
  %519 = vmatmul.bf16.gmra.mxu0 %v378
  %v520 = vpop.f32.mrf.mxu0
  %v521 = vadd.f32 0.0, %v520
  %v522 = vpop.f32.mrf.mxu0
  %v523 = vadd.f32 0.0, %v522
  %524 = vmatmul.bf16.gmra.mxu0 %v381
  %v525 = vpop.f32.mrf.mxu0
  %v526 = vadd.f32 0.0, %v525
  %v527 = vpop.f32.mrf.mxu0
  %v528 = vadd.f32 0.0, %v527
  %529 = vmatmul.bf16.gmra.mxu0 %v384
  %v530 = vpop.f32.mrf.mxu0
  %v531 = vadd.f32 0.0, %v530
  %v532 = vpop.f32.mrf.mxu0
  %v533 = vadd.f32 0.0, %v532
  %534 = vmatmul.bf16.gmra.mxu0 %v387
  %v535 = vpop.f32.mrf.mxu0
  %v536 = vadd.f32 0.0, %v535
  %v537 = vpop.f32.mrf.mxu0
  %v538 = vadd.f32 0.0, %v537
  %539 = vmatmul.bf16.gmra.mxu0 %v390
  %v540 = vpop.f32.mrf.mxu0
  %v541 = vadd.f32 0.0, %v540
  %v542 = vpop.f32.mrf.mxu0
  %v543 = vadd.f32 0.0, %v542
  %544 = vmatmul.bf16.gmra.mxu0 %v393
  %v545 = vpop.f32.mrf.mxu0
  %v546 = vadd.f32 0.0, %v545
  %v547 = vpop.f32.mrf.mxu0
  %v548 = vadd.f32 0.0, %v547
  %549 = vmatmul.bf16.gmra.mxu0 %v396
  %v550 = vpop.f32.mrf.mxu0
  %v551 = vadd.f32 0.0, %v550
  %v552 = vpop.f32.mrf.mxu0
  %v553 = vadd.f32 0.0, %v552
  %554 = vmatmul.bf16.gmra.mxu0 %v399
  %v555 = vpop.f32.mrf.mxu0
  %v556 = vadd.f32 0.0, %v555
  %v557 = vpop.f32.mrf.mxu0
  %v558 = vadd.f32 0.0, %v557
  %559 = vmatmul.bf16.gmra.mxu0 %v402
  %v560 = vpop.f32.mrf.mxu0
  %v561 = vadd.f32 0.0, %v560
  %v562 = vpop.f32.mrf.mxu0
  %v563 = vadd.f32 0.0, %v562
  %564 = vmatmul.bf16.gmra.mxu0 %v405
  %v565 = vpop.f32.mrf.mxu0
  %v566 = vadd.f32 0.0, %v565
  %v567 = vpop.f32.mrf.mxu0
  %v568 = vadd.f32 0.0, %v567
  %569 = vmatmul.bf16.gmra.mxu0 %v408
  %v570 = vpop.f32.mrf.mxu0
  %v571 = vadd.f32 0.0, %v570
  %v572 = vpop.f32.mrf.mxu0
  %v573 = vadd.f32 0.0, %v572
  %574 = vmatmul.bf16.gmra.mxu0 %v411
  %v575 = vpop.f32.mrf.mxu0
  %v576 = vadd.f32 0.0, %v575
  %v577 = vpop.f32.mrf.mxu0
  %v578 = vadd.f32 0.0, %v577
  %579 = vmatmul.bf16.gmra.mxu0 %v414
  %v580 = vpop.f32.mrf.mxu0
  %v581 = vadd.f32 0.0, %v580
  %v582 = vpop.f32.mrf.mxu0
  %v583 = vadd.f32 0.0, %v582
  %584 = vmatmul.bf16.gmra.mxu0 %v417
  %v585 = vpop.f32.mrf.mxu0
  %v586 = vadd.f32 0.0, %v585
  %v587 = vpop.f32.mrf.mxu0
  %v588 = vadd.f32 0.0, %v587
  %589 = vmatmul.bf16.gmra.mxu0 %v420
  %v590 = vpop.f32.mrf.mxu0
  %v591 = vadd.f32 0.0, %v590
  %v592 = vpop.f32.mrf.mxu0
  %v593 = vadd.f32 0.0, %v592
  %594 = vdwg.mxu0
  %v595 = vpack.c.bf16 %v436, %v436
  %v596 = vpack.c.bf16 %v438, %v438
  %v597 = vpack.c.bf16 %v441, %v441
  %v598 = vpack.c.bf16 %v443, %v443
  %v599 = vpack.c.bf16 %v446, %v446
  %v600 = vpack.c.bf16 %v448, %v448
  %v601 = vpack.c.bf16 %v451, %v451
  %v602 = vpack.c.bf16 %v453, %v453
  %v603 = vpack.c.bf16 %v456, %v456
  %v604 = vpack.c.bf16 %v458, %v458
  %v605 = vpack.c.bf16 %v461, %v461
  %v606 = vpack.c.bf16 %v463, %v463
  %v607 = vpack.c.bf16 %v466, %v466
  %v608 = vpack.c.bf16 %v468, %v468
  %v609 = vpack.c.bf16 %v471, %v471
  %v610 = vpack.c.bf16 %v473, %v473
  %v611 = vpack.c.bf16 %v476, %v476
  %v612 = vpack.c.bf16 %v478, %v478
  %v613 = vpack.c.bf16 %v481, %v481
  %v614 = vpack.c.bf16 %v483, %v483
  %v615 = vpack.c.bf16 %v486, %v486
  %v616 = vpack.c.bf16 %v488, %v488
  %v617 = vpack.c.bf16 %v491, %v491
  %v618 = vpack.c.bf16 %v493, %v493
  %v619 = vpack.c.bf16 %v496, %v496
  %v620 = vpack.c.bf16 %v498, %v498
  %v621 = vpack.c.bf16 %v501, %v501
  %v622 = vpack.c.bf16 %v503, %v503
  %v623 = vpack.c.bf16 %v506, %v506
  %v624 = vpack.c.bf16 %v508, %v508
  %v625 = vpack.c.bf16 %v511, %v511
  %v626 = vpack.c.bf16 %v513, %v513
  %v627 = vpack.c.bf16 %v516, %v516
  %v628 = vpack.c.bf16 %v518, %v518
  %v629 = vpack.c.bf16 %v521, %v521
  %v630 = vpack.c.bf16 %v523, %v523
  %v631 = vpack.c.bf16 %v526, %v526
  %v632 = vpack.c.bf16 %v528, %v528
  %v633 = vpack.c.bf16 %v531, %v531
  %v634 = vpack.c.bf16 %v533, %v533
  %v635 = vpack.c.bf16 %v536, %v536
  %v636 = vpack.c.bf16 %v538, %v538
  %v637 = vpack.c.bf16 %v541, %v541
  %v638 = vpack.c.bf16 %v543, %v543
  %v639 = vpack.c.bf16 %v546, %v546
  %v640 = vpack.c.bf16 %v548, %v548
  %v641 = vpack.c.bf16 %v551, %v551
  %v642 = vpack.c.bf16 %v553, %v553
  %v643 = vpack.c.bf16 %v556, %v556
  %v644 = vpack.c.bf16 %v558, %v558
  %v645 = vpack.c.bf16 %v561, %v561
  %v646 = vpack.c.bf16 %v563, %v563
  %v647 = vpack.c.bf16 %v566, %v566
  %v648 = vpack.c.bf16 %v568, %v568
  %v649 = vpack.c.bf16 %v571, %v571
  %v650 = vpack.c.bf16 %v573, %v573
  %v651 = vpack.c.bf16 %v576, %v576
  %v652 = vpack.c.bf16 %v578, %v578
  %v653 = vpack.c.bf16 %v581, %v581
  %v654 = vpack.c.bf16 %v583, %v583
  %v655 = vpack.c.bf16 %v586, %v586
  %v656 = vpack.c.bf16 %v588, %v588
  %v657 = vpack.c.bf16 %v591, %v591
  %v658 = vpack.c.bf16 %v593, %v593
  %vm659 = vcmask 257024
  %660 = vst.msk [vmem:[%s4] sm:$0xf] %vm659, %v595
  %661 = vst.msk [vmem:[%s4 + $0x4] sm:$0xf] %vm659, %v596
  %662 = vst.msk [vmem:[%s4 + $0x8] sm:$0xf] %vm659, %v597
  %663 = vst.msk [vmem:[%s4 + $0xc] sm:$0xf] %vm659, %v598
  %664 = vst.msk [vmem:[%s4 + $0x10] sm:$0xf] %vm659, %v599
  %665 = vst.msk [vmem:[%s4 + $0x14] sm:$0xf] %vm659, %v600
  %666 = vst.msk [vmem:[%s4 + $0x18] sm:$0xf] %vm659, %v601
  %667 = vst.msk [vmem:[%s4 + $0x1c] sm:$0xf] %vm659, %v602
  %668 = vst.msk [vmem:[%s4 + $0x20] sm:$0xf] %vm659, %v603
  %669 = vst.msk [vmem:[%s4 + $0x24] sm:$0xf] %vm659, %v604
  %670 = vst.msk [vmem:[%s4 + $0x28] sm:$0xf] %vm659, %v605
  %671 = vst.msk [vmem:[%s4 + $0x2c] sm:$0xf] %vm659, %v606
  %672 = vst.msk [vmem:[%s4 + $0x30] sm:$0xf] %vm659, %v607
  %673 = vst.msk [vmem:[%s4 + $0x34] sm:$0xf] %vm659, %v608
  %674 = vst.msk [vmem:[%s4 + $0x38] sm:$0xf] %vm659, %v609
  %675 = vst.msk [vmem:[%s4 + $0x3c] sm:$0xf] %vm659, %v610
  %676 = vst.msk [vmem:[%s4 + $0x40] sm:$0xf] %vm659, %v611
  %677 = vst.msk [vmem:[%s4 + $0x44] sm:$0xf] %vm659, %v612
  %678 = vst.msk [vmem:[%s4 + $0x48] sm:$0xf] %vm659, %v613
  %679 = vst.msk [vmem:[%s4 + $0x4c] sm:$0xf] %vm659, %v614
  %680 = vst.msk [vmem:[%s4 + $0x50] sm:$0xf] %vm659, %v615
  %681 = vst.msk [vmem:[%s4 + $0x54] sm:$0xf] %vm659, %v616
  %682 = vst.msk [vmem:[%s4 + $0x58] sm:$0xf] %vm659, %v617
  %683 = vst.msk [vmem:[%s4 + $0x5c] sm:$0xf] %vm659, %v618
  %684 = vst.msk [vmem:[%s4 + $0x60] sm:$0xf] %vm659, %v619
  %685 = vst.msk [vmem:[%s4 + $0x64] sm:$0xf] %vm659, %v620
  %686 = vst.msk [vmem:[%s4 + $0x68] sm:$0xf] %vm659, %v621
  %687 = vst.msk [vmem:[%s4 + $0x6c] sm:$0xf] %vm659, %v622
  %688 = vst.msk [vmem:[%s4 + $0x70] sm:$0xf] %vm659, %v623
  %689 = vst.msk [vmem:[%s4 + $0x74] sm:$0xf] %vm659, %v624
  %690 = vst.msk [vmem:[%s4 + $0x78] sm:$0xf] %vm659, %v625
  %691 = vst.msk [vmem:[%s4 + $0x7c] sm:$0xf] %vm659, %v626
  %692 = vst.msk [vmem:[%s4 + $0x80] sm:$0xf] %vm659, %v627
  %693 = vst.msk [vmem:[%s4 + $0x84] sm:$0xf] %vm659, %v628
  %694 = vst.msk [vmem:[%s4 + $0x88] sm:$0xf] %vm659, %v629
  %695 = vst.msk [vmem:[%s4 + $0x8c] sm:$0xf] %vm659, %v630
  %696 = vst.msk [vmem:[%s4 + $0x90] sm:$0xf] %vm659, %v631
  %697 = vst.msk [vmem:[%s4 + $0x94] sm:$0xf] %vm659, %v632
  %698 = vst.msk [vmem:[%s4 + $0x98] sm:$0xf] %vm659, %v633
  %699 = vst.msk [vmem:[%s4 + $0x9c] sm:$0xf] %vm659, %v634
  %700 = vst.msk [vmem:[%s4 + $0xa0] sm:$0xf] %vm659, %v635
  %701 = vst.msk [vmem:[%s4 + $0xa4] sm:$0xf] %vm659, %v636
  %702 = vst.msk [vmem:[%s4 + $0xa8] sm:$0xf] %vm659, %v637
  %703 = vst.msk [vmem:[%s4 + $0xac] sm:$0xf] %vm659, %v638
  %704 = vst.msk [vmem:[%s4 + $0xb0] sm:$0xf] %vm659, %v639
  %705 = vst.msk [vmem:[%s4 + $0xb4] sm:$0xf] %vm659, %v640
  %706 = vst.msk [vmem:[%s4 + $0xb8] sm:$0xf] %vm659, %v641
  %707 = vst.msk [vmem:[%s4 + $0xbc] sm:$0xf] %vm659, %v642
  %708 = vst.msk [vmem:[%s4 + $0xc0] sm:$0xf] %vm659, %v643
  %709 = vst.msk [vmem:[%s4 + $0xc4] sm:$0xf] %vm659, %v644
  %710 = vst.msk [vmem:[%s4 + $0xc8] sm:$0xf] %vm659, %v645
  %711 = vst.msk [vmem:[%s4 + $0xcc] sm:$0xf] %vm659, %v646
  %712 = vst.msk [vmem:[%s4 + $0xd0] sm:$0xf] %vm659, %v647
  %713 = vst.msk [vmem:[%s4 + $0xd4] sm:$0xf] %vm659, %v648
  %714 = vst.msk [vmem:[%s4 + $0xd8] sm:$0xf] %vm659, %v649
  %715 = vst.msk [vmem:[%s4 + $0xdc] sm:$0xf] %vm659, %v650
  %716 = vst.msk [vmem:[%s4 + $0xe0] sm:$0xf] %vm659, %v651
  %717 = vst.msk [vmem:[%s4 + $0xe4] sm:$0xf] %vm659, %v652
  %718 = vst.msk [vmem:[%s4 + $0xe8] sm:$0xf] %vm659, %v653
  %719 = vst.msk [vmem:[%s4 + $0xec] sm:$0xf] %vm659, %v654
  %720 = vst.msk [vmem:[%s4 + $0xf0] sm:$0xf] %vm659, %v655
  %721 = vst.msk [vmem:[%s4 + $0xf4] sm:$0xf] %vm659, %v656
  %722 = vst.msk [vmem:[%s4 + $0xf8] sm:$0xf] %vm659, %v657
  %723 = vst.msk [vmem:[%s4 + $0xfc] sm:$0xf] %vm659, %v658
  %v724 = vld [vmem:[%s5] sm:$0x1]
  %vm725 = vcmask 261120
  %v726 = vsel %vm725, %v436, 0.0
  %v727 = vsel %vm725, %v438, 0.0
  %v728 = vadd.f32 %v726, %v727
  %v729 = vsel %vm725, %v441, 0.0
  %v730 = vadd.f32 %v728, %v729
  %v731 = vsel %vm725, %v443, 0.0
  %v732 = vadd.f32 %v730, %v731
  %v733 = vsel %vm725, %v446, 0.0
  %v734 = vadd.f32 %v732, %v733
  %v735 = vsel %vm725, %v448, 0.0
  %v736 = vadd.f32 %v734, %v735
  %v737 = vsel %vm725, %v451, 0.0
  %v738 = vadd.f32 %v736, %v737
  %v739 = vsel %vm725, %v453, 0.0
  %v740 = vadd.f32 %v738, %v739
  %v741 = vsel %vm725, %v456, 0.0
  %v742 = vadd.f32 %v740, %v741
  %v743 = vsel %vm725, %v458, 0.0
  %v744 = vadd.f32 %v742, %v743
  %v745 = vsel %vm725, %v461, 0.0
  %v746 = vadd.f32 %v744, %v745
  %v747 = vsel %vm725, %v463, 0.0
  %v748 = vadd.f32 %v746, %v747
  %v749 = vsel %vm725, %v466, 0.0
  %v750 = vadd.f32 %v748, %v749
  %v751 = vsel %vm725, %v468, 0.0
  %v752 = vadd.f32 %v750, %v751
  %v753 = vsel %vm725, %v471, 0.0
  %v754 = vadd.f32 %v752, %v753
  %v755 = vsel %vm725, %v473, 0.0
  %v756 = vadd.f32 %v754, %v755
  %v757 = vsel %vm725, %v476, 0.0
  %v758 = vadd.f32 %v756, %v757
  %v759 = vsel %vm725, %v478, 0.0
  %v760 = vadd.f32 %v758, %v759
  %v761 = vsel %vm725, %v481, 0.0
  %v762 = vadd.f32 %v760, %v761
  %v763 = vsel %vm725, %v483, 0.0
  %v764 = vadd.f32 %v762, %v763
  %v765 = vsel %vm725, %v486, 0.0
  %v766 = vadd.f32 %v764, %v765
  %v767 = vsel %vm725, %v488, 0.0
  %v768 = vadd.f32 %v766, %v767
  %v769 = vsel %vm725, %v491, 0.0
  %v770 = vadd.f32 %v768, %v769
  %v771 = vsel %vm725, %v493, 0.0
  %v772 = vadd.f32 %v770, %v771
  %v773 = vsel %vm725, %v496, 0.0
  %v774 = vadd.f32 %v772, %v773
  %v775 = vsel %vm725, %v498, 0.0
  %v776 = vadd.f32 %v774, %v775
  %v777 = vsel %vm725, %v501, 0.0
  %v778 = vadd.f32 %v776, %v777
  %v779 = vsel %vm725, %v503, 0.0
  %v780 = vadd.f32 %v778, %v779
  %v781 = vsel %vm725, %v506, 0.0
  %v782 = vadd.f32 %v780, %v781
  %v783 = vsel %vm725, %v508, 0.0
  %v784 = vadd.f32 %v782, %v783
  %v785 = vsel %vm725, %v511, 0.0
  %v786 = vadd.f32 %v784, %v785
  %v787 = vsel %vm725, %v513, 0.0
  %v788 = vadd.f32 %v786, %v787
  %v789 = vsel %vm725, %v516, 0.0
  %v790 = vadd.f32 %v788, %v789
  %v791 = vsel %vm725, %v518, 0.0
  %v792 = vadd.f32 %v790, %v791
  %v793 = vsel %vm725, %v521, 0.0
  %v794 = vadd.f32 %v792, %v793
  %v795 = vsel %vm725, %v523, 0.0
  %v796 = vadd.f32 %v794, %v795
  %v797 = vsel %vm725, %v526, 0.0
  %v798 = vadd.f32 %v796, %v797
  %v799 = vsel %vm725, %v528, 0.0
  %v800 = vadd.f32 %v798, %v799
  %v801 = vsel %vm725, %v531, 0.0
  %v802 = vadd.f32 %v800, %v801
  %v803 = vsel %vm725, %v533, 0.0
  %v804 = vadd.f32 %v802, %v803
  %v805 = vsel %vm725, %v536, 0.0
  %v806 = vadd.f32 %v804, %v805
  %v807 = vsel %vm725, %v538, 0.0
  %v808 = vadd.f32 %v806, %v807
  %v809 = vsel %vm725, %v541, 0.0
  %v810 = vadd.f32 %v808, %v809
  %v811 = vsel %vm725, %v543, 0.0
  %v812 = vadd.f32 %v810, %v811
  %v813 = vsel %vm725, %v546, 0.0
  %v814 = vadd.f32 %v812, %v813
  %v815 = vsel %vm725, %v548, 0.0
  %v816 = vadd.f32 %v814, %v815
  %v817 = vsel %vm725, %v551, 0.0
  %v818 = vadd.f32 %v816, %v817
  %v819 = vsel %vm725, %v553, 0.0
  %v820 = vadd.f32 %v818, %v819
  %v821 = vsel %vm725, %v556, 0.0
  %v822 = vadd.f32 %v820, %v821
  %v823 = vsel %vm725, %v558, 0.0
  %v824 = vadd.f32 %v822, %v823
  %v825 = vsel %vm725, %v561, 0.0
  %v826 = vadd.f32 %v824, %v825
  %v827 = vsel %vm725, %v563, 0.0
  %v828 = vadd.f32 %v826, %v827
  %v829 = vsel %vm725, %v566, 0.0
  %v830 = vadd.f32 %v828, %v829
  %v831 = vsel %vm725, %v568, 0.0
  %v832 = vadd.f32 %v830, %v831
  %v833 = vsel %vm725, %v571, 0.0
  %v834 = vadd.f32 %v832, %v833
  %v835 = vsel %vm725, %v573, 0.0
  %v836 = vadd.f32 %v834, %v835
  %v837 = vsel %vm725, %v576, 0.0
  %v838 = vadd.f32 %v836, %v837
  %v839 = vsel %vm725, %v578, 0.0
  %v840 = vadd.f32 %v838, %v839
  %v841 = vsel %vm725, %v581, 0.0
  %v842 = vadd.f32 %v840, %v841
  %v843 = vsel %vm725, %v583, 0.0
  %v844 = vadd.f32 %v842, %v843
  %v845 = vsel %vm725, %v586, 0.0
  %v846 = vadd.f32 %v844, %v845
  %v847 = vsel %vm725, %v588, 0.0
  %v848 = vadd.f32 %v846, %v847
  %v849 = vsel %vm725, %v591, 0.0
  %v850 = vadd.f32 %v848, %v849
  %v851 = vsel %vm725, %v593, 0.0
  %v852 = vadd.f32 %v850, %v851
  %v853 = vrot.slane %v852, 4
  %v854 = vadd.f32 %v852, %v853
  %v855 = vrot.slane %v854, 2
  %v856 = vadd.f32 %v854, %v855
  %v857 = vrot.slane %v856, 1
  %v858 = vadd.f32 %v856, %v857
  %v859 = vadd.f32 %v724, %v858
  %vm860 = vcmask 253952
  %861 = vst.msk [vmem:[%s5] sm:$0x1] %vm860, %v859
  %v862 = vld [vmem:[%s6] sm:$0x1]
  %v863 = vmul.f32 %v436, %v436
  %v864 = vmul.f32 %v438, %v438
  %v865 = vmul.f32 %v441, %v441
  %v866 = vmul.f32 %v443, %v443
  %v867 = vmul.f32 %v446, %v446
  %v868 = vmul.f32 %v448, %v448
  %v869 = vmul.f32 %v451, %v451
  %v870 = vmul.f32 %v453, %v453
  %v871 = vmul.f32 %v456, %v456
  %v872 = vmul.f32 %v458, %v458
  %v873 = vmul.f32 %v461, %v461
  %v874 = vmul.f32 %v463, %v463
  %v875 = vmul.f32 %v466, %v466
  %v876 = vmul.f32 %v468, %v468
  %v877 = vmul.f32 %v471, %v471
  %v878 = vmul.f32 %v473, %v473
  %v879 = vmul.f32 %v476, %v476
  %v880 = vmul.f32 %v478, %v478
  %v881 = vmul.f32 %v481, %v481
  %v882 = vmul.f32 %v483, %v483
  %v883 = vmul.f32 %v486, %v486
  %v884 = vmul.f32 %v488, %v488
  %v885 = vmul.f32 %v491, %v491
  %v886 = vmul.f32 %v493, %v493
  %v887 = vmul.f32 %v496, %v496
  %v888 = vmul.f32 %v498, %v498
  %v889 = vmul.f32 %v501, %v501
  %v890 = vmul.f32 %v503, %v503
  %v891 = vmul.f32 %v506, %v506
  %v892 = vmul.f32 %v508, %v508
  %v893 = vmul.f32 %v511, %v511
  %v894 = vmul.f32 %v513, %v513
  %v895 = vmul.f32 %v516, %v516
  %v896 = vmul.f32 %v518, %v518
  %v897 = vmul.f32 %v521, %v521
  %v898 = vmul.f32 %v523, %v523
  %v899 = vmul.f32 %v526, %v526
  %v900 = vmul.f32 %v528, %v528
  %v901 = vmul.f32 %v531, %v531
  %v902 = vmul.f32 %v533, %v533
  %v903 = vmul.f32 %v536, %v536
  %v904 = vmul.f32 %v538, %v538
  %v905 = vmul.f32 %v541, %v541
  %v906 = vmul.f32 %v543, %v543
  %v907 = vmul.f32 %v546, %v546
  %v908 = vmul.f32 %v548, %v548
  %v909 = vmul.f32 %v551, %v551
  %v910 = vmul.f32 %v553, %v553
  %v911 = vmul.f32 %v556, %v556
  %v912 = vmul.f32 %v558, %v558
  %v913 = vmul.f32 %v561, %v561
  %v914 = vmul.f32 %v563, %v563
  %v915 = vmul.f32 %v566, %v566
  %v916 = vmul.f32 %v568, %v568
  %v917 = vmul.f32 %v571, %v571
  %v918 = vmul.f32 %v573, %v573
  %v919 = vmul.f32 %v576, %v576
  %v920 = vmul.f32 %v578, %v578
  %v921 = vmul.f32 %v581, %v581
  %v922 = vmul.f32 %v583, %v583
  %v923 = vmul.f32 %v586, %v586
  %v924 = vmul.f32 %v588, %v588
  %v925 = vmul.f32 %v591, %v591
  %v926 = vmul.f32 %v593, %v593
  %v927 = vsel %vm725, %v863, 0.0
  %v928 = vsel %vm725, %v864, 0.0
  %v929 = vadd.f32 %v927, %v928
  %v930 = vsel %vm725, %v865, 0.0
  %v931 = vadd.f32 %v929, %v930
  %v932 = vsel %vm725, %v866, 0.0
  %v933 = vadd.f32 %v931, %v932
  %v934 = vsel %vm725, %v867, 0.0
  %v935 = vadd.f32 %v933, %v934
  %v936 = vsel %vm725, %v868, 0.0
  %v937 = vadd.f32 %v935, %v936
  %v938 = vsel %vm725, %v869, 0.0
  %v939 = vadd.f32 %v937, %v938
  %v940 = vsel %vm725, %v870, 0.0
  %v941 = vadd.f32 %v939, %v940
  %v942 = vsel %vm725, %v871, 0.0
  %v943 = vadd.f32 %v941, %v942
  %v944 = vsel %vm725, %v872, 0.0
  %v945 = vadd.f32 %v943, %v944
  %v946 = vsel %vm725, %v873, 0.0
  %v947 = vadd.f32 %v945, %v946
  %v948 = vsel %vm725, %v874, 0.0
  %v949 = vadd.f32 %v947, %v948
  %v950 = vsel %vm725, %v875, 0.0
  %v951 = vadd.f32 %v949, %v950
  %v952 = vsel %vm725, %v876, 0.0
  %v953 = vadd.f32 %v951, %v952
  %v954 = vsel %vm725, %v877, 0.0
  %v955 = vadd.f32 %v953, %v954
  %v956 = vsel %vm725, %v878, 0.0
  %v957 = vadd.f32 %v955, %v956
  %v958 = vsel %vm725, %v879, 0.0
  %v959 = vadd.f32 %v957, %v958
  %v960 = vsel %vm725, %v880, 0.0
  %v961 = vadd.f32 %v959, %v960
  %v962 = vsel %vm725, %v881, 0.0
  %v963 = vadd.f32 %v961, %v962
  %v964 = vsel %vm725, %v882, 0.0
  %v965 = vadd.f32 %v963, %v964
  %v966 = vsel %vm725, %v883, 0.0
  %v967 = vadd.f32 %v965, %v966
  %v968 = vsel %vm725, %v884, 0.0
  %v969 = vadd.f32 %v967, %v968
  %v970 = vsel %vm725, %v885, 0.0
  %v971 = vadd.f32 %v969, %v970
  %v972 = vsel %vm725, %v886, 0.0
  %v973 = vadd.f32 %v971, %v972
  %v974 = vsel %vm725, %v887, 0.0
  %v975 = vadd.f32 %v973, %v974
  %v976 = vsel %vm725, %v888, 0.0
  %v977 = vadd.f32 %v975, %v976
  %v978 = vsel %vm725, %v889, 0.0
  %v979 = vadd.f32 %v977, %v978
  %v980 = vsel %vm725, %v890, 0.0
  %v981 = vadd.f32 %v979, %v980
  %v982 = vsel %vm725, %v891, 0.0
  %v983 = vadd.f32 %v981, %v982
  %v984 = vsel %vm725, %v892, 0.0
  %v985 = vadd.f32 %v983, %v984
  %v986 = vsel %vm725, %v893, 0.0
  %v987 = vadd.f32 %v985, %v986
  %v988 = vsel %vm725, %v894, 0.0
  %v989 = vadd.f32 %v987, %v988
  %v990 = vsel %vm725, %v895, 0.0
  %v991 = vadd.f32 %v989, %v990
  %v992 = vsel %vm725, %v896, 0.0
  %v993 = vadd.f32 %v991, %v992
  %v994 = vsel %vm725, %v897, 0.0
  %v995 = vadd.f32 %v993, %v994
  %v996 = vsel %vm725, %v898, 0.0
  %v997 = vadd.f32 %v995, %v996
  %v998 = vsel %vm725, %v899, 0.0
  %v999 = vadd.f32 %v997, %v998
  %v1000 = vsel %vm725, %v900, 0.0
  %v1001 = vadd.f32 %v999, %v1000
  %v1002 = vsel %vm725, %v901, 0.0
  %v1003 = vadd.f32 %v1001, %v1002
  %v1004 = vsel %vm725, %v902, 0.0
  %v1005 = vadd.f32 %v1003, %v1004
  %v1006 = vsel %vm725, %v903, 0.0
  %v1007 = vadd.f32 %v1005, %v1006
  %v1008 = vsel %vm725, %v904, 0.0
  %v1009 = vadd.f32 %v1007, %v1008
  %v1010 = vsel %vm725, %v905, 0.0
  %v1011 = vadd.f32 %v1009, %v1010
  %v1012 = vsel %vm725, %v906, 0.0
  %v1013 = vadd.f32 %v1011, %v1012
  %v1014 = vsel %vm725, %v907, 0.0
  %v1015 = vadd.f32 %v1013, %v1014
  %v1016 = vsel %vm725, %v908, 0.0
  %v1017 = vadd.f32 %v1015, %v1016
  %v1018 = vsel %vm725, %v909, 0.0
  %v1019 = vadd.f32 %v1017, %v1018
  %v1020 = vsel %vm725, %v910, 0.0
  %v1021 = vadd.f32 %v1019, %v1020
  %v1022 = vsel %vm725, %v911, 0.0
  %v1023 = vadd.f32 %v1021, %v1022
  %v1024 = vsel %vm725, %v912, 0.0
  %v1025 = vadd.f32 %v1023, %v1024
  %v1026 = vsel %vm725, %v913, 0.0
  %v1027 = vadd.f32 %v1025, %v1026
  %v1028 = vsel %vm725, %v914, 0.0
  %v1029 = vadd.f32 %v1027, %v1028
  %v1030 = vsel %vm725, %v915, 0.0
  %v1031 = vadd.f32 %v1029, %v1030
  %v1032 = vsel %vm725, %v916, 0.0
  %v1033 = vadd.f32 %v1031, %v1032
  %v1034 = vsel %vm725, %v917, 0.0
  %v1035 = vadd.f32 %v1033, %v1034
  %v1036 = vsel %vm725, %v918, 0.0
  %v1037 = vadd.f32 %v1035, %v1036
  %v1038 = vsel %vm725, %v919, 0.0
  %v1039 = vadd.f32 %v1037, %v1038
  %v1040 = vsel %vm725, %v920, 0.0
  %v1041 = vadd.f32 %v1039, %v1040
  %v1042 = vsel %vm725, %v921, 0.0
  %v1043 = vadd.f32 %v1041, %v1042
  %v1044 = vsel %vm725, %v922, 0.0
  %v1045 = vadd.f32 %v1043, %v1044
  %v1046 = vsel %vm725, %v923, 0.0
  %v1047 = vadd.f32 %v1045, %v1046
  %v1048 = vsel %vm725, %v924, 0.0
  %v1049 = vadd.f32 %v1047, %v1048
  %v1050 = vsel %vm725, %v925, 0.0
  %v1051 = vadd.f32 %v1049, %v1050
  %v1052 = vsel %vm725, %v926, 0.0
  %v1053 = vadd.f32 %v1051, %v1052
  %v1054 = vrot.slane %v1053, 4
  %v1055 = vadd.f32 %v1053, %v1054
  %v1056 = vrot.slane %v1055, 2
  %v1057 = vadd.f32 %v1055, %v1056
  %v1058 = vrot.slane %v1057, 1
  %v1059 = vadd.f32 %v1057, %v1058
  %v1060 = vadd.f32 %v862, %v1059
  %1061 = vst.msk [vmem:[%s6] sm:$0x1] %vm860, %v1060
  // Predicated region
  $region22: #{dense_block_forward.4} parent=0 // pred_check
    _
  $region23: #{dense_block_forward.4} parent=0 // pred_check_branch
    %1063 = sbr.rel (0) target = $region25
  $region24: #{dense_block_forward.4} parent=0 // pred_region
    _
  $region25: #{dense_block_forward.4} parent=0 // pred_fallthru
    _
  // Predicated region
  $region26: #{dense_block_forward.4} parent=0 // pred_check
    _
  $region27: #{dense_block_forward.4} parent=0 // pred_check_branch
    %1065 = sbr.rel (0) target = $region29
  $region28: #{dense_block_forward.4} parent=0 // pred_region
    _
  $region29: #{dense_block_forward.4} parent=0 // pred_fallthru
    _
  // Predicated region
  $region30: #{dense_block_forward.4} parent=0 // pred_check
    _
  $region31: #{dense_block_forward.4} parent=0 // pred_check_branch
    %1067 = sbr.rel (0) target = $region33
  $region32: #{dense_block_forward.4} parent=0 // pred_region
    _
  $region33: #{dense_block_forward.4} parent=0 // pred_fallthru
    _
  // Predicated region
  $region34: #{dense_block_forward.4} parent=0 // pred_check
    _
  $region35: #{dense_block_forward.4} parent=0 // pred_check_branch
    %1069 = sbr.rel (0) target = $region37
  $region36: #{dense_block_forward.4} parent=0 // pred_region
    _
  $region37: #{dense_block_forward.4} parent=0 // pred_fallthru
    _
  // Predicated region
  $region38: #{dense_block_forward.4} parent=0 // pred_check
    _
  $region39: #{dense_block_forward.4} parent=0 // pred_check_branch
    %1071 = sbr.rel (0) target = $region41
  $region40: #{dense_block_forward.4} parent=0 // pred_region
    _
  $region41: #{dense_block_forward.4} parent=0 // pred_fallthru
    _
  // Predicated region
  $region42: #{dense_block_forward.4} parent=0 // pred_check
    _
  $region43: #{dense_block_forward.4} parent=0 // pred_check_branch
    %1073 = sbr.rel (0) target = $region45
  $region44: #{dense_block_forward.4} parent=0 // pred_region
    _
  $region45: #{dense_block_forward.4} parent=0 // pred_fallthru
    _

// kernel: dense_block_forward.5
$region0: #{dense_block_forward.5}
  #allocation0 [shape = 'u32[]', space=smem, size = 0x4, offset = 0x4, fixed_abs, tag = 'smem constant byte address 0x4 - core index']
  #allocation1 [shape = 'u32[72,128]{1,0:T(1,128)}', space=vmem, size = 0x9000, scoped, tag = 'internal scratch']
  %s0 = inlined_call_operand.vmem [shape: f32[2,256,4], index: 0, kind: input, shape index: {}]
  %s1 = inlined_call_operand.vmem [shape: bf16[2,256,32], index: 1, kind: input, shape index: {}]
  %s2 = inlined_call_operand.vmem [shape: f32[1,32], index: 2, kind: input, shape index: {}]
  %s3 = inlined_call_operand.vmem [shape: f32[1,32], index: 3, kind: input, shape index: {}]
  %s4 = inlined_call_operand.vmem [shape: bf16[32,72], index: 4, kind: input, shape index: {}]
  %s5 = inlined_call_operand.vmem [shape: f32[2,256,12], index: 5, kind: output, shape index: {}]
  %s6 = sld [smem:[#allocation0]]
  $region53: #{dense_block_forward.5} parent=0
    _
  %s8 = ssub.s32 1, %s6
  %s9 = scalar_select 0, %s8, %s6
  loop: start=0, step=1, limit=4
  $region2: #{dense_block_forward.5} parent=0 // loop_pre_header
    _
  $region3: #{dense_block_forward.5} parent=0 // loop_header
    %s11 = sphi 0, %s15
    %p12 = scmp.ge.s32.totalorder %s11, 4
    %s21 = sphi 0, %s23
    %s24 = sphi 0, %s21
    %s25 = sphi 0, %s24
    %s41 = sphi 0, %s25
    %s47 = sphi 0, %s49
    %s50 = sphi 0, %s47
    %s51 = sphi 0, %s50
    %s67 = sphi 0, %s51
    %s71 = sphi 0, %s71
    %s73 = sphi 0, %s71
    %s74 = sphi 0, %s73
    %s88 = sphi 0, %s74
    %s92 = sphi 0, %s92
    %s94 = sphi 0, %s92
    %s95 = sphi 0, %s94
    %s109 = sphi 0, %s95
    %s113 = sphi 0, %s113
    %s115 = sphi 0, %s113
    %s116 = sphi 0, %s115
    %s130 = sphi 0, %s116
    %s136 = sphi 0, %s138
    %s139 = sphi 0, %s136
    %s140 = sphi 0, %s139
    %s156 = sphi 0, %s140
  $region4: #{dense_block_forward.5} parent=0 // loop_header_branch
    %14 = sbr.rel (%p12) target = $region8
  $region5: #{dense_block_forward.5} parent=0 // loop_body
    %s16 = ssub.s32 %s11, 1
    %s17 = ssub.s32 %s11, 2
    %s18 = sadd.s32 %s11, 1
    %s19 = ssub.s32 %s11, %s18
    %p20 = scmp.eq.s32.totalorder %s19, 0
    %s22 = sadd.s32 %s21, 1
    %s23 = scalar_select %p20, %s21, %s22
    %p26 = pneg %p20
    %p27 = scmp.eq.s32.totalorder %s11, 1
    %p28 = por %p26, %p27
    %p29 = scmp.ne.s32.totalorder %s21, %s24
    %p30 = scmp.eq.s32.totalorder %s11, 0
    %p31 = por %p29, %p30
    %p32 = scmp.ne.s32.totalorder %s21, %s24
    %p33 = scmp.eq.s32.totalorder %s16, 1
    %p34 = por %p32, %p33
    %p35 = scmp.ne.s32.totalorder %s24, %s25
    %p36 = scmp.eq.s32.totalorder %s16, 0
    %p37 = por %p35, %p36
    %p38 = scmp.ne.s32.totalorder %s24, %s25
    %p39 = scmp.eq.s32.totalorder %s17, 1
    %p40 = por %p38, %p39
    %p42 = scmp.ne.s32.totalorder %s25, %s41
    %p43 = scmp.eq.s32.totalorder %s17, 0
    %p44 = por %p42, %p43
    %s45 = ssub.s32 %s11, %s18
    %p46 = scmp.eq.s32.totalorder %s45, 0
    %s48 = sadd.s32 %s47, 1
    %s49 = scalar_select %p46, %s47, %s48
    %p52 = pneg %p46
    %p53 = scmp.eq.s32.totalorder %s11, 1
    %p54 = por %p52, %p53
    %p55 = scmp.ne.s32.totalorder %s47, %s50
    %p56 = scmp.eq.s32.totalorder %s11, 0
    %p57 = por %p55, %p56
    %p58 = scmp.ne.s32.totalorder %s47, %s50
    %p59 = scmp.eq.s32.totalorder %s16, 1
    %p60 = por %p58, %p59
    %p61 = scmp.ne.s32.totalorder %s50, %s51
    %p62 = scmp.eq.s32.totalorder %s16, 0
    %p63 = por %p61, %p62
    %p64 = scmp.ne.s32.totalorder %s50, %s51
    %p65 = scmp.eq.s32.totalorder %s17, 1
    %p66 = por %p64, %p65
    %p68 = scmp.ne.s32.totalorder %s51, %s67
    %p69 = scmp.eq.s32.totalorder %s17, 0
    %p70 = por %p68, %p69
    %s72 = sadd.s32 %s71, 1
    %p75 = scmp.eq.s32.totalorder %s11, 1
    %p76 = scmp.ne.s32.totalorder %s71, %s73
    %p77 = scmp.eq.s32.totalorder %s11, 0
    %p78 = por %p76, %p77
    %p79 = scmp.ne.s32.totalorder %s71, %s73
    %p80 = scmp.eq.s32.totalorder %s16, 1
    %p81 = por %p79, %p80
    %p82 = scmp.ne.s32.totalorder %s73, %s74
    %p83 = scmp.eq.s32.totalorder %s16, 0
    %p84 = por %p82, %p83
    %p85 = scmp.ne.s32.totalorder %s73, %s74
    %p86 = scmp.eq.s32.totalorder %s17, 1
    %p87 = por %p85, %p86
    %p89 = scmp.ne.s32.totalorder %s74, %s88
    %p90 = scmp.eq.s32.totalorder %s17, 0
    %p91 = por %p89, %p90
    %s93 = sadd.s32 %s92, 1
    %p96 = scmp.eq.s32.totalorder %s11, 1
    %p97 = scmp.ne.s32.totalorder %s92, %s94
    %p98 = scmp.eq.s32.totalorder %s11, 0
    %p99 = por %p97, %p98
    %p100 = scmp.ne.s32.totalorder %s92, %s94
    %p101 = scmp.eq.s32.totalorder %s16, 1
    %p102 = por %p100, %p101
    %p103 = scmp.ne.s32.totalorder %s94, %s95
    %p104 = scmp.eq.s32.totalorder %s16, 0
    %p105 = por %p103, %p104
    %p106 = scmp.ne.s32.totalorder %s94, %s95
    %p107 = scmp.eq.s32.totalorder %s17, 1
    %p108 = por %p106, %p107
    %p110 = scmp.ne.s32.totalorder %s95, %s109
    %p111 = scmp.eq.s32.totalorder %s17, 0
    %p112 = por %p110, %p111
    %s114 = sadd.s32 %s113, 1
    %p117 = scmp.eq.s32.totalorder %s11, 1
    %p118 = scmp.ne.s32.totalorder %s113, %s115
    %p119 = scmp.eq.s32.totalorder %s11, 0
    %p120 = por %p118, %p119
    %p121 = scmp.ne.s32.totalorder %s113, %s115
    %p122 = scmp.eq.s32.totalorder %s16, 1
    %p123 = por %p121, %p122
    %p124 = scmp.ne.s32.totalorder %s115, %s116
    %p125 = scmp.eq.s32.totalorder %s16, 0
    %p126 = por %p124, %p125
    %p127 = scmp.ne.s32.totalorder %s115, %s116
    %p128 = scmp.eq.s32.totalorder %s17, 1
    %p129 = por %p127, %p128
    %p131 = scmp.ne.s32.totalorder %s116, %s130
    %p132 = scmp.eq.s32.totalorder %s17, 0
    %p133 = por %p131, %p132
    %s134 = ssub.s32 %s11, %s18
    %p135 = scmp.eq.s32.totalorder %s134, 0
    %s137 = sadd.s32 %s136, 1
    %s138 = scalar_select %p135, %s136, %s137
    %p141 = pneg %p135
    %p142 = scmp.eq.s32.totalorder %s11, 1
    %p143 = por %p141, %p142
    %p144 = scmp.ne.s32.totalorder %s136, %s139
    %p145 = scmp.eq.s32.totalorder %s11, 0
    %p146 = por %p144, %p145
    %p147 = scmp.ne.s32.totalorder %s136, %s139
    %p148 = scmp.eq.s32.totalorder %s16, 1
    %p149 = por %p147, %p148
    %p150 = scmp.ne.s32.totalorder %s139, %s140
    %p151 = scmp.eq.s32.totalorder %s16, 0
    %p152 = por %p150, %p151
    %p153 = scmp.ne.s32.totalorder %s139, %s140
    %p154 = scmp.eq.s32.totalorder %s17, 1
    %p155 = por %p153, %p154
    %p157 = scmp.ne.s32.totalorder %s140, %s156
    %p158 = scmp.eq.s32.totalorder %s17, 0
    %p159 = por %p157, %p158
    %p160 = scmp.le.s32.totalorder 1, %s11
    %p161 = scmp.lt.s32.totalorder %s11, 3
    %p162 = pnand %p160, %p161
    %p163 = pneg %p162
    // Predicated region
    $region9: #{dense_block_forward.5} parent=5 // pred_check
      _
    $region10: #{dense_block_forward.5} parent=5 // pred_check_branch
      %165 = sbr.rel (%p162) target = $region12
    $region11: #{dense_block_forward.5} parent=5 // pred_region
      %s166 = ssub.s32 %s11, 1
      // Predicated region
      $region13: #{dense_block_forward.5} parent=11 // pred_check
        %p167 = pneg %p84
      $region14: #{dense_block_forward.5} parent=11 // pred_check_branch
        %169 = sbr.rel (%p167) target = $region16
      $region15: #{dense_block_forward.5} parent=11 // pred_region
        _
      $region16: #{dense_block_forward.5} parent=11 // pred_fallthru
        _
      // Predicated region
      $region17: #{dense_block_forward.5} parent=11 // pred_check
        %p170 = pneg %p105
      $region18: #{dense_block_forward.5} parent=11 // pred_check_branch
        %172 = sbr.rel (%p170) target = $region20
      $region19: #{dense_block_forward.5} parent=11 // pred_region
        _
      $region20: #{dense_block_forward.5} parent=11 // pred_fallthru
        _
      // Predicated region
      $region21: #{dense_block_forward.5} parent=11 // pred_check
        %p173 = pneg %p126
      $region22: #{dense_block_forward.5} parent=11 // pred_check_branch
        %175 = sbr.rel (%p173) target = $region24
      $region23: #{dense_block_forward.5} parent=11 // pred_region
        _
      $region24: #{dense_block_forward.5} parent=11 // pred_fallthru
        _
    $region12: #{dense_block_forward.5} parent=5 // pred_fallthru
      _
    %p176 = scmp.lt.s32.totalorder %s11, 2
    // Predicated region
    $region25: #{dense_block_forward.5} parent=5 // pred_check
      %p177 = pneg %p176
    $region26: #{dense_block_forward.5} parent=5 // pred_check_branch
      %179 = sbr.rel (%p177) target = $region28
    $region27: #{dense_block_forward.5} parent=5 // pred_region
      // Predicated region
      $region29: #{dense_block_forward.5} parent=27 // pred_check
        %p180 = pneg %p31
      $region30: #{dense_block_forward.5} parent=27 // pred_check_branch
        %182 = sbr.rel (%p180) target = $region32
      $region31: #{dense_block_forward.5} parent=27 // pred_region
        %p183 = scmp.lt.s32.totalorder %s11, 1
        %s184 = scalar_select %p183, %s11, 1
        %s185 = smul.addr %s184, 32
        %s186 = smul.addr %s185, 8
        %s187 = scalar_lea.vmem %s0, %s186
      $region32: #{dense_block_forward.5} parent=27 // pred_fallthru
        _
      // Predicated region
      $region33: #{dense_block_forward.5} parent=27 // pred_check
        %p188 = pneg %p57
      $region34: #{dense_block_forward.5} parent=27 // pred_check_branch
        %190 = sbr.rel (%p188) target = $region36
      $region35: #{dense_block_forward.5} parent=27 // pred_region
        %p191 = scmp.lt.s32.totalorder %s11, 1
        %s192 = scalar_select %p191, %s11, 1
        %s193 = smul.addr %s192, 32
        %s194 = smul.addr %s193, 4
        %s195 = scalar_lea.vmem %s1, %s194
      $region36: #{dense_block_forward.5} parent=27 // pred_fallthru
        _
    $region28: #{dense_block_forward.5} parent=5 // pred_fallthru
      _
    %p196 = scmp.le.s32.totalorder 1, %s11
    %p197 = scmp.lt.s32.totalorder %s11, 3
    %p198 = pnand %p196, %p197
    %p199 = pneg %p198
    // Predicated region
    $region37: #{dense_block_forward.5} parent=5 // pred_check
      _
    $region38: #{dense_block_forward.5} parent=5 // pred_check_branch
      %201 = sbr.rel (%p198) target = $region40
    $region39: #{dense_block_forward.5} parent=5 // pred_region
      %s202 = ssub.s32 %s11, 1
      %p203 = scmp.lt.s32.totalorder %s16, 1
      %s204 = scalar_select %p203, %s16, 1
      %s205 = smul.addr %s204, 32
      %s206 = smul.addr %s205, 8
      %s207 = scalar_lea.vmem %s0, %s206
      %p208 = pneg %p37
      %p209 = pneg %p34
      %p210 = scmp.lt.s32.totalorder %s16, 1
      %s211 = scalar_select %p210, %s16, 1
      %s212 = smul.addr %s211, 32
      %s213 = smul.addr %s212, 4
      %s214 = scalar_lea.vmem %s1, %s213
      %p215 = pneg %p63
      %p216 = pneg %p60
      %p217 = pneg %p84
      %p218 = pneg %p81
      %p219 = pneg %p105
      %p220 = pneg %p102
      %p221 = pneg %p126
      %p222 = pneg %p123
      %p223 = pneg %p152
      %p224 = pneg %p149
      %p225 = scmp.lt.s32.totalorder %s16, 1
      %s226 = scalar_select %p225, %s16, 1
      %s227 = smul.addr %s226, 32
      %s228 = smul.addr %s227, 8
      %s229 = scalar_lea.vmem %s5, %s228
      %p230 = scmp.lt.s32.totalorder %s16, 1
      %s231 = scalar_select %p230, %s16, 1
      %s232 = smul.addr %s231, 32
      %s233 = smul.addr %s232, 8
      %s234 = scalar_lea.vmem %s0, %s233
      %p235 = scmp.lt.s32.totalorder %s16, 1
      %s236 = scalar_select %p235, %s16, 1
      %s237 = smul.addr %s236, 32
      %s238 = smul.addr %s237, 4
      %s239 = scalar_lea.vmem %s1, %s238
      %p240 = scmp.lt.s32.totalorder %s16, 1
      %s241 = scalar_select %p240, %s16, 1
      %s242 = smul.addr %s241, 32
      %s243 = smul.addr %s242, 8
      %s244 = scalar_lea.vmem %s5, %s243
      %v246 = vld [vmem:[%s234] sm:$0xff]
      %v247 = vld [vmem:[%s234 + $0x8] sm:$0xff]
      %v248 = vld [vmem:[%s234 + $0x10] sm:$0xff]
      %v249 = vld [vmem:[%s234 + $0x18] sm:$0xff]
      %v250 = vld [vmem:[%s234 + $0x20] sm:$0xff]
      %v251 = vld [vmem:[%s234 + $0x28] sm:$0xff]
      %v252 = vld [vmem:[%s234 + $0x30] sm:$0xff]
      %v253 = vld [vmem:[%s234 + $0x38] sm:$0xff]
      %v254 = vld [vmem:[%s234 + $0x40] sm:$0xff]
      %v255 = vld [vmem:[%s234 + $0x48] sm:$0xff]
      %v256 = vld [vmem:[%s234 + $0x50] sm:$0xff]
      %v257 = vld [vmem:[%s234 + $0x58] sm:$0xff]
      %v258 = vld [vmem:[%s234 + $0x60] sm:$0xff]
      %v259 = vld [vmem:[%s234 + $0x68] sm:$0xff]
      %v260 = vld [vmem:[%s234 + $0x70] sm:$0xff]
      %v261 = vld [vmem:[%s234 + $0x78] sm:$0xff]
      %v262 = vld [vmem:[%s234 + $0x80] sm:$0xff]
      %v263 = vld [vmem:[%s234 + $0x88] sm:$0xff]
      %v264 = vld [vmem:[%s234 + $0x90] sm:$0xff]
      %v265 = vld [vmem:[%s234 + $0x98] sm:$0xff]
      %v266 = vld [vmem:[%s234 + $0xa0] sm:$0xff]
      %v267 = vld [vmem:[%s234 + $0xa8] sm:$0xff]
      %v268 = vld [vmem:[%s234 + $0xb0] sm:$0xff]
      %v269 = vld [vmem:[%s234 + $0xb8] sm:$0xff]
      %v270 = vld [vmem:[%s234 + $0xc0] sm:$0xff]
      %v271 = vld [vmem:[%s234 + $0xc8] sm:$0xff]
      %v272 = vld [vmem:[%s234 + $0xd0] sm:$0xff]
      %v273 = vld [vmem:[%s234 + $0xd8] sm:$0xff]
      %v274 = vld [vmem:[%s234 + $0xe0] sm:$0xff]
      %v275 = vld [vmem:[%s234 + $0xe8] sm:$0xff]
      %v276 = vld [vmem:[%s234 + $0xf0] sm:$0xff]
      %v277 = vld [vmem:[%s234 + $0xf8] sm:$0xff]
      %vm278 = vcmask 31744
      %279 = vst.msk [vmem:[%s244] sm:$0xff] %vm278, %v246
      %280 = vst.msk [vmem:[%s244 + $0x8] sm:$0xff] %vm278, %v247
      %281 = vst.msk [vmem:[%s244 + $0x10] sm:$0xff] %vm278, %v248
      %282 = vst.msk [vmem:[%s244 + $0x18] sm:$0xff] %vm278, %v249
      %283 = vst.msk [vmem:[%s244 + $0x20] sm:$0xff] %vm278, %v250
      %284 = vst.msk [vmem:[%s244 + $0x28] sm:$0xff] %vm278, %v251
      %285 = vst.msk [vmem:[%s244 + $0x30] sm:$0xff] %vm278, %v252
      %286 = vst.msk [vmem:[%s244 + $0x38] sm:$0xff] %vm278, %v253
      %287 = vst.msk [vmem:[%s244 + $0x40] sm:$0xff] %vm278, %v254
      %288 = vst.msk [vmem:[%s244 + $0x48] sm:$0xff] %vm278, %v255
      %289 = vst.msk [vmem:[%s244 + $0x50] sm:$0xff] %vm278, %v256
      %290 = vst.msk [vmem:[%s244 + $0x58] sm:$0xff] %vm278, %v257
      %291 = vst.msk [vmem:[%s244 + $0x60] sm:$0xff] %vm278, %v258
      %292 = vst.msk [vmem:[%s244 + $0x68] sm:$0xff] %vm278, %v259
      %293 = vst.msk [vmem:[%s244 + $0x70] sm:$0xff] %vm278, %v260
      %294 = vst.msk [vmem:[%s244 + $0x78] sm:$0xff] %vm278, %v261
      %295 = vst.msk [vmem:[%s244 + $0x80] sm:$0xff] %vm278, %v262
      %296 = vst.msk [vmem:[%s244 + $0x88] sm:$0xff] %vm278, %v263
      %297 = vst.msk [vmem:[%s244 + $0x90] sm:$0xff] %vm278, %v264
      %298 = vst.msk [vmem:[%s244 + $0x98] sm:$0xff] %vm278, %v265
      %299 = vst.msk [vmem:[%s244 + $0xa0] sm:$0xff] %vm278, %v266
      %300 = vst.msk [vmem:[%s244 + $0xa8] sm:$0xff] %vm278, %v267
      %301 = vst.msk [vmem:[%s244 + $0xb0] sm:$0xff] %vm278, %v268
      %302 = vst.msk [vmem:[%s244 + $0xb8] sm:$0xff] %vm278, %v269
      %303 = vst.msk [vmem:[%s244 + $0xc0] sm:$0xff] %vm278, %v270
      %304 = vst.msk [vmem:[%s244 + $0xc8] sm:$0xff] %vm278, %v271
      %305 = vst.msk [vmem:[%s244 + $0xd0] sm:$0xff] %vm278, %v272
      %306 = vst.msk [vmem:[%s244 + $0xd8] sm:$0xff] %vm278, %v273
      %307 = vst.msk [vmem:[%s244 + $0xe0] sm:$0xff] %vm278, %v274
      %308 = vst.msk [vmem:[%s244 + $0xe8] sm:$0xff] %vm278, %v275
      %309 = vst.msk [vmem:[%s244 + $0xf0] sm:$0xff] %vm278, %v276
      %310 = vst.msk [vmem:[%s244 + $0xf8] sm:$0xff] %vm278, %v277
      %v311 = vld [vmem:[%s239] sm:$0xf]
      %v312 = vld [vmem:[%s239 + $0x4] sm:$0xf]
      %v313 = vld [vmem:[%s239 + $0x8] sm:$0xf]
      %v314 = vld [vmem:[%s239 + $0xc] sm:$0xf]
      %v315 = vld [vmem:[%s239 + $0x10] sm:$0xf]
      %v316 = vld [vmem:[%s239 + $0x14] sm:$0xf]
      %v317 = vld [vmem:[%s239 + $0x18] sm:$0xf]
      %v318 = vld [vmem:[%s239 + $0x1c] sm:$0xf]
      %v319 = vld [vmem:[%s239 + $0x20] sm:$0xf]
      %v320 = vld [vmem:[%s239 + $0x24] sm:$0xf]
      %v321 = vld [vmem:[%s239 + $0x28] sm:$0xf]
      %v322 = vld [vmem:[%s239 + $0x2c] sm:$0xf]
      %v323 = vld [vmem:[%s239 + $0x30] sm:$0xf]
      %v324 = vld [vmem:[%s239 + $0x34] sm:$0xf]
      %v325 = vld [vmem:[%s239 + $0x38] sm:$0xf]
      %v326 = vld [vmem:[%s239 + $0x3c] sm:$0xf]
      %v327 = vld [vmem:[%s239 + $0x40] sm:$0xf]
      %v328 = vld [vmem:[%s239 + $0x44] sm:$0xf]
      %v329 = vld [vmem:[%s239 + $0x48] sm:$0xf]
      %v330 = vld [vmem:[%s239 + $0x4c] sm:$0xf]
      %v331 = vld [vmem:[%s239 + $0x50] sm:$0xf]
      %v332 = vld [vmem:[%s239 + $0x54] sm:$0xf]
      %v333 = vld [vmem:[%s239 + $0x58] sm:$0xf]
      %v334 = vld [vmem:[%s239 + $0x5c] sm:$0xf]
      %v335 = vld [vmem:[%s239 + $0x60] sm:$0xf]
      %v336 = vld [vmem:[%s239 + $0x64] sm:$0xf]
      %v337 = vld [vmem:[%s239 + $0x68] sm:$0xf]
      %v338 = vld [vmem:[%s239 + $0x6c] sm:$0xf]
      %v339 = vld [vmem:[%s239 + $0x70] sm:$0xf]
      %v340 = vld [vmem:[%s239 + $0x74] sm:$0xf]
      %v341 = vld [vmem:[%s239 + $0x78] sm:$0xf]
      %v342 = vld [vmem:[%s239 + $0x7c] sm:$0xf]
      %v343 = vunpack.c.l.bf16 %v311
      %v344 = vunpack.c.l.bf16 %v312
      %v345 = vunpack.c.l.bf16 %v313
      %v346 = vunpack.c.l.bf16 %v314
      %v347 = vunpack.c.l.bf16 %v315
      %v348 = vunpack.c.l.bf16 %v316
      %v349 = vunpack.c.l.bf16 %v317
      %v350 = vunpack.c.l.bf16 %v318
      %v351 = vunpack.c.l.bf16 %v319
      %v352 = vunpack.c.l.bf16 %v320
      %v353 = vunpack.c.l.bf16 %v321
      %v354 = vunpack.c.l.bf16 %v322
      %v355 = vunpack.c.l.bf16 %v323
      %v356 = vunpack.c.l.bf16 %v324
      %v357 = vunpack.c.l.bf16 %v325
      %v358 = vunpack.c.l.bf16 %v326
      %v359 = vunpack.c.l.bf16 %v327
      %v360 = vunpack.c.l.bf16 %v328
      %v361 = vunpack.c.l.bf16 %v329
      %v362 = vunpack.c.l.bf16 %v330
      %v363 = vunpack.c.l.bf16 %v331
      %v364 = vunpack.c.l.bf16 %v332
      %v365 = vunpack.c.l.bf16 %v333
      %v366 = vunpack.c.l.bf16 %v334
      %v367 = vunpack.c.l.bf16 %v335
      %v368 = vunpack.c.l.bf16 %v336
      %v369 = vunpack.c.l.bf16 %v337
      %v370 = vunpack.c.l.bf16 %v338
      %v371 = vunpack.c.l.bf16 %v339
      %v372 = vunpack.c.l.bf16 %v340
      %v373 = vunpack.c.l.bf16 %v341
      %v374 = vunpack.c.l.bf16 %v342
      %v375 = vld [vmem:[%s2] sm:$0x1]
      %v377 = vperm.slane %v375, 0
      %v379 = vmul.f32 %v343, %v377
      %v380 = vmul.f32 %v344, %v377
      %v381 = vmul.f32 %v345, %v377
      %v382 = vmul.f32 %v346, %v377
      %v383 = vmul.f32 %v347, %v377
      %v384 = vmul.f32 %v348, %v377
      %v385 = vmul.f32 %v349, %v377
      %v386 = vmul.f32 %v350, %v377
      %v387 = vmul.f32 %v351, %v377
      %v388 = vmul.f32 %v352, %v377
      %v389 = vmul.f32 %v353, %v377
      %v390 = vmul.f32 %v354, %v377
      %v391 = vmul.f32 %v355, %v377
      %v392 = vmul.f32 %v356, %v377
      %v393 = vmul.f32 %v357, %v377
      %v394 = vmul.f32 %v358, %v377
      %v395 = vmul.f32 %v359, %v377
      %v396 = vmul.f32 %v360, %v377
      %v397 = vmul.f32 %v361, %v377
      %v398 = vmul.f32 %v362, %v377
      %v399 = vmul.f32 %v363, %v377
      %v400 = vmul.f32 %v364, %v377
      %v401 = vmul.f32 %v365, %v377
      %v402 = vmul.f32 %v366, %v377
      %v403 = vmul.f32 %v367, %v377
      %v404 = vmul.f32 %v368, %v377
      %v405 = vmul.f32 %v369, %v377
      %v406 = vmul.f32 %v370, %v377
      %v407 = vmul.f32 %v371, %v377
      %v408 = vmul.f32 %v372, %v377
      %v409 = vmul.f32 %v373, %v377
      %v410 = vmul.f32 %v374, %v377
      %v411 = vld [vmem:[%s3] sm:$0x1]
      %v413 = vperm.slane %v411, 0
      %v415 = vadd.f32 %v379, %v413
      %v416 = vadd.f32 %v380, %v413
      %v417 = vadd.f32 %v381, %v413
      %v418 = vadd.f32 %v382, %v413
      %v419 = vadd.f32 %v383, %v413
      %v420 = vadd.f32 %v384, %v413
      %v421 = vadd.f32 %v385, %v413
      %v422 = vadd.f32 %v386, %v413
      %v423 = vadd.f32 %v387, %v413
      %v424 = vadd.f32 %v388, %v413
      %v425 = vadd.f32 %v389, %v413
      %v426 = vadd.f32 %v390, %v413
      %v427 = vadd.f32 %v391, %v413
      %v428 = vadd.f32 %v392, %v413
      %v429 = vadd.f32 %v393, %v413
      %v430 = vadd.f32 %v394, %v413
      %v431 = vadd.f32 %v395, %v413
      %v432 = vadd.f32 %v396, %v413
      %v433 = vadd.f32 %v397, %v413
      %v434 = vadd.f32 %v398, %v413
      %v435 = vadd.f32 %v399, %v413
      %v436 = vadd.f32 %v400, %v413
      %v437 = vadd.f32 %v401, %v413
      %v438 = vadd.f32 %v402, %v413
      %v439 = vadd.f32 %v403, %v413
      %v440 = vadd.f32 %v404, %v413
      %v441 = vadd.f32 %v405, %v413
      %v442 = vadd.f32 %v406, %v413
      %v443 = vadd.f32 %v407, %v413
      %v444 = vadd.f32 %v408, %v413
      %v445 = vadd.f32 %v409, %v413
      %v446 = vadd.f32 %v410, %v413
      %v447 = vmax.f32 %v415, 0.0
      %v448 = vmax.f32 %v416, 0.0
      %v449 = vmax.f32 %v417, 0.0
      %v450 = vmax.f32 %v418, 0.0
      %v451 = vmax.f32 %v419, 0.0
      %v452 = vmax.f32 %v420, 0.0
      %v453 = vmax.f32 %v421, 0.0
      %v454 = vmax.f32 %v422, 0.0
      %v455 = vmax.f32 %v423, 0.0
      %v456 = vmax.f32 %v424, 0.0
      %v457 = vmax.f32 %v425, 0.0
      %v458 = vmax.f32 %v426, 0.0
      %v459 = vmax.f32 %v427, 0.0
      %v460 = vmax.f32 %v428, 0.0
      %v461 = vmax.f32 %v429, 0.0
      %v462 = vmax.f32 %v430, 0.0
      %v463 = vmax.f32 %v431, 0.0
      %v464 = vmax.f32 %v432, 0.0
      %v465 = vmax.f32 %v433, 0.0
      %v466 = vmax.f32 %v434, 0.0
      %v467 = vmax.f32 %v435, 0.0
      %v468 = vmax.f32 %v436, 0.0
      %v469 = vmax.f32 %v437, 0.0
      %v470 = vmax.f32 %v438, 0.0
      %v471 = vmax.f32 %v439, 0.0
      %v472 = vmax.f32 %v440, 0.0
      %v473 = vmax.f32 %v441, 0.0
      %v474 = vmax.f32 %v442, 0.0
      %v475 = vmax.f32 %v443, 0.0
      %v476 = vmax.f32 %v444, 0.0
      %v477 = vmax.f32 %v445, 0.0
      %v478 = vmax.f32 %v446, 0.0
      %v479 = vpack.c.bf16 %v448, %v447
      %v480 = vpack.c.bf16 %v450, %v449
      %v481 = vpack.c.bf16 %v452, %v451
      %v482 = vpack.c.bf16 %v454, %v453
      %v483 = vpack.c.bf16 %v456, %v455
      %v484 = vpack.c.bf16 %v458, %v457
      %v485 = vpack.c.bf16 %v460, %v459
      %v486 = vpack.c.bf16 %v462, %v461
      %v487 = vpack.c.bf16 %v464, %v463
      %v488 = vpack.c.bf16 %v466, %v465
      %v489 = vpack.c.bf16 %v468, %v467
      %v490 = vpack.c.bf16 %v470, %v469
      %v491 = vpack.c.bf16 %v472, %v471
      %v492 = vpack.c.bf16 %v474, %v473
      %v493 = vpack.c.bf16 %v476, %v475
      %v494 = vpack.c.bf16 %v478, %v477
      %v495 = vld [vmem:[%s4] sm:$0xf]
      %v496 = vld [vmem:[%s4 + $0x4] sm:$0xf]
      %v497 = vld [vmem:[%s4 + $0x8] sm:$0xf]
      %v498 = vld [vmem:[%s4 + $0xc] sm:$0xf]
      %v503 = vunpack.c.l.b16 %v495
      %v504 = vunpack.c.l.b16 %v496
      %v505 = vunpack.c.l.b16 %v497
      %v506 = vunpack.c.l.b16 %v498
      %v507 = vpack.c.b16 %v504, %v503
      %v508 = vpack.c.b16 %v506, %v505
      %vm511 = vcmask 261120
      %v513 = vsel %vm511, %v479, 0
      %v516 = vsel %vm511, %v480, 0
      %v519 = vsel %vm511, %v481, 0
      %v522 = vsel %vm511, %v482, 0
      %v525 = vsel %vm511, %v483, 0
      %v528 = vsel %vm511, %v484, 0
      %v531 = vsel %vm511, %v485, 0
      %v534 = vsel %vm511, %v486, 0
      %v537 = vsel %vm511, %v487, 0
      %v540 = vsel %vm511, %v488, 0
      %v543 = vsel %vm511, %v489, 0
      %v546 = vsel %vm511, %v490, 0
      %v549 = vsel %vm511, %v491, 0
      %v552 = vsel %vm511, %v492, 0
      %v555 = vsel %vm511, %v493, 0
      %v558 = vsel %vm511, %v494, 0
      %560 = vmatpush.bf16.msra.mxu0 0
      %561 = vmatpush.bf16.msra.mxu0 0
      %562 = vmatpush.bf16.msra.mxu0 0
      %563 = vmatpush.bf16.msra.mxu0 0
      %564 = vmatpush.bf16.msra.mxu0 0
      %565 = vmatpush.bf16.msra.mxu0 0
      %566 = vmatpush.bf16.msra.mxu0 %v508
      %567 = vmatpush.bf16.msra.mxu0 %v507
      %568 = vmatmul.bf16.gmra.mxu0 %v513
      %v569 = vpop.f32.mrf.mxu0
      %v570 = vadd.f32 0.0, %v569
      %v571 = vpop.f32.mrf.mxu0
      %v572 = vadd.f32 0.0, %v571
      %573 = vmatmul.bf16.gmra.mxu0 %v516
      %v574 = vpop.f32.mrf.mxu0
      %v575 = vadd.f32 0.0, %v574
      %v576 = vpop.f32.mrf.mxu0
      %v577 = vadd.f32 0.0, %v576
      %578 = vmatmul.bf16.gmra.mxu0 %v519
      %v579 = vpop.f32.mrf.mxu0
      %v580 = vadd.f32 0.0, %v579
      %v581 = vpop.f32.mrf.mxu0
      %v582 = vadd.f32 0.0, %v581
      %583 = vmatmul.bf16.gmra.mxu0 %v522
      %v584 = vpop.f32.mrf.mxu0
      %v585 = vadd.f32 0.0, %v584
      %v586 = vpop.f32.mrf.mxu0
      %v587 = vadd.f32 0.0, %v586
      %588 = vmatmul.bf16.gmra.mxu0 %v525
      %v589 = vpop.f32.mrf.mxu0
      %v590 = vadd.f32 0.0, %v589
      %v591 = vpop.f32.mrf.mxu0
      %v592 = vadd.f32 0.0, %v591
      %593 = vmatmul.bf16.gmra.mxu0 %v528
      %v594 = vpop.f32.mrf.mxu0
      %v595 = vadd.f32 0.0, %v594
      %v596 = vpop.f32.mrf.mxu0
      %v597 = vadd.f32 0.0, %v596
      %598 = vmatmul.bf16.gmra.mxu0 %v531
      %v599 = vpop.f32.mrf.mxu0
      %v600 = vadd.f32 0.0, %v599
      %v601 = vpop.f32.mrf.mxu0
      %v602 = vadd.f32 0.0, %v601
      %603 = vmatmul.bf16.gmra.mxu0 %v534
      %v604 = vpop.f32.mrf.mxu0
      %v605 = vadd.f32 0.0, %v604
      %v606 = vpop.f32.mrf.mxu0
      %v607 = vadd.f32 0.0, %v606
      %608 = vmatmul.bf16.gmra.mxu0 %v537
      %v609 = vpop.f32.mrf.mxu0
      %v610 = vadd.f32 0.0, %v609
      %v611 = vpop.f32.mrf.mxu0
      %v612 = vadd.f32 0.0, %v611
      %613 = vmatmul.bf16.gmra.mxu0 %v540
      %v614 = vpop.f32.mrf.mxu0
      %v615 = vadd.f32 0.0, %v614
      %v616 = vpop.f32.mrf.mxu0
      %v617 = vadd.f32 0.0, %v616
      %618 = vmatmul.bf16.gmra.mxu0 %v543
      %v619 = vpop.f32.mrf.mxu0
      %v620 = vadd.f32 0.0, %v619
      %v621 = vpop.f32.mrf.mxu0
      %v622 = vadd.f32 0.0, %v621
      %623 = vmatmul.bf16.gmra.mxu0 %v546
      %v624 = vpop.f32.mrf.mxu0
      %v625 = vadd.f32 0.0, %v624
      %v626 = vpop.f32.mrf.mxu0
      %v627 = vadd.f32 0.0, %v626
      %628 = vmatmul.bf16.gmra.mxu0 %v549
      %v629 = vpop.f32.mrf.mxu0
      %v630 = vadd.f32 0.0, %v629
      %v631 = vpop.f32.mrf.mxu0
      %v632 = vadd.f32 0.0, %v631
      %633 = vmatmul.bf16.gmra.mxu0 %v552
      %v634 = vpop.f32.mrf.mxu0
      %v635 = vadd.f32 0.0, %v634
      %v636 = vpop.f32.mrf.mxu0
      %v637 = vadd.f32 0.0, %v636
      %638 = vmatmul.bf16.gmra.mxu0 %v555
      %v639 = vpop.f32.mrf.mxu0
      %v640 = vadd.f32 0.0, %v639
      %v641 = vpop.f32.mrf.mxu0
      %v642 = vadd.f32 0.0, %v641
      %643 = vmatmul.bf16.gmra.mxu0 %v558
      %v644 = vpop.f32.mrf.mxu0
      %v645 = vadd.f32 0.0, %v644
      %v646 = vpop.f32.mrf.mxu0
      %v647 = vadd.f32 0.0, %v646
      %648 = vdwg.mxu0
      %v649 = vlaneseq
      %v650 = vshrl.u32 %v649, 7
      %v651 = vadd.s32 %v650, 8
      %v652 = vadd.s32 %v650, 16
      %v653 = vadd.s32 %v650, 24
      %v654 = vadd.s32 %v650, 32
      %v655 = vadd.s32 %v650, 40
      %v656 = vadd.s32 %v650, 48
      %v657 = vadd.s32 %v650, 56
      %v658 = vadd.s32 %v650, 64
      %v659 = vadd.s32 %v650, 72
      %v660 = vadd.s32 %v650, 80
      %v661 = vadd.s32 %v650, 88
      %v662 = vadd.s32 %v650, 96
      %v663 = vadd.s32 %v650, 104
      %v664 = vadd.s32 %v650, 112
      %v665 = vadd.s32 %v650, 120
      %v666 = vadd.s32 %v650, 128
      %v667 = vadd.s32 %v650, 136
      %v668 = vadd.s32 %v650, 144
      %v669 = vadd.s32 %v650, 152
      %v670 = vadd.s32 %v650, 160
      %v671 = vadd.s32 %v650, 168
      %v672 = vadd.s32 %v650, 176
      %v673 = vadd.s32 %v650, 184
      %v674 = vadd.s32 %v650, 192
      %v675 = vadd.s32 %v650, 200
      %v676 = vadd.s32 %v650, 208
      %v677 = vadd.s32 %v650, 216
      %v678 = vadd.s32 %v650, 224
      %v679 = vadd.s32 %v650, 232
      %v680 = vadd.s32 %v650, 240
      %v681 = vadd.s32 %v650, 248
      %v682 = vcvt.s32.f32 %v650
      %v683 = vcvt.s32.f32 %v651
      %v684 = vcvt.s32.f32 %v652
      %v685 = vcvt.s32.f32 %v653
      %v686 = vcvt.s32.f32 %v654
      %v687 = vcvt.s32.f32 %v655
      %v688 = vcvt.s32.f32 %v656
      %v689 = vcvt.s32.f32 %v657
      %v690 = vcvt.s32.f32 %v658
      %v691 = vcvt.s32.f32 %v659
      %v692 = vcvt.s32.f32 %v660
      %v693 = vcvt.s32.f32 %v661
      %v694 = vcvt.s32.f32 %v662
      %v695 = vcvt.s32.f32 %v663
      %v696 = vcvt.s32.f32 %v664
      %v697 = vcvt.s32.f32 %v665
      %v698 = vcvt.s32.f32 %v666
      %v699 = vcvt.s32.f32 %v667
      %v700 = vcvt.s32.f32 %v668
      %v701 = vcvt.s32.f32 %v669
      %v702 = vcvt.s32.f32 %v670
      %v703 = vcvt.s32.f32 %v671
      %v704 = vcvt.s32.f32 %v672
      %v705 = vcvt.s32.f32 %v673
      %v706 = vcvt.s32.f32 %v674
      %v707 = vcvt.s32.f32 %v675
      %v708 = vcvt.s32.f32 %v676
      %v709 = vcvt.s32.f32 %v677
      %v710 = vcvt.s32.f32 %v678
      %v711 = vcvt.s32.f32 %v679
      %v712 = vcvt.s32.f32 %v680
      %v713 = vcvt.s32.f32 %v681
      %v714 = vadd.f32 %v682, 0.5
      %v715 = vadd.f32 %v683, 0.5
      %v716 = vadd.f32 %v684, 0.5
      %v717 = vadd.f32 %v685, 0.5
      %v718 = vadd.f32 %v686, 0.5
      %v719 = vadd.f32 %v687, 0.5
      %v720 = vadd.f32 %v688, 0.5
      %v721 = vadd.f32 %v689, 0.5
      %v722 = vadd.f32 %v690, 0.5
      %v723 = vadd.f32 %v691, 0.5
      %v724 = vadd.f32 %v692, 0.5
      %v725 = vadd.f32 %v693, 0.5
      %v726 = vadd.f32 %v694, 0.5
      %v727 = vadd.f32 %v695, 0.5
      %v728 = vadd.f32 %v696, 0.5
      %v729 = vadd.f32 %v697, 0.5
      %v730 = vadd.f32 %v698, 0.5
      %v731 = vadd.f32 %v699, 0.5
      %v732 = vadd.f32 %v700, 0.5
      %v733 = vadd.f32 %v701, 0.5
      %v734 = vadd.f32 %v702, 0.5
      %v735 = vadd.f32 %v703, 0.5
      %v736 = vadd.f32 %v704, 0.5
      %v737 = vadd.f32 %v705, 0.5
      %v738 = vadd.f32 %v706, 0.5
      %v739 = vadd.f32 %v707, 0.5
      %v740 = vadd.f32 %v708, 0.5
      %v741 = vadd.f32 %v709, 0.5
      %v742 = vadd.f32 %v710, 0.5
      %v743 = vadd.f32 %v711, 0.5
      %v744 = vadd.f32 %v712, 0.5
      %v745 = vadd.f32 %v713, 0.5
      %v746 = vrcp.pop 16.0
      %v747 = vmul.f32 16.0, %v746
      %v748 = vsub.f32 1.0, %v747
      %v749 = vmul.f32 %v746, %v748
      %v750 = vadd.f32 %v746, %v749
      %vm751 = vweird.f32 %v746
      %v752 = vsel %vm751, %v746, %v750
      %v753 = vmul.f32 %v714, %v752
      %v754 = vmul.f32 %v715, %v752
      %v755 = vmul.f32 %v716, %v752
      %v756 = vmul.f32 %v717, %v752
      %v757 = vmul.f32 %v718, %v752
      %v758 = vmul.f32 %v719, %v752
      %v759 = vmul.f32 %v720, %v752
      %v760 = vmul.f32 %v721, %v752
      %v761 = vmul.f32 %v722, %v752
      %v762 = vmul.f32 %v723, %v752
      %v763 = vmul.f32 %v724, %v752
      %v764 = vmul.f32 %v725, %v752
      %v765 = vmul.f32 %v726, %v752
      %v766 = vmul.f32 %v727, %v752
      %v767 = vmul.f32 %v728, %v752
      %v768 = vmul.f32 %v729, %v752
      %v769 = vmul.f32 %v730, %v752
      %v770 = vmul.f32 %v731, %v752
      %v771 = vmul.f32 %v732, %v752
      %v772 = vmul.f32 %v733, %v752
      %v773 = vmul.f32 %v734, %v752
      %v774 = vmul.f32 %v735, %v752
      %v775 = vmul.f32 %v736, %v752
      %v776 = vmul.f32 %v737, %v752
      %v777 = vmul.f32 %v738, %v752
      %v778 = vmul.f32 %v739, %v752
      %v779 = vmul.f32 %v740, %v752
      %v780 = vmul.f32 %v741, %v752
      %v781 = vmul.f32 %v742, %v752
      %v782 = vmul.f32 %v743, %v752
      %v783 = vmul.f32 %v744, %v752
      %v784 = vmul.f32 %v745, %v752
      %v785 = vfloor.f32 %v753
      %v786 = vfloor.f32 %v754
      %v787 = vfloor.f32 %v755
      %v788 = vfloor.f32 %v756
      %v789 = vfloor.f32 %v757
      %v790 = vfloor.f32 %v758
      %v791 = vfloor.f32 %v759
      %v792 = vfloor.f32 %v760
      %v793 = vfloor.f32 %v761
      %v794 = vfloor.f32 %v762
      %v795 = vfloor.f32 %v763
      %v796 = vfloor.f32 %v764
      %v797 = vfloor.f32 %v765
      %v798 = vfloor.f32 %v766
      %v799 = vfloor.f32 %v767
      %v800 = vfloor.f32 %v768
      %v801 = vfloor.f32 %v769
      %v802 = vfloor.f32 %v770
      %v803 = vfloor.f32 %v771
      %v804 = vfloor.f32 %v772
      %v805 = vfloor.f32 %v773
      %v806 = vfloor.f32 %v774
      %v807 = vfloor.f32 %v775
      %v808 = vfloor.f32 %v776
      %v809 = vfloor.f32 %v777
      %v810 = vfloor.f32 %v778
      %v811 = vfloor.f32 %v779
      %v812 = vfloor.f32 %v780
      %v813 = vfloor.f32 %v781
      %v814 = vfloor.f32 %v782
      %v815 = vfloor.f32 %v783
      %v816 = vfloor.f32 %v784
      %v817 = vmul.f32 %v785, 16.0
      %v818 = vmul.f32 %v786, 16.0
      %v819 = vmul.f32 %v787, 16.0
      %v820 = vmul.f32 %v788, 16.0
      %v821 = vmul.f32 %v789, 16.0
      %v822 = vmul.f32 %v790, 16.0
      %v823 = vmul.f32 %v791, 16.0
      %v824 = vmul.f32 %v792, 16.0
      %v825 = vmul.f32 %v793, 16.0
      %v826 = vmul.f32 %v794, 16.0
      %v827 = vmul.f32 %v795, 16.0
      %v828 = vmul.f32 %v796, 16.0
      %v829 = vmul.f32 %v797, 16.0
      %v830 = vmul.f32 %v798, 16.0
      %v831 = vmul.f32 %v799, 16.0
      %v832 = vmul.f32 %v800, 16.0
      %v833 = vmul.f32 %v801, 16.0
      %v834 = vmul.f32 %v802, 16.0
      %v835 = vmul.f32 %v803, 16.0
      %v836 = vmul.f32 %v804, 16.0
      %v837 = vmul.f32 %v805, 16.0
      %v838 = vmul.f32 %v806, 16.0
      %v839 = vmul.f32 %v807, 16.0
      %v840 = vmul.f32 %v808, 16.0
      %v841 = vmul.f32 %v809, 16.0
      %v842 = vmul.f32 %v810, 16.0
      %v843 = vmul.f32 %v811, 16.0
      %v844 = vmul.f32 %v812, 16.0
      %v845 = vmul.f32 %v813, 16.0
      %v846 = vmul.f32 %v814, 16.0
      %v847 = vmul.f32 %v815, 16.0
      %v848 = vmul.f32 %v816, 16.0
      %v849 = vsub.f32 %v682, %v817
      %v850 = vsub.f32 %v683, %v818
      %v851 = vsub.f32 %v684, %v819
      %v852 = vsub.f32 %v685, %v820
      %v853 = vsub.f32 %v686, %v821
      %v854 = vsub.f32 %v687, %v822
      %v855 = vsub.f32 %v688, %v823
      %v856 = vsub.f32 %v689, %v824
      %v857 = vsub.f32 %v690, %v825
      %v858 = vsub.f32 %v691, %v826
      %v859 = vsub.f32 %v692, %v827
      %v860 = vsub.f32 %v693, %v828
      %v861 = vsub.f32 %v694, %v829
      %v862 = vsub.f32 %v695, %v830
      %v863 = vsub.f32 %v696, %v831
      %v864 = vsub.f32 %v697, %v832
      %v865 = vsub.f32 %v698, %v833
      %v866 = vsub.f32 %v699, %v834
      %v867 = vsub.f32 %v700, %v835
      %v868 = vsub.f32 %v701, %v836
      %v869 = vsub.f32 %v702, %v837
      %v870 = vsub.f32 %v703, %v838
      %v871 = vsub.f32 %v704, %v839
      %v872 = vsub.f32 %v705, %v840
      %v873 = vsub.f32 %v706, %v841
      %v874 = vsub.f32 %v707, %v842
      %v875 = vsub.f32 %v708, %v843
      %v876 = vsub.f32 %v709, %v844
      %v877 = vsub.f32 %v710, %v845
      %v878 = vsub.f32 %v711, %v846
      %v879 = vsub.f32 %v712, %v847
      %v880 = vsub.f32 %v713, %v848
      %vm881 = vcmp.ge.s32.totalorder %v650, 16
      %vm882 = vcmp.ge.s32.totalorder %v651, 16
      %vm883 = vcmp.ge.s32.totalorder %v652, 16
      %vm884 = vcmp.ge.s32.totalorder %v653, 16
      %vm885 = vcmp.ge.s32.totalorder %v654, 16
      %vm886 = vcmp.ge.s32.totalorder %v655, 16
      %vm887 = vcmp.ge.s32.totalorder %v656, 16
      %vm888 = vcmp.ge.s32.totalorder %v657, 16
      %vm889 = vcmp.ge.s32.totalorder %v658, 16
      %vm890 = vcmp.ge.s32.totalorder %v659, 16
      %vm891 = vcmp.ge.s32.totalorder %v660, 16
      %vm892 = vcmp.ge.s32.totalorder %v661, 16
      %vm893 = vcmp.ge.s32.totalorder %v662, 16
      %vm894 = vcmp.ge.s32.totalorder %v663, 16
      %vm895 = vcmp.ge.s32.totalorder %v664, 16
      %vm896 = vcmp.ge.s32.totalorder %v665, 16
      %vm897 = vcmp.ge.s32.totalorder %v666, 16
      %vm898 = vcmp.ge.s32.totalorder %v667, 16
      %vm899 = vcmp.ge.s32.totalorder %v668, 16
      %vm900 = vcmp.ge.s32.totalorder %v669, 16
      %vm901 = vcmp.ge.s32.totalorder %v670, 16
      %vm902 = vcmp.ge.s32.totalorder %v671, 16
      %vm903 = vcmp.ge.s32.totalorder %v672, 16
      %vm904 = vcmp.ge.s32.totalorder %v673, 16
      %vm905 = vcmp.ge.s32.totalorder %v674, 16
      %vm906 = vcmp.ge.s32.totalorder %v675, 16
      %vm907 = vcmp.ge.s32.totalorder %v676, 16
      %vm908 = vcmp.ge.s32.totalorder %v677, 16
      %vm909 = vcmp.ge.s32.totalorder %v678, 16
      %vm910 = vcmp.ge.s32.totalorder %v679, 16
      %vm911 = vcmp.ge.s32.totalorder %v680, 16
      %vm912 = vcmp.ge.s32.totalorder %v681, 16
      %vm913 = vcmp.lt.s32.totalorder %v650, 240
      %vm914 = vcmp.lt.s32.totalorder %v651, 240
      %vm915 = vcmp.lt.s32.totalorder %v652, 240
      %vm916 = vcmp.lt.s32.totalorder %v653, 240
      %vm917 = vcmp.lt.s32.totalorder %v654, 240
      %vm918 = vcmp.lt.s32.totalorder %v655, 240
      %vm919 = vcmp.lt.s32.totalorder %v656, 240
      %vm920 = vcmp.lt.s32.totalorder %v657, 240
      %vm921 = vcmp.lt.s32.totalorder %v658, 240
      %vm922 = vcmp.lt.s32.totalorder %v659, 240
      %vm923 = vcmp.lt.s32.totalorder %v660, 240
      %vm924 = vcmp.lt.s32.totalorder %v661, 240
      %vm925 = vcmp.lt.s32.totalorder %v662, 240
      %vm926 = vcmp.lt.s32.totalorder %v663, 240
      %vm927 = vcmp.lt.s32.totalorder %v664, 240
      %vm928 = vcmp.lt.s32.totalorder %v665, 240
      %vm929 = vcmp.lt.s32.totalorder %v666, 240
      %vm930 = vcmp.lt.s32.totalorder %v667, 240
      %vm931 = vcmp.lt.s32.totalorder %v668, 240
      %vm932 = vcmp.lt.s32.totalorder %v669, 240
      %vm933 = vcmp.lt.s32.totalorder %v670, 240
      %vm934 = vcmp.lt.s32.totalorder %v671, 240
      %vm935 = vcmp.lt.s32.totalorder %v672, 240
      %vm936 = vcmp.lt.s32.totalorder %v673, 240
      %vm937 = vcmp.lt.s32.totalorder %v674, 240
      %vm938 = vcmp.lt.s32.totalorder %v675, 240
      %vm939 = vcmp.lt.s32.totalorder %v676, 240
      %vm940 = vcmp.lt.s32.totalorder %v677, 240
      %vm941 = vcmp.lt.s32.totalorder %v678, 240
      %vm942 = vcmp.lt.s32.totalorder %v679, 240
      %vm943 = vcmp.lt.s32.totalorder %v680, 240
      %vm944 = vcmp.lt.s32.totalorder %v681, 240
      %vm945 = vcmp.gt.f32.partialorder %v849, 0.5
      %vm946 = vcmp.gt.f32.partialorder %v850, 0.5
      %vm947 = vcmp.gt.f32.partialorder %v851, 0.5
      %vm948 = vcmp.gt.f32.partialorder %v852, 0.5
      %vm949 = vcmp.gt.f32.partialorder %v853, 0.5
      %vm950 = vcmp.gt.f32.partialorder %v854, 0.5
      %vm951 = vcmp.gt.f32.partialorder %v855, 0.5
      %vm952 = vcmp.gt.f32.partialorder %v856, 0.5
      %vm953 = vcmp.gt.f32.partialorder %v857, 0.5
      %vm954 = vcmp.gt.f32.partialorder %v858, 0.5
      %vm955 = vcmp.gt.f32.partialorder %v859, 0.5
      %vm956 = vcmp.gt.f32.partialorder %v860, 0.5
      %vm957 = vcmp.gt.f32.partialorder %v861, 0.5
      %vm958 = vcmp.gt.f32.partialorder %v862, 0.5
      %vm959 = vcmp.gt.f32.partialorder %v863, 0.5
      %vm960 = vcmp.gt.f32.partialorder %v864, 0.5
      %vm961 = vcmp.gt.f32.partialorder %v865, 0.5
      %vm962 = vcmp.gt.f32.partialorder %v866, 0.5
      %vm963 = vcmp.gt.f32.partialorder %v867, 0.5
      %vm964 = vcmp.gt.f32.partialorder %v868, 0.5
      %vm965 = vcmp.gt.f32.partialorder %v869, 0.5
      %vm966 = vcmp.gt.f32.partialorder %v870, 0.5
      %vm967 = vcmp.gt.f32.partialorder %v871, 0.5
      %vm968 = vcmp.gt.f32.partialorder %v872, 0.5
      %vm969 = vcmp.gt.f32.partialorder %v873, 0.5
      %vm970 = vcmp.gt.f32.partialorder %v874, 0.5
      %vm971 = vcmp.gt.f32.partialorder %v875, 0.5
      %vm972 = vcmp.gt.f32.partialorder %v876, 0.5
      %vm973 = vcmp.gt.f32.partialorder %v877, 0.5
      %vm974 = vcmp.gt.f32.partialorder %v878, 0.5
      %vm975 = vcmp.gt.f32.partialorder %v879, 0.5
      %vm976 = vcmp.gt.f32.partialorder %v880, 0.5
      %vm977 = vcmp.lt.f32.partialorder %v849, 14.5
      %vm978 = vcmp.lt.f32.partialorder %v850, 14.5
      %vm979 = vcmp.lt.f32.partialorder %v851, 14.5
      %vm980 = vcmp.lt.f32.partialorder %v852, 14.5
      %vm981 = vcmp.lt.f32.partialorder %v853, 14.5
      %vm982 = vcmp.lt.f32.partialorder %v854, 14.5
      %vm983 = vcmp.lt.f32.partialorder %v855, 14.5
      %vm984 = vcmp.lt.f32.partialorder %v856, 14.5
      %vm985 = vcmp.lt.f32.partialorder %v857, 14.5
      %vm986 = vcmp.lt.f32.partialorder %v858, 14.5
      %vm987 = vcmp.lt.f32.partialorder %v859, 14.5
      %vm988 = vcmp.lt.f32.partialorder %v860, 14.5
      %vm989 = vcmp.lt.f32.partialorder %v861, 14.5
      %vm990 = vcmp.lt.f32.partialorder %v862, 14.5
      %vm991 = vcmp.lt.f32.partialorder %v863, 14.5
      %vm992 = vcmp.lt.f32.partialorder %v864, 14.5
      %vm993 = vcmp.lt.f32.partialorder %v865, 14.5
      %vm994 = vcmp.lt.f32.partialorder %v866, 14.5
      %vm995 = vcmp.lt.f32.partialorder %v867, 14.5
      %vm996 = vcmp.lt.f32.partialorder %v868, 14.5
      %vm997 = vcmp.lt.f32.partialorder %v869, 14.5
      %vm998 = vcmp.lt.f32.partialorder %v870, 14.5
      %vm999 = vcmp.lt.f32.partialorder %v871, 14.5
      %vm1000 = vcmp.lt.f32.partialorder %v872, 14.5
      %vm1001 = vcmp.lt.f32.partialorder %v873, 14.5
      %vm1002 = vcmp.lt.f32.partialorder %v874, 14.5
      %vm1003 = vcmp.lt.f32.partialorder %v875, 14.5
      %vm1004 = vcmp.lt.f32.partialorder %v876, 14.5
      %vm1005 = vcmp.lt.f32.partialorder %v877, 14.5
      %vm1006 = vcmp.lt.f32.partialorder %v878, 14.5
      %vm1007 = vcmp.lt.f32.partialorder %v879, 14.5
      %vm1008 = vcmp.lt.f32.partialorder %v880, 14.5
      %v1009 = vrot.slane %v570, 7
      %v1010 = vrot.slane %v572, 7
      %v1011 = vrot.slane %v575, 7
      %v1012 = vrot.slane %v577, 7
      %v1013 = vrot.slane %v580, 7
      %v1014 = vrot.slane %v582, 7
      %v1015 = vrot.slane %v585, 7
      %v1016 = vrot.slane %v587, 7
      %v1017 = vrot.slane %v590, 7
      %v1018 = vrot.slane %v592, 7
      %v1019 = vrot.slane %v595, 7
      %v1020 = vrot.slane %v597, 7
      %v1021 = vrot.slane %v600, 7
      %v1022 = vrot.slane %v602, 7
      %v1023 = vrot.slane %v605, 7
      %v1024 = vrot.slane %v607, 7
      %v1025 = vrot.slane %v610, 7
      %v1026 = vrot.slane %v612, 7
      %v1027 = vrot.slane %v615, 7
      %v1028 = vrot.slane %v617, 7
      %v1029 = vrot.slane %v620, 7
      %v1030 = vrot.slane %v622, 7
      %v1031 = vrot.slane %v625, 7
      %v1032 = vrot.slane %v627, 7
      %v1033 = vrot.slane %v630, 7
      %v1034 = vrot.slane %v632, 7
      %v1035 = vrot.slane %v635, 7
      %v1036 = vrot.slane %v637, 7
      %v1037 = vrot.slane %v640, 7
      %v1038 = vrot.slane %v642, 7
      %v1039 = vrot.slane %v645, 7
      %v1040 = vrot.slane %v647, 7
      %vm1041 = vcmp.lt.s32.totalorder %v650, 1
      %v1042 = vsel %vm1041, %v1039, %v1040
      %v1043 = vsel %vm1041, %v1038, %v1039
      %v1044 = vsel %vm1041, %v1037, %v1038
      %v1045 = vsel %vm1041, %v1036, %v1037
      %v1046 = vsel %vm1041, %v1035, %v1036
      %v1047 = vsel %vm1041, %v1034, %v1035
      %v1048 = vsel %vm1041, %v1033, %v1034
      %v1049 = vsel %vm1041, %v1032, %v1033
      %v1050 = vsel %vm1041, %v1031, %v1032
      %v1051 = vsel %vm1041, %v1030, %v1031
      %v1052 = vsel %vm1041, %v1029, %v1030
      %v1053 = vsel %vm1041, %v1028, %v1029
      %v1054 = vsel %vm1041, %v1027, %v1028
      %v1055 = vsel %vm1041, %v1026, %v1027
      %v1056 = vsel %vm1041, %v1025, %v1026
      %v1057 = vsel %vm1041, %v1024, %v1025
      %v1058 = vsel %vm1041, %v1023, %v1024
      %v1059 = vsel %vm1041, %v1022, %v1023
      %v1060 = vsel %vm1041, %v1021, %v1022
      %v1061 = vsel %vm1041, %v1020, %v1021
      %v1062 = vsel %vm1041, %v1019, %v1020
      %v1063 = vsel %vm1041, %v1018, %v1019
      %v1064 = vsel %vm1041, %v1017, %v1018
      %v1065 = vsel %vm1041, %v1016, %v1017
      %v1066 = vsel %vm1041, %v1015, %v1016
      %v1067 = vsel %vm1041, %v1014, %v1015
      %v1068 = vsel %vm1041, %v1013, %v1014
      %v1069 = vsel %vm1041, %v1012, %v1013
      %v1070 = vsel %vm1041, %v1011, %v1012
      %v1071 = vsel %vm1041, %v1010, %v1011
      %v1072 = vsel %vm1041, %v1009, %v1010
      %v1073 = vsel %vm1041, %v1040, %v1009
      %vm1074 = vmand %vm881, %vm945
      %vm1075 = vmand %vm882, %vm946
      %vm1076 = vmand %vm883, %vm947
      %vm1077 = vmand %vm884, %vm948
      %vm1078 = vmand %vm885, %vm949
      %vm1079 = vmand %vm886, %vm950
      %vm1080 = vmand %vm887, %vm951
      %vm1081 = vmand %vm888, %vm952
      %vm1082 = vmand %vm889, %vm953
      %vm1083 = vmand %vm890, %vm954
      %vm1084 = vmand %vm891, %vm955
      %vm1085 = vmand %vm892, %vm956
      %vm1086 = vmand %vm893, %vm957
      %vm1087 = vmand %vm894, %vm958
      %vm1088 = vmand %vm895, %vm959
      %vm1089 = vmand %vm896, %vm960
      %vm1090 = vmand %vm897, %vm961
      %vm1091 = vmand %vm898, %vm962
      %vm1092 = vmand %vm899, %vm963
      %vm1093 = vmand %vm900, %vm964
      %vm1094 = vmand %vm901, %vm965
      %vm1095 = vmand %vm902, %vm966
      %vm1096 = vmand %vm903, %vm967
      %vm1097 = vmand %vm904, %vm968
      %vm1098 = vmand %vm905, %vm969
      %vm1099 = vmand %vm906, %vm970
      %vm1100 = vmand %vm907, %vm971
      %vm1101 = vmand %vm908, %vm972
      %vm1102 = vmand %vm909, %vm973
      %vm1103 = vmand %vm910, %vm974
      %vm1104 = vmand %vm911, %vm975
      %vm1105 = vmand %vm912, %vm976
      %v1106 = vsel %vm1074, %v1043, 0.0
      %v1107 = vsel %vm1075, %v1042, 0.0
      %v1108 = vsel %vm1076, %v1073, 0.0
      %v1109 = vsel %vm1077, %v1072, 0.0
      %v1110 = vsel %vm1078, %v1071, 0.0
      %v1111 = vsel %vm1079, %v1070, 0.0
      %v1112 = vsel %vm1080, %v1069, 0.0
      %v1113 = vsel %vm1081, %v1068, 0.0
      %v1114 = vsel %vm1082, %v1067, 0.0
      %v1115 = vsel %vm1083, %v1066, 0.0
      %v1116 = vsel %vm1084, %v1065, 0.0
      %v1117 = vsel %vm1085, %v1064, 0.0
      %v1118 = vsel %vm1086, %v1063, 0.0
      %v1119 = vsel %vm1087, %v1062, 0.0
      %v1120 = vsel %vm1088, %v1061, 0.0
      %v1121 = vsel %vm1089, %v1060, 0.0
      %v1122 = vsel %vm1090, %v1059, 0.0
      %v1123 = vsel %vm1091, %v1058, 0.0
      %v1124 = vsel %vm1092, %v1057, 0.0
      %v1125 = vsel %vm1093, %v1056, 0.0
      %v1126 = vsel %vm1094, %v1055, 0.0
      %v1127 = vsel %vm1095, %v1054, 0.0
      %v1128 = vsel %vm1096, %v1053, 0.0
      %v1129 = vsel %vm1097, %v1052, 0.0
      %v1130 = vsel %vm1098, %v1051, 0.0
      %v1131 = vsel %vm1099, %v1050, 0.0
      %v1132 = vsel %vm1100, %v1049, 0.0
      %v1133 = vsel %vm1101, %v1048, 0.0
      %v1134 = vsel %vm1102, %v1047, 0.0
      %v1135 = vsel %vm1103, %v1046, 0.0
      %v1136 = vsel %vm1104, %v1045, 0.0
      %v1137 = vsel %vm1105, %v1044, 0.0
      %1170 = vrot.lane.b32.xlu0 %v1106, 32
      %v1171 = vpop.permute.xlu0 %1170
      %1172 = vrot.lane.b32.xlu0 %v1107, 32
      %v1173 = vpop.permute.xlu0 %1172
      %1174 = vrot.lane.b32.xlu0 %v1108, 32
      %v1175 = vpop.permute.xlu0 %1174
      %1176 = vrot.lane.b32.xlu0 %v1109, 32
      %v1177 = vpop.permute.xlu0 %1176
      %1178 = vrot.lane.b32.xlu0 %v1110, 32
      %v1179 = vpop.permute.xlu0 %1178
      %1180 = vrot.lane.b32.xlu0 %v1111, 32
      %v1181 = vpop.permute.xlu0 %1180
      %1182 = vrot.lane.b32.xlu0 %v1112, 32
      %v1183 = vpop.permute.xlu0 %1182
      %1184 = vrot.lane.b32.xlu0 %v1113, 32
      %v1185 = vpop.permute.xlu0 %1184
      %1186 = vrot.lane.b32.xlu0 %v1114, 32
      %v1187 = vpop.permute.xlu0 %1186
      %1188 = vrot.lane.b32.xlu0 %v1115, 32
      %v1189 = vpop.permute.xlu0 %1188
      %1190 = vrot.lane.b32.xlu0 %v1116, 32
      %v1191 = vpop.permute.xlu0 %1190
      %1192 = vrot.lane.b32.xlu0 %v1117, 32
      %v1193 = vpop.permute.xlu0 %1192
      %1194 = vrot.lane.b32.xlu0 %v1118, 32
      %v1195 = vpop.permute.xlu0 %1194
      %1196 = vrot.lane.b32.xlu0 %v1119, 32
      %v1197 = vpop.permute.xlu0 %1196
      %1198 = vrot.lane.b32.xlu0 %v1120, 32
      %v1199 = vpop.permute.xlu0 %1198
      %1200 = vrot.lane.b32.xlu0 %v1121, 32
      %v1201 = vpop.permute.xlu0 %1200
      %1202 = vrot.lane.b32.xlu0 %v1122, 32
      %v1203 = vpop.permute.xlu0 %1202
      %1204 = vrot.lane.b32.xlu0 %v1123, 32
      %v1205 = vpop.permute.xlu0 %1204
      %1206 = vrot.lane.b32.xlu0 %v1124, 32
      %v1207 = vpop.permute.xlu0 %1206
      %1208 = vrot.lane.b32.xlu0 %v1125, 32
      %v1209 = vpop.permute.xlu0 %1208
      %1210 = vrot.lane.b32.xlu0 %v1126, 32
      %v1211 = vpop.permute.xlu0 %1210
      %1212 = vrot.lane.b32.xlu0 %v1127, 32
      %v1213 = vpop.permute.xlu0 %1212
      %1214 = vrot.lane.b32.xlu0 %v1128, 32
      %v1215 = vpop.permute.xlu0 %1214
      %1216 = vrot.lane.b32.xlu0 %v1129, 32
      %v1217 = vpop.permute.xlu0 %1216
      %1218 = vrot.lane.b32.xlu0 %v1130, 32
      %v1219 = vpop.permute.xlu0 %1218
      %1220 = vrot.lane.b32.xlu0 %v1131, 32
      %v1221 = vpop.permute.xlu0 %1220
      %1222 = vrot.lane.b32.xlu0 %v1132, 32
      %v1223 = vpop.permute.xlu0 %1222
      %1224 = vrot.lane.b32.xlu0 %v1133, 32
      %v1225 = vpop.permute.xlu0 %1224
      %1226 = vrot.lane.b32.xlu0 %v1134, 32
      %v1227 = vpop.permute.xlu0 %1226
      %1228 = vrot.lane.b32.xlu0 %v1135, 32
      %v1229 = vpop.permute.xlu0 %1228
      %1230 = vrot.lane.b32.xlu0 %v1136, 32
      %v1231 = vpop.permute.xlu0 %1230
      %1232 = vrot.lane.b32.xlu0 %v1137, 32
      %v1233 = vpop.permute.xlu0 %1232
      %v1266 = vadd.f32 %v570, %v1171
      %v1267 = vadd.f32 %v572, %v1173
      %v1268 = vadd.f32 %v575, %v1175
      %v1269 = vadd.f32 %v577, %v1177
      %v1270 = vadd.f32 %v580, %v1179
      %v1271 = vadd.f32 %v582, %v1181
      %v1272 = vadd.f32 %v585, %v1183
      %v1273 = vadd.f32 %v587, %v1185
      %v1274 = vadd.f32 %v590, %v1187
      %v1275 = vadd.f32 %v592, %v1189
      %v1276 = vadd.f32 %v595, %v1191
      %v1277 = vadd.f32 %v597, %v1193
      %v1278 = vadd.f32 %v600, %v1195
      %v1279 = vadd.f32 %v602, %v1197
      %v1280 = vadd.f32 %v605, %v1199
      %v1281 = vadd.f32 %v607, %v1201
      %v1282 = vadd.f32 %v610, %v1203
      %v1283 = vadd.f32 %v612, %v1205
      %v1284 = vadd.f32 %v615, %v1207
      %v1285 = vadd.f32 %v617, %v1209
      %v1286 = vadd.f32 %v620, %v1211
      %v1287 = vadd.f32 %v622, %v1213
      %v1288 = vadd.f32 %v625, %v1215
      %v1289 = vadd.f32 %v627, %v1217
      %v1290 = vadd.f32 %v630, %v1219
      %v1291 = vadd.f32 %v632, %v1221
      %v1292 = vadd.f32 %v635, %v1223
      %v1293 = vadd.f32 %v637, %v1225
      %v1294 = vadd.f32 %v640, %v1227
      %v1295 = vadd.f32 %v642, %v1229
      %v1296 = vadd.f32 %v645, %v1231
      %v1297 = vadd.f32 %v647, %v1233
      %1330 = vrot.lane.b32.xlu0 %v570, 120
      %v1331 = vpop.permute.xlu0 %1330
      %1332 = vrot.lane.b32.xlu0 %v572, 120
      %v1333 = vpop.permute.xlu0 %1332
      %1334 = vrot.lane.b32.xlu0 %v575, 120
      %v1335 = vpop.permute.xlu0 %1334
      %1336 = vrot.lane.b32.xlu0 %v577, 120
      %v1337 = vpop.permute.xlu0 %1336
      %1338 = vrot.lane.b32.xlu0 %v580, 120
      %v1339 = vpop.permute.xlu0 %1338
      %1340 = vrot.lane.b32.xlu0 %v582, 120
      %v1341 = vpop.permute.xlu0 %1340
      %1342 = vrot.lane.b32.xlu0 %v585, 120
      %v1343 = vpop.permute.xlu0 %1342
      %1344 = vrot.lane.b32.xlu0 %v587, 120
      %v1345 = vpop.permute.xlu0 %1344
      %1346 = vrot.lane.b32.xlu0 %v590, 120
      %v1347 = vpop.permute.xlu0 %1346
      %1348 = vrot.lane.b32.xlu0 %v592, 120
      %v1349 = vpop.permute.xlu0 %1348
      %1350 = vrot.lane.b32.xlu0 %v595, 120
      %v1351 = vpop.permute.xlu0 %1350
      %1352 = vrot.lane.b32.xlu0 %v597, 120
      %v1353 = vpop.permute.xlu0 %1352
      %1354 = vrot.lane.b32.xlu0 %v600, 120
      %v1355 = vpop.permute.xlu0 %1354
      %1356 = vrot.lane.b32.xlu0 %v602, 120
      %v1357 = vpop.permute.xlu0 %1356
      %1358 = vrot.lane.b32.xlu0 %v605, 120
      %v1359 = vpop.permute.xlu0 %1358
      %1360 = vrot.lane.b32.xlu0 %v607, 120
      %v1361 = vpop.permute.xlu0 %1360
      %1362 = vrot.lane.b32.xlu0 %v610, 120
      %v1363 = vpop.permute.xlu0 %1362
      %1364 = vrot.lane.b32.xlu0 %v612, 120
      %v1365 = vpop.permute.xlu0 %1364
      %1366 = vrot.lane.b32.xlu0 %v615, 120
      %v1367 = vpop.permute.xlu0 %1366
      %1368 = vrot.lane.b32.xlu0 %v617, 120
      %v1369 = vpop.permute.xlu0 %1368
      %1370 = vrot.lane.b32.xlu0 %v620, 120
      %v1371 = vpop.permute.xlu0 %1370
      %1372 = vrot.lane.b32.xlu0 %v622, 120
      %v1373 = vpop.permute.xlu0 %1372
      %1374 = vrot.lane.b32.xlu0 %v625, 120
      %v1375 = vpop.permute.xlu0 %1374
      %1376 = vrot.lane.b32.xlu0 %v627, 120
      %v1377 = vpop.permute.xlu0 %1376
      %1378 = vrot.lane.b32.xlu0 %v630, 120
      %v1379 = vpop.permute.xlu0 %1378
      %1380 = vrot.lane.b32.xlu0 %v632, 120
      %v1381 = vpop.permute.xlu0 %1380
      %1382 = vrot.lane.b32.xlu0 %v635, 120
      %v1383 = vpop.permute.xlu0 %1382
      %1384 = vrot.lane.b32.xlu0 %v637, 120
      %v1385 = vpop.permute.xlu0 %1384
      %1386 = vrot.lane.b32.xlu0 %v640, 120
      %v1387 = vpop.permute.xlu0 %1386
      %1388 = vrot.lane.b32.xlu0 %v642, 120
      %v1389 = vpop.permute.xlu0 %1388
      %1390 = vrot.lane.b32.xlu0 %v645, 120
      %v1391 = vpop.permute.xlu0 %1390
      %1392 = vrot.lane.b32.xlu0 %v647, 120
      %v1393 = vpop.permute.xlu0 %1392
      %v1426 = vsel %vm881, %v1391, 0.0
      %v1427 = vsel %vm882, %v1393, 0.0
      %v1428 = vsel %vm883, %v1331, 0.0
      %v1429 = vsel %vm884, %v1333, 0.0
      %v1430 = vsel %vm885, %v1335, 0.0
      %v1431 = vsel %vm886, %v1337, 0.0
      %v1432 = vsel %vm887, %v1339, 0.0
      %v1433 = vsel %vm888, %v1341, 0.0
      %v1434 = vsel %vm889, %v1343, 0.0
      %v1435 = vsel %vm890, %v1345, 0.0
      %v1436 = vsel %vm891, %v1347, 0.0
      %v1437 = vsel %vm892, %v1349, 0.0
      %v1438 = vsel %vm893, %v1351, 0.0
      %v1439 = vsel %vm894, %v1353, 0.0
      %v1440 = vsel %vm895, %v1355, 0.0
      %v1441 = vsel %vm896, %v1357, 0.0
      %v1442 = vsel %vm897, %v1359, 0.0
      %v1443 = vsel %vm898, %v1361, 0.0
      %v1444 = vsel %vm899, %v1363, 0.0
      %v1445 = vsel %vm900, %v1365, 0.0
      %v1446 = vsel %vm901, %v1367, 0.0
      %v1447 = vsel %vm902, %v1369, 0.0
      %v1448 = vsel %vm903, %v1371, 0.0
      %v1449 = vsel %vm904, %v1373, 0.0
      %v1450 = vsel %vm905, %v1375, 0.0
      %v1451 = vsel %vm906, %v1377, 0.0
      %v1452 = vsel %vm907, %v1379, 0.0
      %v1453 = vsel %vm908, %v1381, 0.0
      %v1454 = vsel %vm909, %v1383, 0.0
      %v1455 = vsel %vm910, %v1385, 0.0
      %v1456 = vsel %vm911, %v1387, 0.0
      %v1457 = vsel %vm912, %v1389, 0.0
      %1490 = vrot.lane.b32.xlu0 %v1426, 32
      %v1491 = vpop.permute.xlu0 %1490
      %1492 = vrot.lane.b32.xlu0 %v1427, 32
      %v1493 = vpop.permute.xlu0 %1492
      %1494 = vrot.lane.b32.xlu0 %v1428, 32
      %v1495 = vpop.permute.xlu0 %1494
      %1496 = vrot.lane.b32.xlu0 %v1429, 32
      %v1497 = vpop.permute.xlu0 %1496
      %1498 = vrot.lane.b32.xlu0 %v1430, 32
      %v1499 = vpop.permute.xlu0 %1498
      %1500 = vrot.lane.b32.xlu0 %v1431, 32
      %v1501 = vpop.permute.xlu0 %1500
      %1502 = vrot.lane.b32.xlu0 %v1432, 32
      %v1503 = vpop.permute.xlu0 %1502
      %1504 = vrot.lane.b32.xlu0 %v1433, 32
      %v1505 = vpop.permute.xlu0 %1504
      %1506 = vrot.lane.b32.xlu0 %v1434, 32
      %v1507 = vpop.permute.xlu0 %1506
      %1508 = vrot.lane.b32.xlu0 %v1435, 32
      %v1509 = vpop.permute.xlu0 %1508
      %1510 = vrot.lane.b32.xlu0 %v1436, 32
      %v1511 = vpop.permute.xlu0 %1510
      %1512 = vrot.lane.b32.xlu0 %v1437, 32
      %v1513 = vpop.permute.xlu0 %1512
      %1514 = vrot.lane.b32.xlu0 %v1438, 32
      %v1515 = vpop.permute.xlu0 %1514
      %1516 = vrot.lane.b32.xlu0 %v1439, 32
      %v1517 = vpop.permute.xlu0 %1516
      %1518 = vrot.lane.b32.xlu0 %v1440, 32
      %v1519 = vpop.permute.xlu0 %1518
      %1520 = vrot.lane.b32.xlu0 %v1441, 32
      %v1521 = vpop.permute.xlu0 %1520
      %1522 = vrot.lane.b32.xlu0 %v1442, 32
      %v1523 = vpop.permute.xlu0 %1522
      %1524 = vrot.lane.b32.xlu0 %v1443, 32
      %v1525 = vpop.permute.xlu0 %1524
      %1526 = vrot.lane.b32.xlu0 %v1444, 32
      %v1527 = vpop.permute.xlu0 %1526
      %1528 = vrot.lane.b32.xlu0 %v1445, 32
      %v1529 = vpop.permute.xlu0 %1528
      %1530 = vrot.lane.b32.xlu0 %v1446, 32
      %v1531 = vpop.permute.xlu0 %1530
      %1532 = vrot.lane.b32.xlu0 %v1447, 32
      %v1533 = vpop.permute.xlu0 %1532
      %1534 = vrot.lane.b32.xlu0 %v1448, 32
      %v1535 = vpop.permute.xlu0 %1534
      %1536 = vrot.lane.b32.xlu0 %v1449, 32
      %v1537 = vpop.permute.xlu0 %1536
      %1538 = vrot.lane.b32.xlu0 %v1450, 32
      %v1539 = vpop.permute.xlu0 %1538
      %1540 = vrot.lane.b32.xlu0 %v1451, 32
      %v1541 = vpop.permute.xlu0 %1540
      %1542 = vrot.lane.b32.xlu0 %v1452, 32
      %v1543 = vpop.permute.xlu0 %1542
      %1544 = vrot.lane.b32.xlu0 %v1453, 32
      %v1545 = vpop.permute.xlu0 %1544
      %1546 = vrot.lane.b32.xlu0 %v1454, 32
      %v1547 = vpop.permute.xlu0 %1546
      %1548 = vrot.lane.b32.xlu0 %v1455, 32
      %v1549 = vpop.permute.xlu0 %1548
      %1550 = vrot.lane.b32.xlu0 %v1456, 32
      %v1551 = vpop.permute.xlu0 %1550
      %1552 = vrot.lane.b32.xlu0 %v1457, 32
      %v1553 = vpop.permute.xlu0 %1552
      %v1586 = vadd.f32 %v1266, %v1491
      %v1587 = vadd.f32 %v1267, %v1493
      %v1588 = vadd.f32 %v1268, %v1495
      %v1589 = vadd.f32 %v1269, %v1497
      %v1590 = vadd.f32 %v1270, %v1499
      %v1591 = vadd.f32 %v1271, %v1501
      %v1592 = vadd.f32 %v1272, %v1503
      %v1593 = vadd.f32 %v1273, %v1505
      %v1594 = vadd.f32 %v1274, %v1507
      %v1595 = vadd.f32 %v1275, %v1509
      %v1596 = vadd.f32 %v1276, %v1511
      %v1597 = vadd.f32 %v1277, %v1513
      %v1598 = vadd.f32 %v1278, %v1515
      %v1599 = vadd.f32 %v1279, %v1517
      %v1600 = vadd.f32 %v1280, %v1519
      %v1601 = vadd.f32 %v1281, %v1521
      %v1602 = vadd.f32 %v1282, %v1523
      %v1603 = vadd.f32 %v1283, %v1525
      %v1604 = vadd.f32 %v1284, %v1527
      %v1605 = vadd.f32 %v1285, %v1529
      %v1606 = vadd.f32 %v1286, %v1531
      %v1607 = vadd.f32 %v1287, %v1533
      %v1608 = vadd.f32 %v1288, %v1535
      %v1609 = vadd.f32 %v1289, %v1537
      %v1610 = vadd.f32 %v1290, %v1539
      %v1611 = vadd.f32 %v1291, %v1541
      %v1612 = vadd.f32 %v1292, %v1543
      %v1613 = vadd.f32 %v1293, %v1545
      %v1614 = vadd.f32 %v1294, %v1547
      %v1615 = vadd.f32 %v1295, %v1549
      %v1616 = vadd.f32 %v1296, %v1551
      %v1617 = vadd.f32 %v1297, %v1553
      %1618 = vrot.lane.b32.xlu0 %v570, 112
      %v1619 = vpop.permute.xlu0 %1618
      %1620 = vrot.lane.b32.xlu0 %v572, 112
      %v1621 = vpop.permute.xlu0 %1620
      %1622 = vrot.lane.b32.xlu0 %v575, 112
      %v1623 = vpop.permute.xlu0 %1622
      %1624 = vrot.lane.b32.xlu0 %v577, 112
      %v1625 = vpop.permute.xlu0 %1624
      %1626 = vrot.lane.b32.xlu0 %v580, 112
      %v1627 = vpop.permute.xlu0 %1626
      %1628 = vrot.lane.b32.xlu0 %v582, 112
      %v1629 = vpop.permute.xlu0 %1628
      %1630 = vrot.lane.b32.xlu0 %v585, 112
      %v1631 = vpop.permute.xlu0 %1630
      %1632 = vrot.lane.b32.xlu0 %v587, 112
      %v1633 = vpop.permute.xlu0 %1632
      %1634 = vrot.lane.b32.xlu0 %v590, 112
      %v1635 = vpop.permute.xlu0 %1634
      %1636 = vrot.lane.b32.xlu0 %v592, 112
      %v1637 = vpop.permute.xlu0 %1636
      %1638 = vrot.lane.b32.xlu0 %v595, 112
      %v1639 = vpop.permute.xlu0 %1638
      %1640 = vrot.lane.b32.xlu0 %v597, 112
      %v1641 = vpop.permute.xlu0 %1640
      %1642 = vrot.lane.b32.xlu0 %v600, 112
      %v1643 = vpop.permute.xlu0 %1642
      %1644 = vrot.lane.b32.xlu0 %v602, 112
      %v1645 = vpop.permute.xlu0 %1644
      %1646 = vrot.lane.b32.xlu0 %v605, 112
      %v1647 = vpop.permute.xlu0 %1646
      %1648 = vrot.lane.b32.xlu0 %v607, 112
      %v1649 = vpop.permute.xlu0 %1648
      %1650 = vrot.lane.b32.xlu0 %v610, 112
      %v1651 = vpop.permute.xlu0 %1650
      %1652 = vrot.lane.b32.xlu0 %v612, 112
      %v1653 = vpop.permute.xlu0 %1652
      %1654 = vrot.lane.b32.xlu0 %v615, 112
      %v1655 = vpop.permute.xlu0 %1654
      %1656 = vrot.lane.b32.xlu0 %v617, 112
      %v1657 = vpop.permute.xlu0 %1656
      %1658 = vrot.lane.b32.xlu0 %v620, 112
      %v1659 = vpop.permute.xlu0 %1658
      %1660 = vrot.lane.b32.xlu0 %v622, 112
      %v1661 = vpop.permute.xlu0 %1660
      %1662 = vrot.lane.b32.xlu0 %v625, 112
      %v1663 = vpop.permute.xlu0 %1662
      %1664 = vrot.lane.b32.xlu0 %v627, 112
      %v1665 = vpop.permute.xlu0 %1664
      %1666 = vrot.lane.b32.xlu0 %v630, 112
      %v1667 = vpop.permute.xlu0 %1666
      %1668 = vrot.lane.b32.xlu0 %v632, 112
      %v1669 = vpop.permute.xlu0 %1668
      %1670 = vrot.lane.b32.xlu0 %v635, 112
      %v1671 = vpop.permute.xlu0 %1670
      %1672 = vrot.lane.b32.xlu0 %v637, 112
      %v1673 = vpop.permute.xlu0 %1672
      %1674 = vrot.lane.b32.xlu0 %v640, 112
      %v1675 = vpop.permute.xlu0 %1674
      %1676 = vrot.lane.b32.xlu0 %v642, 112
      %v1677 = vpop.permute.xlu0 %1676
      %1678 = vrot.lane.b32.xlu0 %v645, 112
      %v1679 = vpop.permute.xlu0 %1678
      %1680 = vrot.lane.b32.xlu0 %v647, 112
      %v1681 = vpop.permute.xlu0 %1680
      %v1714 = vrot.slane %v1619, 1
      %v1715 = vrot.slane %v1621, 1
      %v1716 = vrot.slane %v1623, 1
      %v1717 = vrot.slane %v1625, 1
      %v1718 = vrot.slane %v1627, 1
      %v1719 = vrot.slane %v1629, 1
      %v1720 = vrot.slane %v1631, 1
      %v1721 = vrot.slane %v1633, 1
      %v1722 = vrot.slane %v1635, 1
      %v1723 = vrot.slane %v1637, 1
      %v1724 = vrot.slane %v1639, 1
      %v1725 = vrot.slane %v1641, 1
      %v1726 = vrot.slane %v1643, 1
      %v1727 = vrot.slane %v1645, 1
      %v1728 = vrot.slane %v1647, 1
      %v1729 = vrot.slane %v1649, 1
      %v1730 = vrot.slane %v1651, 1
      %v1731 = vrot.slane %v1653, 1
      %v1732 = vrot.slane %v1655, 1
      %v1733 = vrot.slane %v1657, 1
      %v1734 = vrot.slane %v1659, 1
      %v1735 = vrot.slane %v1661, 1
      %v1736 = vrot.slane %v1663, 1
      %v1737 = vrot.slane %v1665, 1
      %v1738 = vrot.slane %v1667, 1
      %v1739 = vrot.slane %v1669, 1
      %v1740 = vrot.slane %v1671, 1
      %v1741 = vrot.slane %v1673, 1
      %v1742 = vrot.slane %v1675, 1
      %v1743 = vrot.slane %v1677, 1
      %v1744 = vrot.slane %v1679, 1
      %v1745 = vrot.slane %v1681, 1
      %vm1746 = vcmp.lt.s32.totalorder %v650, 7
      %v1747 = vsel %vm1746, %v1744, %v1745
      %v1748 = vsel %vm1746, %v1743, %v1744
      %v1749 = vsel %vm1746, %v1742, %v1743
      %v1750 = vsel %vm1746, %v1741, %v1742
      %v1751 = vsel %vm1746, %v1740, %v1741
      %v1752 = vsel %vm1746, %v1739, %v1740
      %v1753 = vsel %vm1746, %v1738, %v1739
      %v1754 = vsel %vm1746, %v1737, %v1738
      %v1755 = vsel %vm1746, %v1736, %v1737
      %v1756 = vsel %vm1746, %v1735, %v1736
      %v1757 = vsel %vm1746, %v1734, %v1735
      %v1758 = vsel %vm1746, %v1733, %v1734
      %v1759 = vsel %vm1746, %v1732, %v1733
      %v1760 = vsel %vm1746, %v1731, %v1732
      %v1761 = vsel %vm1746, %v1730, %v1731
      %v1762 = vsel %vm1746, %v1729, %v1730
      %v1763 = vsel %vm1746, %v1728, %v1729
      %v1764 = vsel %vm1746, %v1727, %v1728
      %v1765 = vsel %vm1746, %v1726, %v1727
      %v1766 = vsel %vm1746, %v1725, %v1726
      %v1767 = vsel %vm1746, %v1724, %v1725
      %v1768 = vsel %vm1746, %v1723, %v1724
      %v1769 = vsel %vm1746, %v1722, %v1723
      %v1770 = vsel %vm1746, %v1721, %v1722
      %v1771 = vsel %vm1746, %v1720, %v1721
      %v1772 = vsel %vm1746, %v1719, %v1720
      %v1773 = vsel %vm1746, %v1718, %v1719
      %v1774 = vsel %vm1746, %v1717, %v1718
      %v1775 = vsel %vm1746, %v1716, %v1717
      %v1776 = vsel %vm1746, %v1715, %v1716
      %v1777 = vsel %vm1746, %v1714, %v1715
      %v1778 = vsel %vm1746, %v1745, %v1714
      %vm1779 = vmand %vm881, %vm977
      %vm1780 = vmand %vm882, %vm978
      %vm1781 = vmand %vm883, %vm979
      %vm1782 = vmand %vm884, %vm980
      %vm1783 = vmand %vm885, %vm981
      %vm1784 = vmand %vm886, %vm982
      %vm1785 = vmand %vm887, %vm983
      %vm1786 = vmand %vm888, %vm984
      %vm1787 = vmand %vm889, %vm985
      %vm1788 = vmand %vm890, %vm986
      %vm1789 = vmand %vm891, %vm987
      %vm1790 = vmand %vm892, %vm988
      %vm1791 = vmand %vm893, %vm989
      %vm1792 = vmand %vm894, %vm990
      %vm1793 = vmand %vm895, %vm991
      %vm1794 = vmand %vm896, %vm992
      %vm1795 = vmand %vm897, %vm993
      %vm1796 = vmand %vm898, %vm994
      %vm1797 = vmand %vm899, %vm995
      %vm1798 = vmand %vm900, %vm996
      %vm1799 = vmand %vm901, %vm997
      %vm1800 = vmand %vm902, %vm998
      %vm1801 = vmand %vm903, %vm999
      %vm1802 = vmand %vm904, %vm1000
      %vm1803 = vmand %vm905, %vm1001
      %vm1804 = vmand %vm906, %vm1002
      %vm1805 = vmand %vm907, %vm1003
      %vm1806 = vmand %vm908, %vm1004
      %vm1807 = vmand %vm909, %vm1005
      %vm1808 = vmand %vm910, %vm1006
      %vm1809 = vmand %vm911, %vm1007
      %vm1810 = vmand %vm912, %vm1008
      %v1811 = vsel %vm1779, %v1747, 0.0
      %v1812 = vsel %vm1780, %v1778, 0.0
      %v1813 = vsel %vm1781, %v1777, 0.0
      %v1814 = vsel %vm1782, %v1776, 0.0
      %v1815 = vsel %vm1783, %v1775, 0.0
      %v1816 = vsel %vm1784, %v1774, 0.0
      %v1817 = vsel %vm1785, %v1773, 0.0
      %v1818 = vsel %vm1786, %v1772, 0.0
      %v1819 = vsel %vm1787, %v1771, 0.0
      %v1820 = vsel %vm1788, %v1770, 0.0
      %v1821 = vsel %vm1789, %v1769, 0.0
      %v1822 = vsel %vm1790, %v1768, 0.0
      %v1823 = vsel %vm1791, %v1767, 0.0
      %v1824 = vsel %vm1792, %v1766, 0.0
      %v1825 = vsel %vm1793, %v1765, 0.0
      %v1826 = vsel %vm1794, %v1764, 0.0
      %v1827 = vsel %vm1795, %v1763, 0.0
      %v1828 = vsel %vm1796, %v1762, 0.0
      %v1829 = vsel %vm1797, %v1761, 0.0
      %v1830 = vsel %vm1798, %v1760, 0.0
      %v1831 = vsel %vm1799, %v1759, 0.0
      %v1832 = vsel %vm1800, %v1758, 0.0
      %v1833 = vsel %vm1801, %v1757, 0.0
      %v1834 = vsel %vm1802, %v1756, 0.0
      %v1835 = vsel %vm1803, %v1755, 0.0
      %v1836 = vsel %vm1804, %v1754, 0.0
      %v1837 = vsel %vm1805, %v1753, 0.0
      %v1838 = vsel %vm1806, %v1752, 0.0
      %v1839 = vsel %vm1807, %v1751, 0.0
      %v1840 = vsel %vm1808, %v1750, 0.0
      %v1841 = vsel %vm1809, %v1749, 0.0
      %v1842 = vsel %vm1810, %v1748, 0.0
      %1875 = vrot.lane.b32.xlu0 %v1811, 32
      %v1876 = vpop.permute.xlu0 %1875
      %1877 = vrot.lane.b32.xlu0 %v1812, 32
      %v1878 = vpop.permute.xlu0 %1877
      %1879 = vrot.lane.b32.xlu0 %v1813, 32
      %v1880 = vpop.permute.xlu0 %1879
      %1881 = vrot.lane.b32.xlu0 %v1814, 32
      %v1882 = vpop.permute.xlu0 %1881
      %1883 = vrot.lane.b32.xlu0 %v1815, 32
      %v1884 = vpop.permute.xlu0 %1883
      %1885 = vrot.lane.b32.xlu0 %v1816, 32
      %v1886 = vpop.permute.xlu0 %1885
      %1887 = vrot.lane.b32.xlu0 %v1817, 32
      %v1888 = vpop.permute.xlu0 %1887
      %1889 = vrot.lane.b32.xlu0 %v1818, 32
      %v1890 = vpop.permute.xlu0 %1889
      %1891 = vrot.lane.b32.xlu0 %v1819, 32
      %v1892 = vpop.permute.xlu0 %1891
      %1893 = vrot.lane.b32.xlu0 %v1820, 32
      %v1894 = vpop.permute.xlu0 %1893
      %1895 = vrot.lane.b32.xlu0 %v1821, 32
      %v1896 = vpop.permute.xlu0 %1895
      %1897 = vrot.lane.b32.xlu0 %v1822, 32
      %v1898 = vpop.permute.xlu0 %1897
      %1899 = vrot.lane.b32.xlu0 %v1823, 32
      %v1900 = vpop.permute.xlu0 %1899
      %1901 = vrot.lane.b32.xlu0 %v1824, 32
      %v1902 = vpop.permute.xlu0 %1901
      %1903 = vrot.lane.b32.xlu0 %v1825, 32
      %v1904 = vpop.permute.xlu0 %1903
      %1905 = vrot.lane.b32.xlu0 %v1826, 32
      %v1906 = vpop.permute.xlu0 %1905
      %1907 = vrot.lane.b32.xlu0 %v1827, 32
      %v1908 = vpop.permute.xlu0 %1907
      %1909 = vrot.lane.b32.xlu0 %v1828, 32
      %v1910 = vpop.permute.xlu0 %1909
      %1911 = vrot.lane.b32.xlu0 %v1829, 32
      %v1912 = vpop.permute.xlu0 %1911
      %1913 = vrot.lane.b32.xlu0 %v1830, 32
      %v1914 = vpop.permute.xlu0 %1913
      %1915 = vrot.lane.b32.xlu0 %v1831, 32
      %v1916 = vpop.permute.xlu0 %1915
      %1917 = vrot.lane.b32.xlu0 %v1832, 32
      %v1918 = vpop.permute.xlu0 %1917
      %1919 = vrot.lane.b32.xlu0 %v1833, 32
      %v1920 = vpop.permute.xlu0 %1919
      %1921 = vrot.lane.b32.xlu0 %v1834, 32
      %v1922 = vpop.permute.xlu0 %1921
      %1923 = vrot.lane.b32.xlu0 %v1835, 32
      %v1924 = vpop.permute.xlu0 %1923
      %1925 = vrot.lane.b32.xlu0 %v1836, 32
      %v1926 = vpop.permute.xlu0 %1925
      %1927 = vrot.lane.b32.xlu0 %v1837, 32
      %v1928 = vpop.permute.xlu0 %1927
      %1929 = vrot.lane.b32.xlu0 %v1838, 32
      %v1930 = vpop.permute.xlu0 %1929
      %1931 = vrot.lane.b32.xlu0 %v1839, 32
      %v1932 = vpop.permute.xlu0 %1931
      %1933 = vrot.lane.b32.xlu0 %v1840, 32
      %v1934 = vpop.permute.xlu0 %1933
      %1935 = vrot.lane.b32.xlu0 %v1841, 32
      %v1936 = vpop.permute.xlu0 %1935
      %1937 = vrot.lane.b32.xlu0 %v1842, 32
      %v1938 = vpop.permute.xlu0 %1937
      %v1971 = vadd.f32 %v1586, %v1876
      %v1972 = vadd.f32 %v1587, %v1878
      %v1973 = vadd.f32 %v1588, %v1880
      %v1974 = vadd.f32 %v1589, %v1882
      %v1975 = vadd.f32 %v1590, %v1884
      %v1976 = vadd.f32 %v1591, %v1886
      %v1977 = vadd.f32 %v1592, %v1888
      %v1978 = vadd.f32 %v1593, %v1890
      %v1979 = vadd.f32 %v1594, %v1892
      %v1980 = vadd.f32 %v1595, %v1894
      %v1981 = vadd.f32 %v1596, %v1896
      %v1982 = vadd.f32 %v1597, %v1898
      %v1983 = vadd.f32 %v1598, %v1900
      %v1984 = vadd.f32 %v1599, %v1902
      %v1985 = vadd.f32 %v1600, %v1904
      %v1986 = vadd.f32 %v1601, %v1906
      %v1987 = vadd.f32 %v1602, %v1908
      %v1988 = vadd.f32 %v1603, %v1910
      %v1989 = vadd.f32 %v1604, %v1912
      %v1990 = vadd.f32 %v1605, %v1914
      %v1991 = vadd.f32 %v1606, %v1916
      %v1992 = vadd.f32 %v1607, %v1918
      %v1993 = vadd.f32 %v1608, %v1920
      %v1994 = vadd.f32 %v1609, %v1922
      %v1995 = vadd.f32 %v1610, %v1924
      %v1996 = vadd.f32 %v1611, %v1926
      %v1997 = vadd.f32 %v1612, %v1928
      %v1998 = vadd.f32 %v1613, %v1930
      %v1999 = vadd.f32 %v1614, %v1932
      %v2000 = vadd.f32 %v1615, %v1934
      %v2001 = vadd.f32 %v1616, %v1936
      %v2002 = vadd.f32 %v1617, %v1938
      %2003 = vrot.lane.b32.xlu0 %v570, 104
      %v2004 = vpop.permute.xlu0 %2003
      %2005 = vrot.lane.b32.xlu0 %v572, 104
      %v2006 = vpop.permute.xlu0 %2005
      %2007 = vrot.lane.b32.xlu0 %v575, 104
      %v2008 = vpop.permute.xlu0 %2007
      %2009 = vrot.lane.b32.xlu0 %v577, 104
      %v2010 = vpop.permute.xlu0 %2009
      %2011 = vrot.lane.b32.xlu0 %v580, 104
      %v2012 = vpop.permute.xlu0 %2011
      %2013 = vrot.lane.b32.xlu0 %v582, 104
      %v2014 = vpop.permute.xlu0 %2013
      %2015 = vrot.lane.b32.xlu0 %v585, 104
      %v2016 = vpop.permute.xlu0 %2015
      %2017 = vrot.lane.b32.xlu0 %v587, 104
      %v2018 = vpop.permute.xlu0 %2017
      %2019 = vrot.lane.b32.xlu0 %v590, 104
      %v2020 = vpop.permute.xlu0 %2019
      %2021 = vrot.lane.b32.xlu0 %v592, 104
      %v2022 = vpop.permute.xlu0 %2021
      %2023 = vrot.lane.b32.xlu0 %v595, 104
      %v2024 = vpop.permute.xlu0 %2023
      %2025 = vrot.lane.b32.xlu0 %v597, 104
      %v2026 = vpop.permute.xlu0 %2025
      %2027 = vrot.lane.b32.xlu0 %v600, 104
      %v2028 = vpop.permute.xlu0 %2027
      %2029 = vrot.lane.b32.xlu0 %v602, 104
      %v2030 = vpop.permute.xlu0 %2029
      %2031 = vrot.lane.b32.xlu0 %v605, 104
      %v2032 = vpop.permute.xlu0 %2031
      %2033 = vrot.lane.b32.xlu0 %v607, 104
      %v2034 = vpop.permute.xlu0 %2033
      %2035 = vrot.lane.b32.xlu0 %v610, 104
      %v2036 = vpop.permute.xlu0 %2035
      %2037 = vrot.lane.b32.xlu0 %v612, 104
      %v2038 = vpop.permute.xlu0 %2037
      %2039 = vrot.lane.b32.xlu0 %v615, 104
      %v2040 = vpop.permute.xlu0 %2039
      %2041 = vrot.lane.b32.xlu0 %v617, 104
      %v2042 = vpop.permute.xlu0 %2041
      %2043 = vrot.lane.b32.xlu0 %v620, 104
      %v2044 = vpop.permute.xlu0 %2043
      %2045 = vrot.lane.b32.xlu0 %v622, 104
      %v2046 = vpop.permute.xlu0 %2045
      %2047 = vrot.lane.b32.xlu0 %v625, 104
      %v2048 = vpop.permute.xlu0 %2047
      %2049 = vrot.lane.b32.xlu0 %v627, 104
      %v2050 = vpop.permute.xlu0 %2049
      %2051 = vrot.lane.b32.xlu0 %v630, 104
      %v2052 = vpop.permute.xlu0 %2051
      %2053 = vrot.lane.b32.xlu0 %v632, 104
      %v2054 = vpop.permute.xlu0 %2053
      %2055 = vrot.lane.b32.xlu0 %v635, 104
      %v2056 = vpop.permute.xlu0 %2055
      %2057 = vrot.lane.b32.xlu0 %v637, 104
      %v2058 = vpop.permute.xlu0 %2057
      %2059 = vrot.lane.b32.xlu0 %v640, 104
      %v2060 = vpop.permute.xlu0 %2059
      %2061 = vrot.lane.b32.xlu0 %v642, 104
      %v2062 = vpop.permute.xlu0 %2061
      %2063 = vrot.lane.b32.xlu0 %v645, 104
      %v2064 = vpop.permute.xlu0 %2063
      %2065 = vrot.lane.b32.xlu0 %v647, 104
      %v2066 = vpop.permute.xlu0 %2065
      %v2099 = vrot.slane %v2004, 7
      %v2100 = vrot.slane %v2006, 7
      %v2101 = vrot.slane %v2008, 7
      %v2102 = vrot.slane %v2010, 7
      %v2103 = vrot.slane %v2012, 7
      %v2104 = vrot.slane %v2014, 7
      %v2105 = vrot.slane %v2016, 7
      %v2106 = vrot.slane %v2018, 7
      %v2107 = vrot.slane %v2020, 7
      %v2108 = vrot.slane %v2022, 7
      %v2109 = vrot.slane %v2024, 7
      %v2110 = vrot.slane %v2026, 7
      %v2111 = vrot.slane %v2028, 7
      %v2112 = vrot.slane %v2030, 7
      %v2113 = vrot.slane %v2032, 7
      %v2114 = vrot.slane %v2034, 7
      %v2115 = vrot.slane %v2036, 7
      %v2116 = vrot.slane %v2038, 7
      %v2117 = vrot.slane %v2040, 7
      %v2118 = vrot.slane %v2042, 7
      %v2119 = vrot.slane %v2044, 7
      %v2120 = vrot.slane %v2046, 7
      %v2121 = vrot.slane %v2048, 7
      %v2122 = vrot.slane %v2050, 7
      %v2123 = vrot.slane %v2052, 7
      %v2124 = vrot.slane %v2054, 7
      %v2125 = vrot.slane %v2056, 7
      %v2126 = vrot.slane %v2058, 7
      %v2127 = vrot.slane %v2060, 7
      %v2128 = vrot.slane %v2062, 7
      %v2129 = vrot.slane %v2064, 7
      %v2130 = vrot.slane %v2066, 7
      %v2131 = vsel %vm1041, %v2129, %v2130
      %v2132 = vsel %vm1041, %v2128, %v2129
      %v2133 = vsel %vm1041, %v2127, %v2128
      %v2134 = vsel %vm1041, %v2126, %v2127
      %v2135 = vsel %vm1041, %v2125, %v2126
      %v2136 = vsel %vm1041, %v2124, %v2125
      %v2137 = vsel %vm1041, %v2123, %v2124
      %v2138 = vsel %vm1041, %v2122, %v2123
      %v2139 = vsel %vm1041, %v2121, %v2122
      %v2140 = vsel %vm1041, %v2120, %v2121
      %v2141 = vsel %vm1041, %v2119, %v2120
      %v2142 = vsel %vm1041, %v2118, %v2119
      %v2143 = vsel %vm1041, %v2117, %v2118
      %v2144 = vsel %vm1041, %v2116, %v2117
      %v2145 = vsel %vm1041, %v2115, %v2116
      %v2146 = vsel %vm1041, %v2114, %v2115
      %v2147 = vsel %vm1041, %v2113, %v2114
      %v2148 = vsel %vm1041, %v2112, %v2113
      %v2149 = vsel %vm1041, %v2111, %v2112
      %v2150 = vsel %vm1041, %v2110, %v2111
      %v2151 = vsel %vm1041, %v2109, %v2110
      %v2152 = vsel %vm1041, %v2108, %v2109
      %v2153 = vsel %vm1041, %v2107, %v2108
      %v2154 = vsel %vm1041, %v2106, %v2107
      %v2155 = vsel %vm1041, %v2105, %v2106
      %v2156 = vsel %vm1041, %v2104, %v2105
      %v2157 = vsel %vm1041, %v2103, %v2104
      %v2158 = vsel %vm1041, %v2102, %v2103
      %v2159 = vsel %vm1041, %v2101, %v2102
      %v2160 = vsel %vm1041, %v2100, %v2101
      %v2161 = vsel %vm1041, %v2099, %v2100
      %v2162 = vsel %vm1041, %v2130, %v2099
      %v2163 = vsel %vm945, %v2162, 0.0
      %v2164 = vsel %vm946, %v2161, 0.0
      %v2165 = vsel %vm947, %v2160, 0.0
      %v2166 = vsel %vm948, %v2159, 0.0
      %v2167 = vsel %vm949, %v2158, 0.0
      %v2168 = vsel %vm950, %v2157, 0.0
      %v2169 = vsel %vm951, %v2156, 0.0
      %v2170 = vsel %vm952, %v2155, 0.0
      %v2171 = vsel %vm953, %v2154, 0.0
      %v2172 = vsel %vm954, %v2153, 0.0
      %v2173 = vsel %vm955, %v2152, 0.0
      %v2174 = vsel %vm956, %v2151, 0.0
      %v2175 = vsel %vm957, %v2150, 0.0
      %v2176 = vsel %vm958, %v2149, 0.0
      %v2177 = vsel %vm959, %v2148, 0.0
      %v2178 = vsel %vm960, %v2147, 0.0
      %v2179 = vsel %vm961, %v2146, 0.0
      %v2180 = vsel %vm962, %v2145, 0.0
      %v2181 = vsel %vm963, %v2144, 0.0
      %v2182 = vsel %vm964, %v2143, 0.0
      %v2183 = vsel %vm965, %v2142, 0.0
      %v2184 = vsel %vm966, %v2141, 0.0
      %v2185 = vsel %vm967, %v2140, 0.0
      %v2186 = vsel %vm968, %v2139, 0.0
      %v2187 = vsel %vm969, %v2138, 0.0
      %v2188 = vsel %vm970, %v2137, 0.0
      %v2189 = vsel %vm971, %v2136, 0.0
      %v2190 = vsel %vm972, %v2135, 0.0
      %v2191 = vsel %vm973, %v2134, 0.0
      %v2192 = vsel %vm974, %v2133, 0.0
      %v2193 = vsel %vm975, %v2132, 0.0
      %v2194 = vsel %vm976, %v2131, 0.0
      %2227 = vrot.lane.b32.xlu0 %v2163, 32
      %v2228 = vpop.permute.xlu0 %2227
      %2229 = vrot.lane.b32.xlu0 %v2164, 32
      %v2230 = vpop.permute.xlu0 %2229
      %2231 = vrot.lane.b32.xlu0 %v2165, 32
      %v2232 = vpop.permute.xlu0 %2231
      %2233 = vrot.lane.b32.xlu0 %v2166, 32
      %v2234 = vpop.permute.xlu0 %2233
      %2235 = vrot.lane.b32.xlu0 %v2167, 32
      %v2236 = vpop.permute.xlu0 %2235
      %2237 = vrot.lane.b32.xlu0 %v2168, 32
      %v2238 = vpop.permute.xlu0 %2237
      %2239 = vrot.lane.b32.xlu0 %v2169, 32
      %v2240 = vpop.permute.xlu0 %2239
      %2241 = vrot.lane.b32.xlu0 %v2170, 32
      %v2242 = vpop.permute.xlu0 %2241
      %2243 = vrot.lane.b32.xlu0 %v2171, 32
      %v2244 = vpop.permute.xlu0 %2243
      %2245 = vrot.lane.b32.xlu0 %v2172, 32
      %v2246 = vpop.permute.xlu0 %2245
      %2247 = vrot.lane.b32.xlu0 %v2173, 32
      %v2248 = vpop.permute.xlu0 %2247
      %2249 = vrot.lane.b32.xlu0 %v2174, 32
      %v2250 = vpop.permute.xlu0 %2249
      %2251 = vrot.lane.b32.xlu0 %v2175, 32
      %v2252 = vpop.permute.xlu0 %2251
      %2253 = vrot.lane.b32.xlu0 %v2176, 32
      %v2254 = vpop.permute.xlu0 %2253
      %2255 = vrot.lane.b32.xlu0 %v2177, 32
      %v2256 = vpop.permute.xlu0 %2255
      %2257 = vrot.lane.b32.xlu0 %v2178, 32
      %v2258 = vpop.permute.xlu0 %2257
      %2259 = vrot.lane.b32.xlu0 %v2179, 32
      %v2260 = vpop.permute.xlu0 %2259
      %2261 = vrot.lane.b32.xlu0 %v2180, 32
      %v2262 = vpop.permute.xlu0 %2261
      %2263 = vrot.lane.b32.xlu0 %v2181, 32
      %v2264 = vpop.permute.xlu0 %2263
      %2265 = vrot.lane.b32.xlu0 %v2182, 32
      %v2266 = vpop.permute.xlu0 %2265
      %2267 = vrot.lane.b32.xlu0 %v2183, 32
      %v2268 = vpop.permute.xlu0 %2267
      %2269 = vrot.lane.b32.xlu0 %v2184, 32
      %v2270 = vpop.permute.xlu0 %2269
      %2271 = vrot.lane.b32.xlu0 %v2185, 32
      %v2272 = vpop.permute.xlu0 %2271
      %2273 = vrot.lane.b32.xlu0 %v2186, 32
      %v2274 = vpop.permute.xlu0 %2273
      %2275 = vrot.lane.b32.xlu0 %v2187, 32
      %v2276 = vpop.permute.xlu0 %2275
      %2277 = vrot.lane.b32.xlu0 %v2188, 32
      %v2278 = vpop.permute.xlu0 %2277
      %2279 = vrot.lane.b32.xlu0 %v2189, 32
      %v2280 = vpop.permute.xlu0 %2279
      %2281 = vrot.lane.b32.xlu0 %v2190, 32
      %v2282 = vpop.permute.xlu0 %2281
      %2283 = vrot.lane.b32.xlu0 %v2191, 32
      %v2284 = vpop.permute.xlu0 %2283
      %2285 = vrot.lane.b32.xlu0 %v2192, 32
      %v2286 = vpop.permute.xlu0 %2285
      %2287 = vrot.lane.b32.xlu0 %v2193, 32
      %v2288 = vpop.permute.xlu0 %2287
      %2289 = vrot.lane.b32.xlu0 %v2194, 32
      %v2290 = vpop.permute.xlu0 %2289
      %v2323 = vadd.f32 %v1971, %v2228
      %v2324 = vadd.f32 %v1972, %v2230
      %v2325 = vadd.f32 %v1973, %v2232
      %v2326 = vadd.f32 %v1974, %v2234
      %v2327 = vadd.f32 %v1975, %v2236
      %v2328 = vadd.f32 %v1976, %v2238
      %v2329 = vadd.f32 %v1977, %v2240
      %v2330 = vadd.f32 %v1978, %v2242
      %v2331 = vadd.f32 %v1979, %v2244
      %v2332 = vadd.f32 %v1980, %v2246
      %v2333 = vadd.f32 %v1981, %v2248
      %v2334 = vadd.f32 %v1982, %v2250
      %v2335 = vadd.f32 %v1983, %v2252
      %v2336 = vadd.f32 %v1984, %v2254
      %v2337 = vadd.f32 %v1985, %v2256
      %v2338 = vadd.f32 %v1986, %v2258
      %v2339 = vadd.f32 %v1987, %v2260
      %v2340 = vadd.f32 %v1988, %v2262
      %v2341 = vadd.f32 %v1989, %v2264
      %v2342 = vadd.f32 %v1990, %v2266
      %v2343 = vadd.f32 %v1991, %v2268
      %v2344 = vadd.f32 %v1992, %v2270
      %v2345 = vadd.f32 %v1993, %v2272
      %v2346 = vadd.f32 %v1994, %v2274
      %v2347 = vadd.f32 %v1995, %v2276
      %v2348 = vadd.f32 %v1996, %v2278
      %v2349 = vadd.f32 %v1997, %v2280
      %v2350 = vadd.f32 %v1998, %v2282
      %v2351 = vadd.f32 %v1999, %v2284
      %v2352 = vadd.f32 %v2000, %v2286
      %v2353 = vadd.f32 %v2001, %v2288
      %v2354 = vadd.f32 %v2002, %v2290
      %2355 = vrot.lane.b32.xlu0 %v570, 88
      %v2356 = vpop.permute.xlu0 %2355
      %2357 = vrot.lane.b32.xlu0 %v572, 88
      %v2358 = vpop.permute.xlu0 %2357
      %2359 = vrot.lane.b32.xlu0 %v575, 88
      %v2360 = vpop.permute.xlu0 %2359
      %2361 = vrot.lane.b32.xlu0 %v577, 88
      %v2362 = vpop.permute.xlu0 %2361
      %2363 = vrot.lane.b32.xlu0 %v580, 88
      %v2364 = vpop.permute.xlu0 %2363
      %2365 = vrot.lane.b32.xlu0 %v582, 88
      %v2366 = vpop.permute.xlu0 %2365
      %2367 = vrot.lane.b32.xlu0 %v585, 88
      %v2368 = vpop.permute.xlu0 %2367
      %2369 = vrot.lane.b32.xlu0 %v587, 88
      %v2370 = vpop.permute.xlu0 %2369
      %2371 = vrot.lane.b32.xlu0 %v590, 88
      %v2372 = vpop.permute.xlu0 %2371
      %2373 = vrot.lane.b32.xlu0 %v592, 88
      %v2374 = vpop.permute.xlu0 %2373
      %2375 = vrot.lane.b32.xlu0 %v595, 88
      %v2376 = vpop.permute.xlu0 %2375
      %2377 = vrot.lane.b32.xlu0 %v597, 88
      %v2378 = vpop.permute.xlu0 %2377
      %2379 = vrot.lane.b32.xlu0 %v600, 88
      %v2380 = vpop.permute.xlu0 %2379
      %2381 = vrot.lane.b32.xlu0 %v602, 88
      %v2382 = vpop.permute.xlu0 %2381
      %2383 = vrot.lane.b32.xlu0 %v605, 88
      %v2384 = vpop.permute.xlu0 %2383
      %2385 = vrot.lane.b32.xlu0 %v607, 88
      %v2386 = vpop.permute.xlu0 %2385
      %2387 = vrot.lane.b32.xlu0 %v610, 88
      %v2388 = vpop.permute.xlu0 %2387
      %2389 = vrot.lane.b32.xlu0 %v612, 88
      %v2390 = vpop.permute.xlu0 %2389
      %2391 = vrot.lane.b32.xlu0 %v615, 88
      %v2392 = vpop.permute.xlu0 %2391
      %2393 = vrot.lane.b32.xlu0 %v617, 88
      %v2394 = vpop.permute.xlu0 %2393
      %2395 = vrot.lane.b32.xlu0 %v620, 88
      %v2396 = vpop.permute.xlu0 %2395
      %2397 = vrot.lane.b32.xlu0 %v622, 88
      %v2398 = vpop.permute.xlu0 %2397
      %2399 = vrot.lane.b32.xlu0 %v625, 88
      %v2400 = vpop.permute.xlu0 %2399
      %2401 = vrot.lane.b32.xlu0 %v627, 88
      %v2402 = vpop.permute.xlu0 %2401
      %2403 = vrot.lane.b32.xlu0 %v630, 88
      %v2404 = vpop.permute.xlu0 %2403
      %2405 = vrot.lane.b32.xlu0 %v632, 88
      %v2406 = vpop.permute.xlu0 %2405
      %2407 = vrot.lane.b32.xlu0 %v635, 88
      %v2408 = vpop.permute.xlu0 %2407
      %2409 = vrot.lane.b32.xlu0 %v637, 88
      %v2410 = vpop.permute.xlu0 %2409
      %2411 = vrot.lane.b32.xlu0 %v640, 88
      %v2412 = vpop.permute.xlu0 %2411
      %2413 = vrot.lane.b32.xlu0 %v642, 88
      %v2414 = vpop.permute.xlu0 %2413
      %2415 = vrot.lane.b32.xlu0 %v645, 88
      %v2416 = vpop.permute.xlu0 %2415
      %2417 = vrot.lane.b32.xlu0 %v647, 88
      %v2418 = vpop.permute.xlu0 %2417
      %v2451 = vrot.slane %v2356, 1
      %v2452 = vrot.slane %v2358, 1
      %v2453 = vrot.slane %v2360, 1
      %v2454 = vrot.slane %v2362, 1
      %v2455 = vrot.slane %v2364, 1
      %v2456 = vrot.slane %v2366, 1
      %v2457 = vrot.slane %v2368, 1
      %v2458 = vrot.slane %v2370, 1
      %v2459 = vrot.slane %v2372, 1
      %v2460 = vrot.slane %v2374, 1
      %v2461 = vrot.slane %v2376, 1
      %v2462 = vrot.slane %v2378, 1
      %v2463 = vrot.slane %v2380, 1
      %v2464 = vrot.slane %v2382, 1
      %v2465 = vrot.slane %v2384, 1
      %v2466 = vrot.slane %v2386, 1
      %v2467 = vrot.slane %v2388, 1
      %v2468 = vrot.slane %v2390, 1
      %v2469 = vrot.slane %v2392, 1
      %v2470 = vrot.slane %v2394, 1
      %v2471 = vrot.slane %v2396, 1
      %v2472 = vrot.slane %v2398, 1
      %v2473 = vrot.slane %v2400, 1
      %v2474 = vrot.slane %v2402, 1
      %v2475 = vrot.slane %v2404, 1
      %v2476 = vrot.slane %v2406, 1
      %v2477 = vrot.slane %v2408, 1
      %v2478 = vrot.slane %v2410, 1
      %v2479 = vrot.slane %v2412, 1
      %v2480 = vrot.slane %v2414, 1
      %v2481 = vrot.slane %v2416, 1
      %v2482 = vrot.slane %v2418, 1
      %v2483 = vsel %vm1746, %v2481, %v2482
      %v2484 = vsel %vm1746, %v2480, %v2481
      %v2485 = vsel %vm1746, %v2479, %v2480
      %v2486 = vsel %vm1746, %v2478, %v2479
      %v2487 = vsel %vm1746, %v2477, %v2478
      %v2488 = vsel %vm1746, %v2476, %v2477
      %v2489 = vsel %vm1746, %v2475, %v2476
      %v2490 = vsel %vm1746, %v2474, %v2475
      %v2491 = vsel %vm1746, %v2473, %v2474
      %v2492 = vsel %vm1746, %v2472, %v2473
      %v2493 = vsel %vm1746, %v2471, %v2472
      %v2494 = vsel %vm1746, %v2470, %v2471
      %v2495 = vsel %vm1746, %v2469, %v2470
      %v2496 = vsel %vm1746, %v2468, %v2469
      %v2497 = vsel %vm1746, %v2467, %v2468
      %v2498 = vsel %vm1746, %v2466, %v2467
      %v2499 = vsel %vm1746, %v2465, %v2466
      %v2500 = vsel %vm1746, %v2464, %v2465
      %v2501 = vsel %vm1746, %v2463, %v2464
      %v2502 = vsel %vm1746, %v2462, %v2463
      %v2503 = vsel %vm1746, %v2461, %v2462
      %v2504 = vsel %vm1746, %v2460, %v2461
      %v2505 = vsel %vm1746, %v2459, %v2460
      %v2506 = vsel %vm1746, %v2458, %v2459
      %v2507 = vsel %vm1746, %v2457, %v2458
      %v2508 = vsel %vm1746, %v2456, %v2457
      %v2509 = vsel %vm1746, %v2455, %v2456
      %v2510 = vsel %vm1746, %v2454, %v2455
      %v2511 = vsel %vm1746, %v2453, %v2454
      %v2512 = vsel %vm1746, %v2452, %v2453
      %v2513 = vsel %vm1746, %v2451, %v2452
      %v2514 = vsel %vm1746, %v2482, %v2451
      %v2515 = vsel %vm977, %v2513, 0.0
      %v2516 = vsel %vm978, %v2512, 0.0
      %v2517 = vsel %vm979, %v2511, 0.0
      %v2518 = vsel %vm980, %v2510, 0.0
      %v2519 = vsel %vm981, %v2509, 0.0
      %v2520 = vsel %vm982, %v2508, 0.0
      %v2521 = vsel %vm983, %v2507, 0.0
      %v2522 = vsel %vm984, %v2506, 0.0
      %v2523 = vsel %vm985, %v2505, 0.0
      %v2524 = vsel %vm986, %v2504, 0.0
      %v2525 = vsel %vm987, %v2503, 0.0
      %v2526 = vsel %vm988, %v2502, 0.0
      %v2527 = vsel %vm989, %v2501, 0.0
      %v2528 = vsel %vm990, %v2500, 0.0
      %v2529 = vsel %vm991, %v2499, 0.0
      %v2530 = vsel %vm992, %v2498, 0.0
      %v2531 = vsel %vm993, %v2497, 0.0
      %v2532 = vsel %vm994, %v2496, 0.0
      %v2533 = vsel %vm995, %v2495, 0.0
      %v2534 = vsel %vm996, %v2494, 0.0
      %v2535 = vsel %vm997, %v2493, 0.0
      %v2536 = vsel %vm998, %v2492, 0.0
      %v2537 = vsel %vm999, %v2491, 0.0
      %v2538 = vsel %vm1000, %v2490, 0.0
      %v2539 = vsel %vm1001, %v2489, 0.0
      %v2540 = vsel %vm1002, %v2488, 0.0
      %v2541 = vsel %vm1003, %v2487, 0.0
      %v2542 = vsel %vm1004, %v2486, 0.0
      %v2543 = vsel %vm1005, %v2485, 0.0
      %v2544 = vsel %vm1006, %v2484, 0.0
      %v2545 = vsel %vm1007, %v2483, 0.0
      %v2546 = vsel %vm1008, %v2514, 0.0
      %2579 = vrot.lane.b32.xlu0 %v2515, 32
      %v2580 = vpop.permute.xlu0 %2579
      %2581 = vrot.lane.b32.xlu0 %v2516, 32
      %v2582 = vpop.permute.xlu0 %2581
      %2583 = vrot.lane.b32.xlu0 %v2517, 32
      %v2584 = vpop.permute.xlu0 %2583
      %2585 = vrot.lane.b32.xlu0 %v2518, 32
      %v2586 = vpop.permute.xlu0 %2585
      %2587 = vrot.lane.b32.xlu0 %v2519, 32
      %v2588 = vpop.permute.xlu0 %2587
      %2589 = vrot.lane.b32.xlu0 %v2520, 32
      %v2590 = vpop.permute.xlu0 %2589
      %2591 = vrot.lane.b32.xlu0 %v2521, 32
      %v2592 = vpop.permute.xlu0 %2591
      %2593 = vrot.lane.b32.xlu0 %v2522, 32
      %v2594 = vpop.permute.xlu0 %2593
      %2595 = vrot.lane.b32.xlu0 %v2523, 32
      %v2596 = vpop.permute.xlu0 %2595
      %2597 = vrot.lane.b32.xlu0 %v2524, 32
      %v2598 = vpop.permute.xlu0 %2597
      %2599 = vrot.lane.b32.xlu0 %v2525, 32
      %v2600 = vpop.permute.xlu0 %2599
      %2601 = vrot.lane.b32.xlu0 %v2526, 32
      %v2602 = vpop.permute.xlu0 %2601
      %2603 = vrot.lane.b32.xlu0 %v2527, 32
      %v2604 = vpop.permute.xlu0 %2603
      %2605 = vrot.lane.b32.xlu0 %v2528, 32
      %v2606 = vpop.permute.xlu0 %2605
      %2607 = vrot.lane.b32.xlu0 %v2529, 32
      %v2608 = vpop.permute.xlu0 %2607
      %2609 = vrot.lane.b32.xlu0 %v2530, 32
      %v2610 = vpop.permute.xlu0 %2609
      %2611 = vrot.lane.b32.xlu0 %v2531, 32
      %v2612 = vpop.permute.xlu0 %2611
      %2613 = vrot.lane.b32.xlu0 %v2532, 32
      %v2614 = vpop.permute.xlu0 %2613
      %2615 = vrot.lane.b32.xlu0 %v2533, 32
      %v2616 = vpop.permute.xlu0 %2615
      %2617 = vrot.lane.b32.xlu0 %v2534, 32
      %v2618 = vpop.permute.xlu0 %2617
      %2619 = vrot.lane.b32.xlu0 %v2535, 32
      %v2620 = vpop.permute.xlu0 %2619
      %2621 = vrot.lane.b32.xlu0 %v2536, 32
      %v2622 = vpop.permute.xlu0 %2621
      %2623 = vrot.lane.b32.xlu0 %v2537, 32
      %v2624 = vpop.permute.xlu0 %2623
      %2625 = vrot.lane.b32.xlu0 %v2538, 32
      %v2626 = vpop.permute.xlu0 %2625
      %2627 = vrot.lane.b32.xlu0 %v2539, 32
      %v2628 = vpop.permute.xlu0 %2627
      %2629 = vrot.lane.b32.xlu0 %v2540, 32
      %v2630 = vpop.permute.xlu0 %2629
      %2631 = vrot.lane.b32.xlu0 %v2541, 32
      %v2632 = vpop.permute.xlu0 %2631
      %2633 = vrot.lane.b32.xlu0 %v2542, 32
      %v2634 = vpop.permute.xlu0 %2633
      %2635 = vrot.lane.b32.xlu0 %v2543, 32
      %v2636 = vpop.permute.xlu0 %2635
      %2637 = vrot.lane.b32.xlu0 %v2544, 32
      %v2638 = vpop.permute.xlu0 %2637
      %2639 = vrot.lane.b32.xlu0 %v2545, 32
      %v2640 = vpop.permute.xlu0 %2639
      %2641 = vrot.lane.b32.xlu0 %v2546, 32
      %v2642 = vpop.permute.xlu0 %2641
      %v2675 = vadd.f32 %v2323, %v2580
      %v2676 = vadd.f32 %v2324, %v2582
      %v2677 = vadd.f32 %v2325, %v2584
      %v2678 = vadd.f32 %v2326, %v2586
      %v2679 = vadd.f32 %v2327, %v2588
      %v2680 = vadd.f32 %v2328, %v2590
      %v2681 = vadd.f32 %v2329, %v2592
      %v2682 = vadd.f32 %v2330, %v2594
      %v2683 = vadd.f32 %v2331, %v2596
      %v2684 = vadd.f32 %v2332, %v2598
      %v2685 = vadd.f32 %v2333, %v2600
      %v2686 = vadd.f32 %v2334, %v2602
      %v2687 = vadd.f32 %v2335, %v2604
      %v2688 = vadd.f32 %v2336, %v2606
      %v2689 = vadd.f32 %v2337, %v2608
      %v2690 = vadd.f32 %v2338, %v2610
      %v2691 = vadd.f32 %v2339, %v2612
      %v2692 = vadd.f32 %v2340, %v2614
      %v2693 = vadd.f32 %v2341, %v2616
      %v2694 = vadd.f32 %v2342, %v2618
      %v2695 = vadd.f32 %v2343, %v2620
      %v2696 = vadd.f32 %v2344, %v2622
      %v2697 = vadd.f32 %v2345, %v2624
      %v2698 = vadd.f32 %v2346, %v2626
      %v2699 = vadd.f32 %v2347, %v2628
      %v2700 = vadd.f32 %v2348, %v2630
      %v2701 = vadd.f32 %v2349, %v2632
      %v2702 = vadd.f32 %v2350, %v2634
      %v2703 = vadd.f32 %v2351, %v2636
      %v2704 = vadd.f32 %v2352, %v2638
      %v2705 = vadd.f32 %v2353, %v2640
      %v2706 = vadd.f32 %v2354, %v2642
      %2707 = vrot.lane.b32.xlu0 %v570, 80
      %v2708 = vpop.permute.xlu0 %2707
      %2709 = vrot.lane.b32.xlu0 %v572, 80
      %v2710 = vpop.permute.xlu0 %2709
      %2711 = vrot.lane.b32.xlu0 %v575, 80
      %v2712 = vpop.permute.xlu0 %2711
      %2713 = vrot.lane.b32.xlu0 %v577, 80
      %v2714 = vpop.permute.xlu0 %2713
      %2715 = vrot.lane.b32.xlu0 %v580, 80
      %v2716 = vpop.permute.xlu0 %2715
      %2717 = vrot.lane.b32.xlu0 %v582, 80
      %v2718 = vpop.permute.xlu0 %2717
      %2719 = vrot.lane.b32.xlu0 %v585, 80
      %v2720 = vpop.permute.xlu0 %2719
      %2721 = vrot.lane.b32.xlu0 %v587, 80
      %v2722 = vpop.permute.xlu0 %2721
      %2723 = vrot.lane.b32.xlu0 %v590, 80
      %v2724 = vpop.permute.xlu0 %2723
      %2725 = vrot.lane.b32.xlu0 %v592, 80
      %v2726 = vpop.permute.xlu0 %2725
      %2727 = vrot.lane.b32.xlu0 %v595, 80
      %v2728 = vpop.permute.xlu0 %2727
      %2729 = vrot.lane.b32.xlu0 %v597, 80
      %v2730 = vpop.permute.xlu0 %2729
      %2731 = vrot.lane.b32.xlu0 %v600, 80
      %v2732 = vpop.permute.xlu0 %2731
      %2733 = vrot.lane.b32.xlu0 %v602, 80
      %v2734 = vpop.permute.xlu0 %2733
      %2735 = vrot.lane.b32.xlu0 %v605, 80
      %v2736 = vpop.permute.xlu0 %2735
      %2737 = vrot.lane.b32.xlu0 %v607, 80
      %v2738 = vpop.permute.xlu0 %2737
      %2739 = vrot.lane.b32.xlu0 %v610, 80
      %v2740 = vpop.permute.xlu0 %2739
      %2741 = vrot.lane.b32.xlu0 %v612, 80
      %v2742 = vpop.permute.xlu0 %2741
      %2743 = vrot.lane.b32.xlu0 %v615, 80
      %v2744 = vpop.permute.xlu0 %2743
      %2745 = vrot.lane.b32.xlu0 %v617, 80
      %v2746 = vpop.permute.xlu0 %2745
      %2747 = vrot.lane.b32.xlu0 %v620, 80
      %v2748 = vpop.permute.xlu0 %2747
      %2749 = vrot.lane.b32.xlu0 %v622, 80
      %v2750 = vpop.permute.xlu0 %2749
      %2751 = vrot.lane.b32.xlu0 %v625, 80
      %v2752 = vpop.permute.xlu0 %2751
      %2753 = vrot.lane.b32.xlu0 %v627, 80
      %v2754 = vpop.permute.xlu0 %2753
      %2755 = vrot.lane.b32.xlu0 %v630, 80
      %v2756 = vpop.permute.xlu0 %2755
      %2757 = vrot.lane.b32.xlu0 %v632, 80
      %v2758 = vpop.permute.xlu0 %2757
      %2759 = vrot.lane.b32.xlu0 %v635, 80
      %v2760 = vpop.permute.xlu0 %2759
      %2761 = vrot.lane.b32.xlu0 %v637, 80
      %v2762 = vpop.permute.xlu0 %2761
      %2763 = vrot.lane.b32.xlu0 %v640, 80
      %v2764 = vpop.permute.xlu0 %2763
      %2765 = vrot.lane.b32.xlu0 %v642, 80
      %v2766 = vpop.permute.xlu0 %2765
      %2767 = vrot.lane.b32.xlu0 %v645, 80
      %v2768 = vpop.permute.xlu0 %2767
      %2769 = vrot.lane.b32.xlu0 %v647, 80
      %v2770 = vpop.permute.xlu0 %2769
      %v2803 = vrot.slane %v2708, 7
      %v2804 = vrot.slane %v2710, 7
      %v2805 = vrot.slane %v2712, 7
      %v2806 = vrot.slane %v2714, 7
      %v2807 = vrot.slane %v2716, 7
      %v2808 = vrot.slane %v2718, 7
      %v2809 = vrot.slane %v2720, 7
      %v2810 = vrot.slane %v2722, 7
      %v2811 = vrot.slane %v2724, 7
      %v2812 = vrot.slane %v2726, 7
      %v2813 = vrot.slane %v2728, 7
      %v2814 = vrot.slane %v2730, 7
      %v2815 = vrot.slane %v2732, 7
      %v2816 = vrot.slane %v2734, 7
      %v2817 = vrot.slane %v2736, 7
      %v2818 = vrot.slane %v2738, 7
      %v2819 = vrot.slane %v2740, 7
      %v2820 = vrot.slane %v2742, 7
      %v2821 = vrot.slane %v2744, 7
      %v2822 = vrot.slane %v2746, 7
      %v2823 = vrot.slane %v2748, 7
      %v2824 = vrot.slane %v2750, 7
      %v2825 = vrot.slane %v2752, 7
      %v2826 = vrot.slane %v2754, 7
      %v2827 = vrot.slane %v2756, 7
      %v2828 = vrot.slane %v2758, 7
      %v2829 = vrot.slane %v2760, 7
      %v2830 = vrot.slane %v2762, 7
      %v2831 = vrot.slane %v2764, 7
      %v2832 = vrot.slane %v2766, 7
      %v2833 = vrot.slane %v2768, 7
      %v2834 = vrot.slane %v2770, 7
      %v2835 = vsel %vm1041, %v2833, %v2834
      %v2836 = vsel %vm1041, %v2832, %v2833
      %v2837 = vsel %vm1041, %v2831, %v2832
      %v2838 = vsel %vm1041, %v2830, %v2831
      %v2839 = vsel %vm1041, %v2829, %v2830
      %v2840 = vsel %vm1041, %v2828, %v2829
      %v2841 = vsel %vm1041, %v2827, %v2828
      %v2842 = vsel %vm1041, %v2826, %v2827
      %v2843 = vsel %vm1041, %v2825, %v2826
      %v2844 = vsel %vm1041, %v2824, %v2825
      %v2845 = vsel %vm1041, %v2823, %v2824
      %v2846 = vsel %vm1041, %v2822, %v2823
      %v2847 = vsel %vm1041, %v2821, %v2822
      %v2848 = vsel %vm1041, %v2820, %v2821
      %v2849 = vsel %vm1041, %v2819, %v2820
      %v2850 = vsel %vm1041, %v2818, %v2819
      %v2851 = vsel %vm1041, %v2817, %v2818
      %v2852 = vsel %vm1041, %v2816, %v2817
      %v2853 = vsel %vm1041, %v2815, %v2816
      %v2854 = vsel %vm1041, %v2814, %v2815
      %v2855 = vsel %vm1041, %v2813, %v2814
      %v2856 = vsel %vm1041, %v2812, %v2813
      %v2857 = vsel %vm1041, %v2811, %v2812
      %v2858 = vsel %vm1041, %v2810, %v2811
      %v2859 = vsel %vm1041, %v2809, %v2810
      %v2860 = vsel %vm1041, %v2808, %v2809
      %v2861 = vsel %vm1041, %v2807, %v2808
      %v2862 = vsel %vm1041, %v2806, %v2807
      %v2863 = vsel %vm1041, %v2805, %v2806
      %v2864 = vsel %vm1041, %v2804, %v2805
      %v2865 = vsel %vm1041, %v2803, %v2804
      %v2866 = vsel %vm1041, %v2834, %v2803
      %vm2867 = vmand %vm913, %vm945
      %vm2868 = vmand %vm914, %vm946
      %vm2869 = vmand %vm915, %vm947
      %vm2870 = vmand %vm916, %vm948
      %vm2871 = vmand %vm917, %vm949
      %vm2872 = vmand %vm918, %vm950
      %vm2873 = vmand %vm919, %vm951
      %vm2874 = vmand %vm920, %vm952
      %vm2875 = vmand %vm921, %vm953
      %vm2876 = vmand %vm922, %vm954
      %vm2877 = vmand %vm923, %vm955
      %vm2878 = vmand %vm924, %vm956
      %vm2879 = vmand %vm925, %vm957
      %vm2880 = vmand %vm926, %vm958
      %vm2881 = vmand %vm927, %vm959
      %vm2882 = vmand %vm928, %vm960
      %vm2883 = vmand %vm929, %vm961
      %vm2884 = vmand %vm930, %vm962
      %vm2885 = vmand %vm931, %vm963
      %vm2886 = vmand %vm932, %vm964
      %vm2887 = vmand %vm933, %vm965
      %vm2888 = vmand %vm934, %vm966
      %vm2889 = vmand %vm935, %vm967
      %vm2890 = vmand %vm936, %vm968
      %vm2891 = vmand %vm937, %vm969
      %vm2892 = vmand %vm938, %vm970
      %vm2893 = vmand %vm939, %vm971
      %vm2894 = vmand %vm940, %vm972
      %vm2895 = vmand %vm941, %vm973
      %vm2896 = vmand %vm942, %vm974
      %vm2897 = vmand %vm943, %vm975
      %vm2898 = vmand %vm944, %vm976
      %v2899 = vsel %vm2867, %v2864, 0.0
      %v2900 = vsel %vm2868, %v2863, 0.0
      %v2901 = vsel %vm2869, %v2862, 0.0
      %v2902 = vsel %vm2870, %v2861, 0.0
      %v2903 = vsel %vm2871, %v2860, 0.0
      %v2904 = vsel %vm2872, %v2859, 0.0
      %v2905 = vsel %vm2873, %v2858, 0.0
      %v2906 = vsel %vm2874, %v2857, 0.0
      %v2907 = vsel %vm2875, %v2856, 0.0
      %v2908 = vsel %vm2876, %v2855, 0.0
      %v2909 = vsel %vm2877, %v2854, 0.0
      %v2910 = vsel %vm2878, %v2853, 0.0
      %v2911 = vsel %vm2879, %v2852, 0.0
      %v2912 = vsel %vm2880, %v2851, 0.0
      %v2913 = vsel %vm2881, %v2850, 0.0
      %v2914 = vsel %vm2882, %v2849, 0.0
      %v2915 = vsel %vm2883, %v2848, 0.0
      %v2916 = vsel %vm2884, %v2847, 0.0
      %v2917 = vsel %vm2885, %v2846, 0.0
      %v2918 = vsel %vm2886, %v2845, 0.0
      %v2919 = vsel %vm2887, %v2844, 0.0
      %v2920 = vsel %vm2888, %v2843, 0.0
      %v2921 = vsel %vm2889, %v2842, 0.0
      %v2922 = vsel %vm2890, %v2841, 0.0
      %v2923 = vsel %vm2891, %v2840, 0.0
      %v2924 = vsel %vm2892, %v2839, 0.0
      %v2925 = vsel %vm2893, %v2838, 0.0
      %v2926 = vsel %vm2894, %v2837, 0.0
      %v2927 = vsel %vm2895, %v2836, 0.0
      %v2928 = vsel %vm2896, %v2835, 0.0
      %v2929 = vsel %vm2897, %v2866, 0.0
      %v2930 = vsel %vm2898, %v2865, 0.0
      %2963 = vrot.lane.b32.xlu0 %v2899, 32
      %v2964 = vpop.permute.xlu0 %2963
      %2965 = vrot.lane.b32.xlu0 %v2900, 32
      %v2966 = vpop.permute.xlu0 %2965
      %2967 = vrot.lane.b32.xlu0 %v2901, 32
      %v2968 = vpop.permute.xlu0 %2967
      %2969 = vrot.lane.b32.xlu0 %v2902, 32
      %v2970 = vpop.permute.xlu0 %2969
      %2971 = vrot.lane.b32.xlu0 %v2903, 32
      %v2972 = vpop.permute.xlu0 %2971
      %2973 = vrot.lane.b32.xlu0 %v2904, 32
      %v2974 = vpop.permute.xlu0 %2973
      %2975 = vrot.lane.b32.xlu0 %v2905, 32
      %v2976 = vpop.permute.xlu0 %2975
      %2977 = vrot.lane.b32.xlu0 %v2906, 32
      %v2978 = vpop.permute.xlu0 %2977
      %2979 = vrot.lane.b32.xlu0 %v2907, 32
      %v2980 = vpop.permute.xlu0 %2979
      %2981 = vrot.lane.b32.xlu0 %v2908, 32
      %v2982 = vpop.permute.xlu0 %2981
      %2983 = vrot.lane.b32.xlu0 %v2909, 32
      %v2984 = vpop.permute.xlu0 %2983
      %2985 = vrot.lane.b32.xlu0 %v2910, 32
      %v2986 = vpop.permute.xlu0 %2985
      %2987 = vrot.lane.b32.xlu0 %v2911, 32
      %v2988 = vpop.permute.xlu0 %2987
      %2989 = vrot.lane.b32.xlu0 %v2912, 32
      %v2990 = vpop.permute.xlu0 %2989
      %2991 = vrot.lane.b32.xlu0 %v2913, 32
      %v2992 = vpop.permute.xlu0 %2991
      %2993 = vrot.lane.b32.xlu0 %v2914, 32
      %v2994 = vpop.permute.xlu0 %2993
      %2995 = vrot.lane.b32.xlu0 %v2915, 32
      %v2996 = vpop.permute.xlu0 %2995
      %2997 = vrot.lane.b32.xlu0 %v2916, 32
      %v2998 = vpop.permute.xlu0 %2997
      %2999 = vrot.lane.b32.xlu0 %v2917, 32
      %v3000 = vpop.permute.xlu0 %2999
      %3001 = vrot.lane.b32.xlu0 %v2918, 32
      %v3002 = vpop.permute.xlu0 %3001
      %3003 = vrot.lane.b32.xlu0 %v2919, 32
      %v3004 = vpop.permute.xlu0 %3003
      %3005 = vrot.lane.b32.xlu0 %v2920, 32
      %v3006 = vpop.permute.xlu0 %3005
      %3007 = vrot.lane.b32.xlu0 %v2921, 32
      %v3008 = vpop.permute.xlu0 %3007
      %3009 = vrot.lane.b32.xlu0 %v2922, 32
      %v3010 = vpop.permute.xlu0 %3009
      %3011 = vrot.lane.b32.xlu0 %v2923, 32
      %v3012 = vpop.permute.xlu0 %3011
      %3013 = vrot.lane.b32.xlu0 %v2924, 32
      %v3014 = vpop.permute.xlu0 %3013
      %3015 = vrot.lane.b32.xlu0 %v2925, 32
      %v3016 = vpop.permute.xlu0 %3015
      %3017 = vrot.lane.b32.xlu0 %v2926, 32
      %v3018 = vpop.permute.xlu0 %3017
      %3019 = vrot.lane.b32.xlu0 %v2927, 32
      %v3020 = vpop.permute.xlu0 %3019
      %3021 = vrot.lane.b32.xlu0 %v2928, 32
      %v3022 = vpop.permute.xlu0 %3021
      %3023 = vrot.lane.b32.xlu0 %v2929, 32
      %v3024 = vpop.permute.xlu0 %3023
      %3025 = vrot.lane.b32.xlu0 %v2930, 32
      %v3026 = vpop.permute.xlu0 %3025
      %v3059 = vadd.f32 %v2675, %v2964
      %v3060 = vadd.f32 %v2676, %v2966
      %v3061 = vadd.f32 %v2677, %v2968
      %v3062 = vadd.f32 %v2678, %v2970
      %v3063 = vadd.f32 %v2679, %v2972
      %v3064 = vadd.f32 %v2680, %v2974
      %v3065 = vadd.f32 %v2681, %v2976
      %v3066 = vadd.f32 %v2682, %v2978
      %v3067 = vadd.f32 %v2683, %v2980
      %v3068 = vadd.f32 %v2684, %v2982
      %v3069 = vadd.f32 %v2685, %v2984
      %v3070 = vadd.f32 %v2686, %v2986
      %v3071 = vadd.f32 %v2687, %v2988
      %v3072 = vadd.f32 %v2688, %v2990
      %v3073 = vadd.f32 %v2689, %v2992
      %v3074 = vadd.f32 %v2690, %v2994
      %v3075 = vadd.f32 %v2691, %v2996
      %v3076 = vadd.f32 %v2692, %v2998
      %v3077 = vadd.f32 %v2693, %v3000
      %v3078 = vadd.f32 %v2694, %v3002
      %v3079 = vadd.f32 %v2695, %v3004
      %v3080 = vadd.f32 %v2696, %v3006
      %v3081 = vadd.f32 %v2697, %v3008
      %v3082 = vadd.f32 %v2698, %v3010
      %v3083 = vadd.f32 %v2699, %v3012
      %v3084 = vadd.f32 %v2700, %v3014
      %v3085 = vadd.f32 %v2701, %v3016
      %v3086 = vadd.f32 %v2702, %v3018
      %v3087 = vadd.f32 %v2703, %v3020
      %v3088 = vadd.f32 %v2704, %v3022
      %v3089 = vadd.f32 %v2705, %v3024
      %v3090 = vadd.f32 %v2706, %v3026
      %3091 = vrot.lane.b32.xlu0 %v570, 72
      %v3092 = vpop.permute.xlu0 %3091
      %3093 = vrot.lane.b32.xlu0 %v572, 72
      %v3094 = vpop.permute.xlu0 %3093
      %3095 = vrot.lane.b32.xlu0 %v575, 72
      %v3096 = vpop.permute.xlu0 %3095
      %3097 = vrot.lane.b32.xlu0 %v577, 72
      %v3098 = vpop.permute.xlu0 %3097
      %3099 = vrot.lane.b32.xlu0 %v580, 72
      %v3100 = vpop.permute.xlu0 %3099
      %3101 = vrot.lane.b32.xlu0 %v582, 72
      %v3102 = vpop.permute.xlu0 %3101
      %3103 = vrot.lane.b32.xlu0 %v585, 72
      %v3104 = vpop.permute.xlu0 %3103
      %3105 = vrot.lane.b32.xlu0 %v587, 72
      %v3106 = vpop.permute.xlu0 %3105
      %3107 = vrot.lane.b32.xlu0 %v590, 72
      %v3108 = vpop.permute.xlu0 %3107
      %3109 = vrot.lane.b32.xlu0 %v592, 72
      %v3110 = vpop.permute.xlu0 %3109
      %3111 = vrot.lane.b32.xlu0 %v595, 72
      %v3112 = vpop.permute.xlu0 %3111
      %3113 = vrot.lane.b32.xlu0 %v597, 72
      %v3114 = vpop.permute.xlu0 %3113
      %3115 = vrot.lane.b32.xlu0 %v600, 72
      %v3116 = vpop.permute.xlu0 %3115
      %3117 = vrot.lane.b32.xlu0 %v602, 72
      %v3118 = vpop.permute.xlu0 %3117
      %3119 = vrot.lane.b32.xlu0 %v605, 72
      %v3120 = vpop.permute.xlu0 %3119
      %3121 = vrot.lane.b32.xlu0 %v607, 72
      %v3122 = vpop.permute.xlu0 %3121
      %3123 = vrot.lane.b32.xlu0 %v610, 72
      %v3124 = vpop.permute.xlu0 %3123
      %3125 = vrot.lane.b32.xlu0 %v612, 72
      %v3126 = vpop.permute.xlu0 %3125
      %3127 = vrot.lane.b32.xlu0 %v615, 72
      %v3128 = vpop.permute.xlu0 %3127
      %3129 = vrot.lane.b32.xlu0 %v617, 72
      %v3130 = vpop.permute.xlu0 %3129
      %3131 = vrot.lane.b32.xlu0 %v620, 72
      %v3132 = vpop.permute.xlu0 %3131
      %3133 = vrot.lane.b32.xlu0 %v622, 72
      %v3134 = vpop.permute.xlu0 %3133
      %3135 = vrot.lane.b32.xlu0 %v625, 72
      %v3136 = vpop.permute.xlu0 %3135
      %3137 = vrot.lane.b32.xlu0 %v627, 72
      %v3138 = vpop.permute.xlu0 %3137
      %3139 = vrot.lane.b32.xlu0 %v630, 72
      %v3140 = vpop.permute.xlu0 %3139
      %3141 = vrot.lane.b32.xlu0 %v632, 72
      %v3142 = vpop.permute.xlu0 %3141
      %3143 = vrot.lane.b32.xlu0 %v635, 72
      %v3144 = vpop.permute.xlu0 %3143
      %3145 = vrot.lane.b32.xlu0 %v637, 72
      %v3146 = vpop.permute.xlu0 %3145
      %3147 = vrot.lane.b32.xlu0 %v640, 72
      %v3148 = vpop.permute.xlu0 %3147
      %3149 = vrot.lane.b32.xlu0 %v642, 72
      %v3150 = vpop.permute.xlu0 %3149
      %3151 = vrot.lane.b32.xlu0 %v645, 72
      %v3152 = vpop.permute.xlu0 %3151
      %3153 = vrot.lane.b32.xlu0 %v647, 72
      %v3154 = vpop.permute.xlu0 %3153
      %v3187 = vsel %vm913, %v3096, 0.0
      %v3188 = vsel %vm914, %v3098, 0.0
      %v3189 = vsel %vm915, %v3100, 0.0
      %v3190 = vsel %vm916, %v3102, 0.0
      %v3191 = vsel %vm917, %v3104, 0.0
      %v3192 = vsel %vm918, %v3106, 0.0
      %v3193 = vsel %vm919, %v3108, 0.0
      %v3194 = vsel %vm920, %v3110, 0.0
      %v3195 = vsel %vm921, %v3112, 0.0
      %v3196 = vsel %vm922, %v3114, 0.0
      %v3197 = vsel %vm923, %v3116, 0.0
      %v3198 = vsel %vm924, %v3118, 0.0
      %v3199 = vsel %vm925, %v3120, 0.0
      %v3200 = vsel %vm926, %v3122, 0.0
      %v3201 = vsel %vm927, %v3124, 0.0
      %v3202 = vsel %vm928, %v3126, 0.0
      %v3203 = vsel %vm929, %v3128, 0.0
      %v3204 = vsel %vm930, %v3130, 0.0
      %v3205 = vsel %vm931, %v3132, 0.0
      %v3206 = vsel %vm932, %v3134, 0.0
      %v3207 = vsel %vm933, %v3136, 0.0
      %v3208 = vsel %vm934, %v3138, 0.0
      %v3209 = vsel %vm935, %v3140, 0.0
      %v3210 = vsel %vm936, %v3142, 0.0
      %v3211 = vsel %vm937, %v3144, 0.0
      %v3212 = vsel %vm938, %v3146, 0.0
      %v3213 = vsel %vm939, %v3148, 0.0
      %v3214 = vsel %vm940, %v3150, 0.0
      %v3215 = vsel %vm941, %v3152, 0.0
      %v3216 = vsel %vm942, %v3154, 0.0
      %v3217 = vsel %vm943, %v3092, 0.0
      %v3218 = vsel %vm944, %v3094, 0.0
      %3251 = vrot.lane.b32.xlu0 %v3187, 32
      %v3252 = vpop.permute.xlu0 %3251
      %3253 = vrot.lane.b32.xlu0 %v3188, 32
      %v3254 = vpop.permute.xlu0 %3253
      %3255 = vrot.lane.b32.xlu0 %v3189, 32
      %v3256 = vpop.permute.xlu0 %3255
      %3257 = vrot.lane.b32.xlu0 %v3190, 32
      %v3258 = vpop.permute.xlu0 %3257
      %3259 = vrot.lane.b32.xlu0 %v3191, 32
      %v3260 = vpop.permute.xlu0 %3259
      %3261 = vrot.lane.b32.xlu0 %v3192, 32
      %v3262 = vpop.permute.xlu0 %3261
      %3263 = vrot.lane.b32.xlu0 %v3193, 32
      %v3264 = vpop.permute.xlu0 %3263
      %3265 = vrot.lane.b32.xlu0 %v3194, 32
      %v3266 = vpop.permute.xlu0 %3265
      %3267 = vrot.lane.b32.xlu0 %v3195, 32
      %v3268 = vpop.permute.xlu0 %3267
      %3269 = vrot.lane.b32.xlu0 %v3196, 32
      %v3270 = vpop.permute.xlu0 %3269
      %3271 = vrot.lane.b32.xlu0 %v3197, 32
      %v3272 = vpop.permute.xlu0 %3271
      %3273 = vrot.lane.b32.xlu0 %v3198, 32
      %v3274 = vpop.permute.xlu0 %3273
      %3275 = vrot.lane.b32.xlu0 %v3199, 32
      %v3276 = vpop.permute.xlu0 %3275
      %3277 = vrot.lane.b32.xlu0 %v3200, 32
      %v3278 = vpop.permute.xlu0 %3277
      %3279 = vrot.lane.b32.xlu0 %v3201, 32
      %v3280 = vpop.permute.xlu0 %3279
      %3281 = vrot.lane.b32.xlu0 %v3202, 32
      %v3282 = vpop.permute.xlu0 %3281
      %3283 = vrot.lane.b32.xlu0 %v3203, 32
      %v3284 = vpop.permute.xlu0 %3283
      %3285 = vrot.lane.b32.xlu0 %v3204, 32
      %v3286 = vpop.permute.xlu0 %3285
      %3287 = vrot.lane.b32.xlu0 %v3205, 32
      %v3288 = vpop.permute.xlu0 %3287
      %3289 = vrot.lane.b32.xlu0 %v3206, 32
      %v3290 = vpop.permute.xlu0 %3289
      %3291 = vrot.lane.b32.xlu0 %v3207, 32
      %v3292 = vpop.permute.xlu0 %3291
      %3293 = vrot.lane.b32.xlu0 %v3208, 32
      %v3294 = vpop.permute.xlu0 %3293
      %3295 = vrot.lane.b32.xlu0 %v3209, 32
      %v3296 = vpop.permute.xlu0 %3295
      %3297 = vrot.lane.b32.xlu0 %v3210, 32
      %v3298 = vpop.permute.xlu0 %3297
      %3299 = vrot.lane.b32.xlu0 %v3211, 32
      %v3300 = vpop.permute.xlu0 %3299
      %3301 = vrot.lane.b32.xlu0 %v3212, 32
      %v3302 = vpop.permute.xlu0 %3301
      %3303 = vrot.lane.b32.xlu0 %v3213, 32
      %v3304 = vpop.permute.xlu0 %3303
      %3305 = vrot.lane.b32.xlu0 %v3214, 32
      %v3306 = vpop.permute.xlu0 %3305
      %3307 = vrot.lane.b32.xlu0 %v3215, 32
      %v3308 = vpop.permute.xlu0 %3307
      %3309 = vrot.lane.b32.xlu0 %v3216, 32
      %v3310 = vpop.permute.xlu0 %3309
      %3311 = vrot.lane.b32.xlu0 %v3217, 32
      %v3312 = vpop.permute.xlu0 %3311
      %3313 = vrot.lane.b32.xlu0 %v3218, 32
      %v3314 = vpop.permute.xlu0 %3313
      %v3347 = vadd.f32 %v3059, %v3252
      %v3348 = vadd.f32 %v3060, %v3254
      %v3349 = vadd.f32 %v3061, %v3256
      %v3350 = vadd.f32 %v3062, %v3258
      %v3351 = vadd.f32 %v3063, %v3260
      %v3352 = vadd.f32 %v3064, %v3262
      %v3353 = vadd.f32 %v3065, %v3264
      %v3354 = vadd.f32 %v3066, %v3266
      %v3355 = vadd.f32 %v3067, %v3268
      %v3356 = vadd.f32 %v3068, %v3270
      %v3357 = vadd.f32 %v3069, %v3272
      %v3358 = vadd.f32 %v3070, %v3274
      %v3359 = vadd.f32 %v3071, %v3276
      %v3360 = vadd.f32 %v3072, %v3278
      %v3361 = vadd.f32 %v3073, %v3280
      %v3362 = vadd.f32 %v3074, %v3282
      %v3363 = vadd.f32 %v3075, %v3284
      %v3364 = vadd.f32 %v3076, %v3286
      %v3365 = vadd.f32 %v3077, %v3288
      %v3366 = vadd.f32 %v3078, %v3290
      %v3367 = vadd.f32 %v3079, %v3292
      %v3368 = vadd.f32 %v3080, %v3294
      %v3369 = vadd.f32 %v3081, %v3296
      %v3370 = vadd.f32 %v3082, %v3298
      %v3371 = vadd.f32 %v3083, %v3300
      %v3372 = vadd.f32 %v3084, %v3302
      %v3373 = vadd.f32 %v3085, %v3304
      %v3374 = vadd.f32 %v3086, %v3306
      %v3375 = vadd.f32 %v3087, %v3308
      %v3376 = vadd.f32 %v3088, %v3310
      %v3377 = vadd.f32 %v3089, %v3312
      %v3378 = vadd.f32 %v3090, %v3314
      %3379 = vrot.lane.b32.xlu0 %v570, 64
      %v3380 = vpop.permute.xlu0 %3379
      %3381 = vrot.lane.b32.xlu0 %v572, 64
      %v3382 = vpop.permute.xlu0 %3381
      %3383 = vrot.lane.b32.xlu0 %v575, 64
      %v3384 = vpop.permute.xlu0 %3383
      %3385 = vrot.lane.b32.xlu0 %v577, 64
      %v3386 = vpop.permute.xlu0 %3385
      %3387 = vrot.lane.b32.xlu0 %v580, 64
      %v3388 = vpop.permute.xlu0 %3387
      %3389 = vrot.lane.b32.xlu0 %v582, 64
      %v3390 = vpop.permute.xlu0 %3389
      %3391 = vrot.lane.b32.xlu0 %v585, 64
      %v3392 = vpop.permute.xlu0 %3391
      %3393 = vrot.lane.b32.xlu0 %v587, 64
      %v3394 = vpop.permute.xlu0 %3393
      %3395 = vrot.lane.b32.xlu0 %v590, 64
      %v3396 = vpop.permute.xlu0 %3395
      %3397 = vrot.lane.b32.xlu0 %v592, 64
      %v3398 = vpop.permute.xlu0 %3397
      %3399 = vrot.lane.b32.xlu0 %v595, 64
      %v3400 = vpop.permute.xlu0 %3399
      %3401 = vrot.lane.b32.xlu0 %v597, 64
      %v3402 = vpop.permute.xlu0 %3401
      %3403 = vrot.lane.b32.xlu0 %v600, 64
      %v3404 = vpop.permute.xlu0 %3403
      %3405 = vrot.lane.b32.xlu0 %v602, 64
      %v3406 = vpop.permute.xlu0 %3405
      %3407 = vrot.lane.b32.xlu0 %v605, 64
      %v3408 = vpop.permute.xlu0 %3407
      %3409 = vrot.lane.b32.xlu0 %v607, 64
      %v3410 = vpop.permute.xlu0 %3409
      %3411 = vrot.lane.b32.xlu0 %v610, 64
      %v3412 = vpop.permute.xlu0 %3411
      %3413 = vrot.lane.b32.xlu0 %v612, 64
      %v3414 = vpop.permute.xlu0 %3413
      %3415 = vrot.lane.b32.xlu0 %v615, 64
      %v3416 = vpop.permute.xlu0 %3415
      %3417 = vrot.lane.b32.xlu0 %v617, 64
      %v3418 = vpop.permute.xlu0 %3417
      %3419 = vrot.lane.b32.xlu0 %v620, 64
      %v3420 = vpop.permute.xlu0 %3419
      %3421 = vrot.lane.b32.xlu0 %v622, 64
      %v3422 = vpop.permute.xlu0 %3421
      %3423 = vrot.lane.b32.xlu0 %v625, 64
      %v3424 = vpop.permute.xlu0 %3423
      %3425 = vrot.lane.b32.xlu0 %v627, 64
      %v3426 = vpop.permute.xlu0 %3425
      %3427 = vrot.lane.b32.xlu0 %v630, 64
      %v3428 = vpop.permute.xlu0 %3427
      %3429 = vrot.lane.b32.xlu0 %v632, 64
      %v3430 = vpop.permute.xlu0 %3429
      %3431 = vrot.lane.b32.xlu0 %v635, 64
      %v3432 = vpop.permute.xlu0 %3431
      %3433 = vrot.lane.b32.xlu0 %v637, 64
      %v3434 = vpop.permute.xlu0 %3433
      %3435 = vrot.lane.b32.xlu0 %v640, 64
      %v3436 = vpop.permute.xlu0 %3435
      %3437 = vrot.lane.b32.xlu0 %v642, 64
      %v3438 = vpop.permute.xlu0 %3437
      %3439 = vrot.lane.b32.xlu0 %v645, 64
      %v3440 = vpop.permute.xlu0 %3439
      %3441 = vrot.lane.b32.xlu0 %v647, 64
      %v3442 = vpop.permute.xlu0 %3441
      %v3475 = vrot.slane %v3380, 1
      %v3476 = vrot.slane %v3382, 1
      %v3477 = vrot.slane %v3384, 1
      %v3478 = vrot.slane %v3386, 1
      %v3479 = vrot.slane %v3388, 1
      %v3480 = vrot.slane %v3390, 1
      %v3481 = vrot.slane %v3392, 1
      %v3482 = vrot.slane %v3394, 1
      %v3483 = vrot.slane %v3396, 1
      %v3484 = vrot.slane %v3398, 1
      %v3485 = vrot.slane %v3400, 1
      %v3486 = vrot.slane %v3402, 1
      %v3487 = vrot.slane %v3404, 1
      %v3488 = vrot.slane %v3406, 1
      %v3489 = vrot.slane %v3408, 1
      %v3490 = vrot.slane %v3410, 1
      %v3491 = vrot.slane %v3412, 1
      %v3492 = vrot.slane %v3414, 1
      %v3493 = vrot.slane %v3416, 1
      %v3494 = vrot.slane %v3418, 1
      %v3495 = vrot.slane %v3420, 1
      %v3496 = vrot.slane %v3422, 1
      %v3497 = vrot.slane %v3424, 1
      %v3498 = vrot.slane %v3426, 1
      %v3499 = vrot.slane %v3428, 1
      %v3500 = vrot.slane %v3430, 1
      %v3501 = vrot.slane %v3432, 1
      %v3502 = vrot.slane %v3434, 1
      %v3503 = vrot.slane %v3436, 1
      %v3504 = vrot.slane %v3438, 1
      %v3505 = vrot.slane %v3440, 1
      %v3506 = vrot.slane %v3442, 1
      %v3507 = vsel %vm1746, %v3505, %v3506
      %v3508 = vsel %vm1746, %v3504, %v3505
      %v3509 = vsel %vm1746, %v3503, %v3504
      %v3510 = vsel %vm1746, %v3502, %v3503
      %v3511 = vsel %vm1746, %v3501, %v3502
      %v3512 = vsel %vm1746, %v3500, %v3501
      %v3513 = vsel %vm1746, %v3499, %v3500
      %v3514 = vsel %vm1746, %v3498, %v3499
      %v3515 = vsel %vm1746, %v3497, %v3498
      %v3516 = vsel %vm1746, %v3496, %v3497
      %v3517 = vsel %vm1746, %v3495, %v3496
      %v3518 = vsel %vm1746, %v3494, %v3495
      %v3519 = vsel %vm1746, %v3493, %v3494
      %v3520 = vsel %vm1746, %v3492, %v3493
      %v3521 = vsel %vm1746, %v3491, %v3492
      %v3522 = vsel %vm1746, %v3490, %v3491
      %v3523 = vsel %vm1746, %v3489, %v3490
      %v3524 = vsel %vm1746, %v3488, %v3489
      %v3525 = vsel %vm1746, %v3487, %v3488
      %v3526 = vsel %vm1746, %v3486, %v3487
      %v3527 = vsel %vm1746, %v3485, %v3486
      %v3528 = vsel %vm1746, %v3484, %v3485
      %v3529 = vsel %vm1746, %v3483, %v3484
      %v3530 = vsel %vm1746, %v3482, %v3483
      %v3531 = vsel %vm1746, %v3481, %v3482
      %v3532 = vsel %vm1746, %v3480, %v3481
      %v3533 = vsel %vm1746, %v3479, %v3480
      %v3534 = vsel %vm1746, %v3478, %v3479
      %v3535 = vsel %vm1746, %v3477, %v3478
      %v3536 = vsel %vm1746, %v3476, %v3477
      %v3537 = vsel %vm1746, %v3475, %v3476
      %v3538 = vsel %vm1746, %v3506, %v3475
      %vm3539 = vmand %vm913, %vm977
      %vm3540 = vmand %vm914, %vm978
      %vm3541 = vmand %vm915, %vm979
      %vm3542 = vmand %vm916, %vm980
      %vm3543 = vmand %vm917, %vm981
      %vm3544 = vmand %vm918, %vm982
      %vm3545 = vmand %vm919, %vm983
      %vm3546 = vmand %vm920, %vm984
      %vm3547 = vmand %vm921, %vm985
      %vm3548 = vmand %vm922, %vm986
      %vm3549 = vmand %vm923, %vm987
      %vm3550 = vmand %vm924, %vm988
      %vm3551 = vmand %vm925, %vm989
      %vm3552 = vmand %vm926, %vm990
      %vm3553 = vmand %vm927, %vm991
      %vm3554 = vmand %vm928, %vm992
      %vm3555 = vmand %vm929, %vm993
      %vm3556 = vmand %vm930, %vm994
      %vm3557 = vmand %vm931, %vm995
      %vm3558 = vmand %vm932, %vm996
      %vm3559 = vmand %vm933, %vm997
      %vm3560 = vmand %vm934, %vm998
      %vm3561 = vmand %vm935, %vm999
      %vm3562 = vmand %vm936, %vm1000
      %vm3563 = vmand %vm937, %vm1001
      %vm3564 = vmand %vm938, %vm1002
      %vm3565 = vmand %vm939, %vm1003
      %vm3566 = vmand %vm940, %vm1004
      %vm3567 = vmand %vm941, %vm1005
      %vm3568 = vmand %vm942, %vm1006
      %vm3569 = vmand %vm943, %vm1007
      %vm3570 = vmand %vm944, %vm1008
      %v3571 = vsel %vm3539, %v3535, 0.0
      %v3572 = vsel %vm3540, %v3534, 0.0
      %v3573 = vsel %vm3541, %v3533, 0.0
      %v3574 = vsel %vm3542, %v3532, 0.0
      %v3575 = vsel %vm3543, %v3531, 0.0
      %v3576 = vsel %vm3544, %v3530, 0.0
      %v3577 = vsel %vm3545, %v3529, 0.0
      %v3578 = vsel %vm3546, %v3528, 0.0
      %v3579 = vsel %vm3547, %v3527, 0.0
      %v3580 = vsel %vm3548, %v3526, 0.0
      %v3581 = vsel %vm3549, %v3525, 0.0
      %v3582 = vsel %vm3550, %v3524, 0.0
      %v3583 = vsel %vm3551, %v3523, 0.0
      %v3584 = vsel %vm3552, %v3522, 0.0
      %v3585 = vsel %vm3553, %v3521, 0.0
      %v3586 = vsel %vm3554, %v3520, 0.0
      %v3587 = vsel %vm3555, %v3519, 0.0
      %v3588 = vsel %vm3556, %v3518, 0.0
      %v3589 = vsel %vm3557, %v3517, 0.0
      %v3590 = vsel %vm3558, %v3516, 0.0
      %v3591 = vsel %vm3559, %v3515, 0.0
      %v3592 = vsel %vm3560, %v3514, 0.0
      %v3593 = vsel %vm3561, %v3513, 0.0
      %v3594 = vsel %vm3562, %v3512, 0.0
      %v3595 = vsel %vm3563, %v3511, 0.0
      %v3596 = vsel %vm3564, %v3510, 0.0
      %v3597 = vsel %vm3565, %v3509, 0.0
      %v3598 = vsel %vm3566, %v3508, 0.0
      %v3599 = vsel %vm3567, %v3507, 0.0
      %v3600 = vsel %vm3568, %v3538, 0.0
      %v3601 = vsel %vm3569, %v3537, 0.0
      %v3602 = vsel %vm3570, %v3536, 0.0
      %3635 = vrot.lane.b32.xlu0 %v3571, 32
      %v3636 = vpop.permute.xlu0 %3635
      %3637 = vrot.lane.b32.xlu0 %v3572, 32
      %v3638 = vpop.permute.xlu0 %3637
      %3639 = vrot.lane.b32.xlu0 %v3573, 32
      %v3640 = vpop.permute.xlu0 %3639
      %3641 = vrot.lane.b32.xlu0 %v3574, 32
      %v3642 = vpop.permute.xlu0 %3641
      %3643 = vrot.lane.b32.xlu0 %v3575, 32
      %v3644 = vpop.permute.xlu0 %3643
      %3645 = vrot.lane.b32.xlu0 %v3576, 32
      %v3646 = vpop.permute.xlu0 %3645
      %3647 = vrot.lane.b32.xlu0 %v3577, 32
      %v3648 = vpop.permute.xlu0 %3647
      %3649 = vrot.lane.b32.xlu0 %v3578, 32
      %v3650 = vpop.permute.xlu0 %3649
      %3651 = vrot.lane.b32.xlu0 %v3579, 32
      %v3652 = vpop.permute.xlu0 %3651
      %3653 = vrot.lane.b32.xlu0 %v3580, 32
      %v3654 = vpop.permute.xlu0 %3653
      %3655 = vrot.lane.b32.xlu0 %v3581, 32
      %v3656 = vpop.permute.xlu0 %3655
      %3657 = vrot.lane.b32.xlu0 %v3582, 32
      %v3658 = vpop.permute.xlu0 %3657
      %3659 = vrot.lane.b32.xlu0 %v3583, 32
      %v3660 = vpop.permute.xlu0 %3659
      %3661 = vrot.lane.b32.xlu0 %v3584, 32
      %v3662 = vpop.permute.xlu0 %3661
      %3663 = vrot.lane.b32.xlu0 %v3585, 32
      %v3664 = vpop.permute.xlu0 %3663
      %3665 = vrot.lane.b32.xlu0 %v3586, 32
      %v3666 = vpop.permute.xlu0 %3665
      %3667 = vrot.lane.b32.xlu0 %v3587, 32
      %v3668 = vpop.permute.xlu0 %3667
      %3669 = vrot.lane.b32.xlu0 %v3588, 32
      %v3670 = vpop.permute.xlu0 %3669
      %3671 = vrot.lane.b32.xlu0 %v3589, 32
      %v3672 = vpop.permute.xlu0 %3671
      %3673 = vrot.lane.b32.xlu0 %v3590, 32
      %v3674 = vpop.permute.xlu0 %3673
      %3675 = vrot.lane.b32.xlu0 %v3591, 32
      %v3676 = vpop.permute.xlu0 %3675
      %3677 = vrot.lane.b32.xlu0 %v3592, 32
      %v3678 = vpop.permute.xlu0 %3677
      %3679 = vrot.lane.b32.xlu0 %v3593, 32
      %v3680 = vpop.permute.xlu0 %3679
      %3681 = vrot.lane.b32.xlu0 %v3594, 32
      %v3682 = vpop.permute.xlu0 %3681
      %3683 = vrot.lane.b32.xlu0 %v3595, 32
      %v3684 = vpop.permute.xlu0 %3683
      %3685 = vrot.lane.b32.xlu0 %v3596, 32
      %v3686 = vpop.permute.xlu0 %3685
      %3687 = vrot.lane.b32.xlu0 %v3597, 32
      %v3688 = vpop.permute.xlu0 %3687
      %3689 = vrot.lane.b32.xlu0 %v3598, 32
      %v3690 = vpop.permute.xlu0 %3689
      %3691 = vrot.lane.b32.xlu0 %v3599, 32
      %v3692 = vpop.permute.xlu0 %3691
      %3693 = vrot.lane.b32.xlu0 %v3600, 32
      %v3694 = vpop.permute.xlu0 %3693
      %3695 = vrot.lane.b32.xlu0 %v3601, 32
      %v3696 = vpop.permute.xlu0 %3695
      %3697 = vrot.lane.b32.xlu0 %v3602, 32
      %v3698 = vpop.permute.xlu0 %3697
      %v3731 = vadd.f32 %v3347, %v3636
      %v3732 = vadd.f32 %v3348, %v3638
      %v3733 = vadd.f32 %v3349, %v3640
      %v3734 = vadd.f32 %v3350, %v3642
      %v3735 = vadd.f32 %v3351, %v3644
      %v3736 = vadd.f32 %v3352, %v3646
      %v3737 = vadd.f32 %v3353, %v3648
      %v3738 = vadd.f32 %v3354, %v3650
      %v3739 = vadd.f32 %v3355, %v3652
      %v3740 = vadd.f32 %v3356, %v3654
      %v3741 = vadd.f32 %v3357, %v3656
      %v3742 = vadd.f32 %v3358, %v3658
      %v3743 = vadd.f32 %v3359, %v3660
      %v3744 = vadd.f32 %v3360, %v3662
      %v3745 = vadd.f32 %v3361, %v3664
      %v3746 = vadd.f32 %v3362, %v3666
      %v3747 = vadd.f32 %v3363, %v3668
      %v3748 = vadd.f32 %v3364, %v3670
      %v3749 = vadd.f32 %v3365, %v3672
      %v3750 = vadd.f32 %v3366, %v3674
      %v3751 = vadd.f32 %v3367, %v3676
      %v3752 = vadd.f32 %v3368, %v3678
      %v3753 = vadd.f32 %v3369, %v3680
      %v3754 = vadd.f32 %v3370, %v3682
      %v3755 = vadd.f32 %v3371, %v3684
      %v3756 = vadd.f32 %v3372, %v3686
      %v3757 = vadd.f32 %v3373, %v3688
      %v3758 = vadd.f32 %v3374, %v3690
      %v3759 = vadd.f32 %v3375, %v3692
      %v3760 = vadd.f32 %v3376, %v3694
      %v3761 = vadd.f32 %v3377, %v3696
      %v3762 = vadd.f32 %v3378, %v3698
      %3795 = vrot.lane.b32.xlu0 %v3731, 100
      %v3796 = vpop.permute.xlu0 %3795
      %3797 = vrot.lane.b32.xlu0 %v3732, 100
      %v3798 = vpop.permute.xlu0 %3797
      %3799 = vrot.lane.b32.xlu0 %v3733, 100
      %v3800 = vpop.permute.xlu0 %3799
      %3801 = vrot.lane.b32.xlu0 %v3734, 100
      %v3802 = vpop.permute.xlu0 %3801
      %3803 = vrot.lane.b32.xlu0 %v3735, 100
      %v3804 = vpop.permute.xlu0 %3803
      %3805 = vrot.lane.b32.xlu0 %v3736, 100
      %v3806 = vpop.permute.xlu0 %3805
      %3807 = vrot.lane.b32.xlu0 %v3737, 100
      %v3808 = vpop.permute.xlu0 %3807
      %3809 = vrot.lane.b32.xlu0 %v3738, 100
      %v3810 = vpop.permute.xlu0 %3809
      %3811 = vrot.lane.b32.xlu0 %v3739, 100
      %v3812 = vpop.permute.xlu0 %3811
      %3813 = vrot.lane.b32.xlu0 %v3740, 100
      %v3814 = vpop.permute.xlu0 %3813
      %3815 = vrot.lane.b32.xlu0 %v3741, 100
      %v3816 = vpop.permute.xlu0 %3815
      %3817 = vrot.lane.b32.xlu0 %v3742, 100
      %v3818 = vpop.permute.xlu0 %3817
      %3819 = vrot.lane.b32.xlu0 %v3743, 100
      %v3820 = vpop.permute.xlu0 %3819
      %3821 = vrot.lane.b32.xlu0 %v3744, 100
      %v3822 = vpop.permute.xlu0 %3821
      %3823 = vrot.lane.b32.xlu0 %v3745, 100
      %v3824 = vpop.permute.xlu0 %3823
      %3825 = vrot.lane.b32.xlu0 %v3746, 100
      %v3826 = vpop.permute.xlu0 %3825
      %3827 = vrot.lane.b32.xlu0 %v3747, 100
      %v3828 = vpop.permute.xlu0 %3827
      %3829 = vrot.lane.b32.xlu0 %v3748, 100
      %v3830 = vpop.permute.xlu0 %3829
      %3831 = vrot.lane.b32.xlu0 %v3749, 100
      %v3832 = vpop.permute.xlu0 %3831
      %3833 = vrot.lane.b32.xlu0 %v3750, 100
      %v3834 = vpop.permute.xlu0 %3833
      %3835 = vrot.lane.b32.xlu0 %v3751, 100
      %v3836 = vpop.permute.xlu0 %3835
      %3837 = vrot.lane.b32.xlu0 %v3752, 100
      %v3838 = vpop.permute.xlu0 %3837
      %3839 = vrot.lane.b32.xlu0 %v3753, 100
      %v3840 = vpop.permute.xlu0 %3839
      %3841 = vrot.lane.b32.xlu0 %v3754, 100
      %v3842 = vpop.permute.xlu0 %3841
      %3843 = vrot.lane.b32.xlu0 %v3755, 100
      %v3844 = vpop.permute.xlu0 %3843
      %3845 = vrot.lane.b32.xlu0 %v3756, 100
      %v3846 = vpop.permute.xlu0 %3845
      %3847 = vrot.lane.b32.xlu0 %v3757, 100
      %v3848 = vpop.permute.xlu0 %3847
      %3849 = vrot.lane.b32.xlu0 %v3758, 100
      %v3850 = vpop.permute.xlu0 %3849
      %3851 = vrot.lane.b32.xlu0 %v3759, 100
      %v3852 = vpop.permute.xlu0 %3851
      %3853 = vrot.lane.b32.xlu0 %v3760, 100
      %v3854 = vpop.permute.xlu0 %3853
      %3855 = vrot.lane.b32.xlu0 %v3761, 100
      %v3856 = vpop.permute.xlu0 %3855
      %3857 = vrot.lane.b32.xlu0 %v3762, 100
      %v3858 = vpop.permute.xlu0 %3857
      %vm3891 = vcmask 97312
      %3892 = vst.msk [vmem:[%s244] sm:$0xff] %vm3891, %v3796
      %3893 = vst.msk [vmem:[%s244 + $0x8] sm:$0xff] %vm3891, %v3798
      %3894 = vst.msk [vmem:[%s244 + $0x10] sm:$0xff] %vm3891, %v3800
      %3895 = vst.msk [vmem:[%s244 + $0x18] sm:$0xff] %vm3891, %v3802
      %3896 = vst.msk [vmem:[%s244 + $0x20] sm:$0xff] %vm3891, %v3804
      %3897 = vst.msk [vmem:[%s244 + $0x28] sm:$0xff] %vm3891, %v3806
      %3898 = vst.msk [vmem:[%s244 + $0x30] sm:$0xff] %vm3891, %v3808
      %3899 = vst.msk [vmem:[%s244 + $0x38] sm:$0xff] %vm3891, %v3810
      %3900 = vst.msk [vmem:[%s244 + $0x40] sm:$0xff] %vm3891, %v3812
      %3901 = vst.msk [vmem:[%s244 + $0x48] sm:$0xff] %vm3891, %v3814
      %3902 = vst.msk [vmem:[%s244 + $0x50] sm:$0xff] %vm3891, %v3816
      %3903 = vst.msk [vmem:[%s244 + $0x58] sm:$0xff] %vm3891, %v3818
      %3904 = vst.msk [vmem:[%s244 + $0x60] sm:$0xff] %vm3891, %v3820
      %3905 = vst.msk [vmem:[%s244 + $0x68] sm:$0xff] %vm3891, %v3822
      %3906 = vst.msk [vmem:[%s244 + $0x70] sm:$0xff] %vm3891, %v3824
      %3907 = vst.msk [vmem:[%s244 + $0x78] sm:$0xff] %vm3891, %v3826
      %3908 = vst.msk [vmem:[%s244 + $0x80] sm:$0xff] %vm3891, %v3828
      %3909 = vst.msk [vmem:[%s244 + $0x88] sm:$0xff] %vm3891, %v3830
      %3910 = vst.msk [vmem:[%s244 + $0x90] sm:$0xff] %vm3891, %v3832
      %3911 = vst.msk [vmem:[%s244 + $0x98] sm:$0xff] %vm3891, %v3834
      %3912 = vst.msk [vmem:[%s244 + $0xa0] sm:$0xff] %vm3891, %v3836
      %3913 = vst.msk [vmem:[%s244 + $0xa8] sm:$0xff] %vm3891, %v3838
      %3914 = vst.msk [vmem:[%s244 + $0xb0] sm:$0xff] %vm3891, %v3840
      %3915 = vst.msk [vmem:[%s244 + $0xb8] sm:$0xff] %vm3891, %v3842
      %3916 = vst.msk [vmem:[%s244 + $0xc0] sm:$0xff] %vm3891, %v3844
      %3917 = vst.msk [vmem:[%s244 + $0xc8] sm:$0xff] %vm3891, %v3846
      %3918 = vst.msk [vmem:[%s244 + $0xd0] sm:$0xff] %vm3891, %v3848
      %3919 = vst.msk [vmem:[%s244 + $0xd8] sm:$0xff] %vm3891, %v3850
      %3920 = vst.msk [vmem:[%s244 + $0xe0] sm:$0xff] %vm3891, %v3852
      %3921 = vst.msk [vmem:[%s244 + $0xe8] sm:$0xff] %vm3891, %v3854
      %3922 = vst.msk [vmem:[%s244 + $0xf0] sm:$0xff] %vm3891, %v3856
      %3923 = vst.msk [vmem:[%s244 + $0xf8] sm:$0xff] %vm3891, %v3858
      %p3924 = scmp.lt.s32.totalorder %s16, 1
      %s3925 = scalar_select %p3924, %s16, 1
      %s3926 = smul.addr %s3925, 32
      %s3927 = smul.addr %s3926, 8
      %s3928 = scalar_lea.vmem %s5, %s3927
      // Predicated region
      $region41: #{dense_block_forward.5} parent=39 // pred_check
        %p3929 = pneg %p149
      $region42: #{dense_block_forward.5} parent=39 // pred_check_branch
        %3931 = sbr.rel (%p3929) target = $region44
      $region43: #{dense_block_forward.5} parent=39 // pred_region
        _
      $region44: #{dense_block_forward.5} parent=39 // pred_fallthru
        _
    $region40: #{dense_block_forward.5} parent=5 // pred_fallthru
      _
    %p3932 = scmp.le.s32.totalorder 2, %s11
    // Predicated region
    $region45: #{dense_block_forward.5} parent=5 // pred_check
      %p3933 = pneg %p3932
    $region46: #{dense_block_forward.5} parent=5 // pred_check_branch
      %3935 = sbr.rel (%p3933) target = $region48
    $region47: #{dense_block_forward.5} parent=5 // pred_region
      %s3936 = ssub.s32 %s11, 2
      // Predicated region
      $region49: #{dense_block_forward.5} parent=47 // pred_check
        %p3937 = pneg %p155
      $region50: #{dense_block_forward.5} parent=47 // pred_check_branch
        %3939 = sbr.rel (%p3937) target = $region52
      $region51: #{dense_block_forward.5} parent=47 // pred_region
        %p3940 = scmp.lt.s32.totalorder %s17, 1
        %s3941 = scalar_select %p3940, %s17, 1
        %s3942 = smul.addr %s3941, 32
        %s3943 = smul.addr %s3942, 8
        %s3944 = scalar_lea.vmem %s5, %s3943
      $region52: #{dense_block_forward.5} parent=47 // pred_fallthru
        _
    $region48: #{dense_block_forward.5} parent=5 // pred_fallthru
      _
  $region6: #{dense_block_forward.5} parent=0 // loop_footer
    %s15 = sadd.s32 1, %s11
  $region7: #{dense_block_forward.5} parent=0 // loop_footer_branch
    %10 = sbr.rel target = $region3
  $region8: #{dense_block_forward.5} parent=0 // loop_exit
    _

</llo_original>
